<compile_context>
chip_gen: v7x
topology: tpu7x:2x2x1
jax: 0.10.0
libtpu: 0.0.40
codegen_flags: <defaults>
</compile_context>

<pallas_src>
import functools
import math

import jax
import jax.numpy as jnp
from jax.experimental import pallas as pl
from jax.experimental.pallas import tpu as pltpu


LN_EPS = 1e-12  # transformers ViTConfig default layer_norm_eps


def _vmem():
    return pl.BlockSpec(memory_space=pltpu.MemorySpace.VMEM)


# ---------------------------------------------------------------------------
# In-kernel helpers: element-wise math stays f32; matmuls feed the MXU with
# bf16 operands and f32 accumulation.
# ---------------------------------------------------------------------------
def _layernorm(x, gamma, beta):
    mu = jnp.mean(x, axis=-1, keepdims=True)
    var = jnp.mean(jnp.square(x - mu), axis=-1, keepdims=True)
    return (x - mu) * jax.lax.rsqrt(var + LN_EPS) * gamma + beta


def _gelu(x):
    # TODO(synk): HF ViT default 'gelu' is the exact erf GELU; tanh approximation
    # used to keep element-wise math on the EUP/VPU f32 path.
    c = math.sqrt(2.0 / math.pi)
    return 0.5 * x * (1.0 + jnp.tanh(c * (x + 0.044715 * x * x * x)))


def _dot(a, w):
    # a: f32 activation, w: bf16 weight pre-laid-out (in, out); f32 accumulate.
    return jax.lax.dot_general(
        a.astype(jnp.bfloat16), w,
        (((a.ndim - 1,), (0,)), ((), ())),
        preferred_element_type=jnp.float32)


# ---------------------------------------------------------------------------
# Kernel 1: embeddings = patch projection + bias, CLS + positional add.
# One grid point per batch element; single dense (S_pad, H) store.
# ---------------------------------------------------------------------------
def _embed_kernel(patch_ref, wpe_ref, bpe_ref, add_ref, out_ref, *, seq, s_pad):
    proj = _dot(patch_ref[0], wpe_ref[...]) + bpe_ref[...]      # (S_pad, H) f32
    row = jax.lax.broadcasted_iota(jnp.int32, (s_pad, 1), 0)
    is_patch = ((row >= 1) & (row < seq)).astype(jnp.float32)   # 0 for CLS/pad rows
    # add_ref: row0 = cls + pos[0], rows 1..n_patch = pos[row], padded rows = 0.
    out_ref[0] = proj * is_patch + add_ref[...]


def vit_embed(patches_pad, params, batch, s_pad, seq, hidden):
    cpp = patches_pad.shape[-1]
    return pl.pallas_call(
        functools.partial(_embed_kernel, seq=seq, s_pad=s_pad),
        out_shape=jax.ShapeDtypeStruct((batch, s_pad, hidden), jnp.float32),
        grid_spec=pltpu.PrefetchScalarGridSpec(
            num_scalar_prefetch=0,
            grid=(batch,),
            in_specs=[
                pl.BlockSpec((1, s_pad, cpp), lambda b: (b, 0, 0)),
                pl.BlockSpec((cpp, hidden), lambda b: (0, 0)),
                pl.BlockSpec((1, hidden), lambda b: (0, 0)),
                pl.BlockSpec((s_pad, hidden), lambda b: (0, 0)),
            ],
            out_specs=pl.BlockSpec((1, s_pad, hidden), lambda b: (b, 0, 0)),
        ),
        compiler_params=pltpu.CompilerParams(
            dimension_semantics=("parallel",)),
    )(patches_pad, params["patch_w"], params["patch_b"], params["emb_add"])


# ---------------------------------------------------------------------------
# Kernel 2: fused encoder.  grid=(num_layers,) "arbitrary"; activation resident
# in VMEM across all layers; per-layer weights streamed via BlockSpec.
# ---------------------------------------------------------------------------
def _encoder_kernel(x_ref, g1_ref, b1_ref, wqkv_ref, bqkv_ref, wo_ref, bo_ref,
                    g2_ref, b2_ref, wi_ref, bi_ref, wo2_ref, bo2_ref,
                    h_ref, *, batch, s_pad, seq, heads, head_dim):
    hidden = heads * head_dim

    # Layer 0: bring embeddings into the VMEM-resident activation buffer.
    @pl.when(pl.program_id(0) == 0)
    def _():
        h_ref[...] = x_ref[...]

    x3 = h_ref[...]                                    # (B, S_pad, H) f32
    x2 = x3.reshape(batch * s_pad, hidden)             # free reshape (S_pad % 8 == 0)

    # --- attention block ----------------------------------------------------
    xn = _layernorm(x2, g1_ref[0], b1_ref[0])
    qkv = _dot(xn, wqkv_ref[0]) + bqkv_ref[0]          # (B*S, 3H) f32
    qkv3 = qkv.reshape(batch, s_pad, 3 * hidden)

    # Mask padded key positions (token rows >= seq are padding).
    key_pos = jax.lax.broadcasted_iota(jnp.int32, (1, 1, s_pad), 2)
    key_bias = jnp.where(key_pos < seq, 0.0, -1e30).astype(jnp.float32)

    scale = 1.0 / math.sqrt(head_dim)
    ctxs = []
    for hh in range(heads):                            # static, bounded (num heads)
        q = qkv3[:, :, hh * head_dim:(hh + 1) * head_dim]
        k = qkv3[:, :, hidden + hh * head_dim:hidden + (hh + 1) * head_dim]
        v = qkv3[:, :, 2 * hidden + hh * head_dim:2 * hidden + (hh + 1) * head_dim]
        s = jnp.einsum("bqd,bkd->bqk",
                       q.astype(jnp.bfloat16), k.astype(jnp.bfloat16),
                       preferred_element_type=jnp.float32) * scale + key_bias
        s = s - jnp.max(s, axis=-1, keepdims=True)
        p = jnp.exp(s)
        p = p * pl.reciprocal(jnp.sum(p, axis=-1, keepdims=True), approx=True)
        ctxs.append(jnp.einsum("bqk,bkd->bqd",
                               p.astype(jnp.bfloat16), v.astype(jnp.bfloat16),
                               preferred_element_type=jnp.float32))
    ctx = jnp.concatenate(ctxs, axis=-1).reshape(batch * s_pad, hidden)
    h1 = x2 + _dot(ctx, wo_ref[0]) + bo_ref[0]         # residual 1

    # --- MLP block ------------------------------------------------------------
    xn2 = _layernorm(h1, g2_ref[0], b2_ref[0])
    inter = _gelu(_dot(xn2, wi_ref[0]) + bi_ref[0])
    out2 = h1 + _dot(inter, wo2_ref[0]) + bo2_ref[0]   # residual 2
    h_ref[...] = out2.reshape(batch, s_pad, hidden)


def _encoder_cost(batch, s_pad, hidden, inter, heads, layers):
    bs = batch * s_pad
    mm = 2 * bs * hidden * (3 * hidden) + 2 * bs * hidden * hidden \
        + 4 * bs * hidden * inter
    attn = 4 * batch * s_pad * s_pad * hidden
    flops = layers * (mm + attn)
    trans = layers * (batch * heads * s_pad * s_pad + bs * inter + 3 * bs)
    w_bytes = layers * 2 * (3 * hidden * hidden + hidden * hidden
                            + 2 * hidden * inter)
    act_bytes = 2 * 4 * bs * hidden
    return pl.CostEstimate(flops=flops, transcendentals=trans,
                           bytes_accessed=w_bytes + act_bytes)


def _layer_spec(stacked):
    nrest = stacked.ndim - 1
    return pl.BlockSpec((1,) + stacked.shape[1:],
                        lambda l, n=nrest: (l,) + (0,) * n)


def vit_encoder(h, params, batch, s_pad, seq, heads, head_dim):
    hidden = heads * head_dim
    layers = params["wqkv"].shape[0]
    inter = params["wi"].shape[-1]
    in_specs = [
        pl.BlockSpec((batch, s_pad, hidden), lambda l: (0, 0, 0)),  # embeddings
        _layer_spec(params["ln1_g"]), _layer_spec(params["ln1_b"]),
        _layer_spec(params["wqkv"]), _layer_spec(params["bqkv"]),
        _layer_spec(params["wo"]), _layer_spec(params["bo"]),
        _layer_spec(params["ln2_g"]), _layer_spec(params["ln2_b"]),
        _layer_spec(params["wi"]), _layer_spec(params["bi"]),
        _layer_spec(params["wo2"]), _layer_spec(params["bo2"]),
    ]
    # TODO(synk): for very large batch*seq (e.g. B>=16, S=197 on v7x 64MiB VMEM)
    # add a token-tile grid axis with a flash-style streaming attention; at the
    # demo sizes the full activation block is far below the VMEM limit.
    return pl.pallas_call(
        functools.partial(_encoder_kernel, batch=batch, s_pad=s_pad, seq=seq,
                          heads=heads, head_dim=head_dim),
        out_shape=jax.ShapeDtypeStruct((batch, s_pad, hidden), jnp.float32),
        grid_spec=pltpu.PrefetchScalarGridSpec(
            num_scalar_prefetch=0,
            grid=(layers,),
            in_specs=in_specs,
            out_specs=pl.BlockSpec((batch, s_pad, hidden), lambda l: (0, 0, 0)),
        ),
        compiler_params=pltpu.CompilerParams(
            dimension_semantics=("arbitrary",),
            vmem_limit_bytes=32 * 1024 * 1024),
        cost_estimate=_encoder_cost(batch, s_pad, hidden, inter, heads, layers),
    )(h, params["ln1_g"], params["ln1_b"], params["wqkv"], params["bqkv"],
      params["wo"], params["bo"], params["ln2_g"], params["ln2_b"],
      params["wi"], params["bi"], params["wo2"], params["bo2"])


# ---------------------------------------------------------------------------
# Kernel 3: final LayerNorm + tanh pooler on the CLS rows only.
# ---------------------------------------------------------------------------
def _final_kernel(h_ref, gf_ref, bf_ref, wp_ref, bp_ref, cls_ref, pooled_ref):
    cls_tok = h_ref[...][:, 0, :]                      # (B, H) CLS rows only
    hn = _layernorm(cls_tok, gf_ref[...], bf_ref[...])
    cls_ref[...] = hn                                  # last_hidden_state[:, 0, :]
    pooled_ref[...] = jnp.tanh(_dot(hn, wp_ref[...]) + bp_ref[...])  # pooler_output


def vit_final(h, params):
    batch, _, hidden = h.shape
    return pl.pallas_call(
        _final_kernel,
        out_shape=(jax.ShapeDtypeStruct((batch, hidden), jnp.float32),
                   jax.ShapeDtypeStruct((batch, hidden), jnp.float32)),
        in_specs=[_vmem()] * 5,
        out_specs=(_vmem(), _vmem()),
    )(h, params["lnf_g"], params["lnf_b"], params["pool_w"], params["pool_b"])


# ---------------------------------------------------------------------------
# Full forward pass (ViTModel: embeddings -> encoder -> layernorm -> pooler)
# ---------------------------------------------------------------------------
def vit_forward(params, x_nchw, *, patch_size, heads, output_layer="pooled"):
    B, C, Himg, Wimg = x_nchw.shape
    p = patch_size
    hp, wp = Himg // p, Wimg // p
    n_patch = hp * wp
    seq = n_patch + 1
    s_pad = params["emb_add"].shape[0]
    hidden = params["emb_add"].shape[1]
    head_dim = hidden // heads

    # Non-overlapping patchify: stride == kernel, so patch extraction is an
    # exact reshape (no im2col duplication); column order (C, ph, pw) matches
    # PyTorch Conv2d weight flattening.
    patches = (x_nchw.astype(jnp.float32)
               .reshape(B, C, hp, p, wp, p)
               .transpose(0, 2, 4, 1, 3, 5)
               .reshape(B, n_patch, C * p * p))
    # Row 0 reserved for CLS, rows padded to a sublane multiple (zeros).
    patches_pad = jnp.pad(patches, ((0, 0), (1, s_pad - seq), (0, 0)))

    h = vit_embed(patches_pad, params, B, s_pad, seq, hidden)
    h = vit_encoder(h, params, B, s_pad, seq, heads, head_dim)
    cls_hidden, pooled = vit_final(h, params)

    if output_layer == "pooled":
        return pooled                # pooler_output
    return cls_hidden                # last_hidden_state[:, 0, :]


# ---------------------------------------------------------------------------
# Deterministic synthetic parameters, pre-laid-out in kernel format:
#   weights (in, out) bf16, per-layer tensors stacked with leading L dim,
#   Q/K/V pre-concatenated into (L, H, 3H), biases / LN params f32,
#   positional + CLS embeddings pre-folded into one (S_pad, H) additive table.
# ---------------------------------------------------------------------------
def init_params(key, *, num_channels, image_size, patch_size, hidden, heads,
                inter, layers):
    del heads  # head split happens in-kernel from the fused QKV output
    p = patch_size
    hp = image_size // p
    n_patch = hp * hp
    seq = n_patch + 1
    s_pad = ((seq + 7) // 8) * 8
    cpp = num_channels * p * p

    (k_pw, k_cls, k_pos, k_qkv, k_o, k_i, k_o2, k_pool) = jax.random.split(key, 8)

    def w(k, shape):
        return (0.02 * jax.random.normal(k, shape, jnp.float32)).astype(jnp.bfloat16)

    def zeros(shape):
        return jnp.zeros(shape, jnp.float32)

    def ones(shape):
        return jnp.ones(shape, jnp.float32)

    cls = 0.02 * jax.random.normal(k_cls, (1, hidden), jnp.float32)
    pos = 0.02 * jax.random.normal(k_pos, (seq, hidden), jnp.float32)
    emb_add = jnp.zeros((s_pad, hidden), jnp.float32)
    emb_add = emb_add.at[0:1].set(cls + pos[0:1])
    emb_add = emb_add.at[1:seq].set(pos[1:seq])

    L = layers
    return {
        "patch_w": w(k_pw, (cpp, hidden)), "patch_b": zeros((1, hidden)),
        "emb_add": emb_add,
        "ln1_g": ones((L, 1, hidden)), "ln1_b": zeros((L, 1, hidden)),
        "wqkv": w(k_qkv, (L, hidden, 3 * hidden)), "bqkv": zeros((L, 1, 3 * hidden)),
        "wo": w(k_o, (L, hidden, hidden)), "bo": zeros((L, 1, hidden)),
        "ln2_g": ones((L, 1, hidden)), "ln2_b": zeros((L, 1, hidden)),
        "wi": w(k_i, (L, hidden, inter)), "bi": zeros((L, 1, inter)),
        "wo2": w(k_o2, (L, inter, hidden)), "bo2": zeros((L, 1, hidden)),
        "lnf_g": ones((1, hidden)), "lnf_b": zeros((1, hidden)),
        "pool_w": w(k_pool, (hidden, hidden)), "pool_b": zeros((1, hidden)),
    }


if __name__ == "__main__":
    # Small ViT config: batch=2, channels=4, image 16x16, patch 8 -> 4 patches
    # (+CLS = 5 tokens, padded to 8), hidden=256, 2 heads (head_dim=128,
    # lane-aligned), intermediate 512, 2 encoder layers.
    B, C, IMG, P = 2, 4, 16, 8
    HIDDEN, HEADS, INTER, LAYERS = 256, 2, 512, 2

    root = jax.random.PRNGKey(0)
    k_param, k_x = jax.random.split(root)

    params = init_params(k_param, num_channels=C, image_size=IMG, patch_size=P,
                         hidden=HIDDEN, heads=HEADS, inter=INTER, layers=LAYERS)
    x = jax.random.uniform(k_x, (B, C, IMG, IMG), jnp.float32)

    fwd = jax.jit(functools.partial(vit_forward, patch_size=P, heads=HEADS,
                                    output_layer="pooled"))
    out = fwd(params, x)
    jax.block_until_ready(out)

    assert out.shape == (B, HIDDEN)
    assert bool(jnp.isfinite(out).all())
    print("KERNEL_OK")
</pallas_src>

<mosaic_0001>
module attributes {stable_mosaic.version = 11 : i64} {
  func.func @_embed_kernel(%arg0: i32, %arg1: memref<1x8x256xf32, #tpu.memory_space<vmem>>, %arg2: memref<256x256xbf16, #tpu.memory_space<vmem>>, %arg3: memref<1x256xf32, #tpu.memory_space<vmem>>, %arg4: memref<8x256xf32, #tpu.memory_space<vmem>>, %arg5: memref<1x8x256xf32, #tpu.memory_space<vmem>>) attributes {dimension_semantics = [#tpu.dimension_semantics<parallel>], iteration_bounds = array<i64: 2>, scalar_prefetch = 0 : i64, scratch_operands = 0 : i64, tpu.core_type = #tpu.core_type<tc>, window_params = [{transform_indices = @transform_0, window_bounds = array<i64: 1, 8, 256>}, {pipeline_mode = #tpu.pipeline_mode<synchronous>, transform_indices = @transform_1, window_bounds = array<i64: 256, 256>}, {pipeline_mode = #tpu.pipeline_mode<synchronous>, transform_indices = @transform_2, window_bounds = array<i64: 1, 256>}, {pipeline_mode = #tpu.pipeline_mode<synchronous>, transform_indices = @transform_3, window_bounds = array<i64: 8, 256>}, {transform_indices = @transform_4, window_bounds = array<i64: 1, 8, 256>}]} {
    %c0 = arith.constant 0 : index
    %c0_0 = arith.constant 0 : index
    %c0_1 = arith.constant 0 : index
    %0 = vector.load %arg1[%c0, %c0_0, %c0_1] : memref<1x8x256xf32, #tpu.memory_space<vmem>>, vector<1x8x256xf32>
    %1 = vector.shape_cast %0 : vector<1x8x256xf32> to vector<8x256xf32>
    %c0_2 = arith.constant 0 : index
    %c0_3 = arith.constant 0 : index
    %2 = vector.load %arg2[%c0_2, %c0_3] : memref<256x256xbf16, #tpu.memory_space<vmem>>, vector<256x256xbf16>
    %3 = arith.truncf %1 : vector<8x256xf32> to vector<8x256xbf16>
    %cst = arith.constant dense<0.000000e+00> : vector<8x256xf32>
    %4 = tpu.matmul %3, %2, %cst {dimension_numbers = #tpu.dot_dimension_numbers<[1], [0], [0], [1], [0, 0, 1, 1], [], []>} : vector<8x256xbf16>, vector<256x256xbf16>, vector<8x256xf32> -> vector<8x256xf32>
    %c0_4 = arith.constant 0 : index
    %c0_5 = arith.constant 0 : index
    %5 = vector.load %arg3[%c0_4, %c0_5] : memref<1x256xf32, #tpu.memory_space<vmem>>, vector<1x256xf32>
    %6 = vector.broadcast %5 : vector<1x256xf32> to vector<8x256xf32>
    %7 = arith.addf %4, %6 : vector<8x256xf32>
    %8 = tpu.iota {dimensions = array<i32: 0>} : vector<8x1xi32>
    %c1_i32 = arith.constant 1 : i32
    %9 = vector.broadcast %c1_i32 : i32 to vector<8x1xi32>
    %10 = arith.cmpi sge, %8, %9 : vector<8x1xi32>
    %c5_i32 = arith.constant 5 : i32
    %11 = vector.broadcast %c5_i32 : i32 to vector<8x1xi32>
    %12 = arith.cmpi slt, %8, %11 : vector<8x1xi32>
    %13 = arith.andi %10, %12 : vector<8x1xi1>
    %14 = arith.extui %13 : vector<8x1xi1> to vector<8x1xi32>
    %15 = arith.sitofp %14 : vector<8x1xi32> to vector<8x1xf32>
    %16 = vector.broadcast %15 : vector<8x1xf32> to vector<8x256xf32>
    %17 = arith.mulf %7, %16 : vector<8x256xf32>
    %c0_6 = arith.constant 0 : index
    %c0_7 = arith.constant 0 : index
    %18 = vector.load %arg4[%c0_6, %c0_7] : memref<8x256xf32, #tpu.memory_space<vmem>>, vector<8x256xf32>
    %19 = arith.addf %17, %18 : vector<8x256xf32>
    %c0_8 = arith.constant 0 : index
    %c0_9 = arith.constant 0 : index
    %c0_10 = arith.constant 0 : index
    %20 = vector.load %arg5[%c0_8, %c0_9, %c0_10] : memref<1x8x256xf32, #tpu.memory_space<vmem>>, vector<1x8x256xf32>
    %21 = vector.shape_cast %20 : vector<1x8x256xf32> to vector<8x256xf32>
    %22 = vector.shape_cast %19 : vector<8x256xf32> to vector<1x8x256xf32>
    tpu.vector_store %arg5[%c0_8, %c0_9, %c0_10], %22 {strides = array<i32>} : memref<1x8x256xf32, #tpu.memory_space<vmem>>, vector<1x8x256xf32>,
    return
  }
  func.func @transform_0(%arg0: i32) -> (i32, i32, i32) {
    %c0_i32 = arith.constant 0 : i32
    %c0_i32_0 = arith.constant 0 : i32
    %c0_i32_1 = arith.constant 0 : i32
    return %arg0, %c0_i32, %c0_i32_0 : i32, i32, i32
  }
  func.func @transform_1(%arg0: i32) -> (i32, i32) {
    %c0_i32 = arith.constant 0 : i32
    %c0_i32_0 = arith.constant 0 : i32
    %c0_i32_1 = arith.constant 0 : i32
    return %c0_i32, %c0_i32_0 : i32, i32
  }
  func.func @transform_2(%arg0: i32) -> (i32, i32) {
    %c0_i32 = arith.constant 0 : i32
    %c0_i32_0 = arith.constant 0 : i32
    %c0_i32_1 = arith.constant 0 : i32
    return %c0_i32, %c0_i32_0 : i32, i32
  }
  func.func @transform_3(%arg0: i32) -> (i32, i32) {
    %c0_i32 = arith.constant 0 : i32
    %c0_i32_0 = arith.constant 0 : i32
    %c0_i32_1 = arith.constant 0 : i32
    return %c0_i32, %c0_i32_0 : i32, i32
  }
  func.func @transform_4(%arg0: i32) -> (i32, i32, i32) {
    %c0_i32 = arith.constant 0 : i32
    %c0_i32_0 = arith.constant 0 : i32
    %c0_i32_1 = arith.constant 0 : i32
    return %arg0, %c0_i32, %c0_i32_0 : i32, i32, i32
  }
}

module attributes {stable_mosaic.version = 11 : i64} {
  func.func @_encoder_kernel(%arg0: i32, %arg1: memref<2x8x256xf32, #tpu.memory_space<vmem>>, %arg2: memref<1x1x256xf32, #tpu.memory_space<vmem>>, %arg3: memref<1x1x256xf32, #tpu.memory_space<vmem>>, %arg4: memref<1x256x768xbf16, #tpu.memory_space<vmem>>, %arg5: memref<1x1x768xf32, #tpu.memory_space<vmem>>, %arg6: memref<1x256x256xbf16, #tpu.memory_space<vmem>>, %arg7: memref<1x1x256xf32, #tpu.memory_space<vmem>>, %arg8: memref<1x1x256xf32, #tpu.memory_space<vmem>>, %arg9: memref<1x1x256xf32, #tpu.memory_space<vmem>>, %arg10: memref<1x256x512xbf16, #tpu.memory_space<vmem>>, %arg11: memref<1x1x512xf32, #tpu.memory_space<vmem>>, %arg12: memref<1x512x256xbf16, #tpu.memory_space<vmem>>, %arg13: memref<1x1x256xf32, #tpu.memory_space<vmem>>, %arg14: memref<2x8x256xf32, #tpu.memory_space<vmem>>) attributes {dimension_semantics = [#tpu.dimension_semantics<arbitrary>], iteration_bounds = array<i64: 2>, scalar_prefetch = 0 : i64, scratch_operands = 0 : i64, tpu.core_type = #tpu.core_type<tc>, window_params = [{pipeline_mode = #tpu.pipeline_mode<synchronous>, transform_indices = @transform_0, window_bounds = array<i64: 2, 8, 256>}, {transform_indices = @transform_1, window_bounds = array<i64: 1, 1, 256>}, {transform_indices = @transform_2, window_bounds = array<i64: 1, 1, 256>}, {transform_indices = @transform_3, window_bounds = array<i64: 1, 256, 768>}, {transform_indices = @transform_4, window_bounds = array<i64: 1, 1, 768>}, {transform_indices = @transform_5, window_bounds = array<i64: 1, 256, 256>}, {transform_indices = @transform_6, window_bounds = array<i64: 1, 1, 256>}, {transform_indices = @transform_7, window_bounds = array<i64: 1, 1, 256>}, {transform_indices = @transform_8, window_bounds = array<i64: 1, 1, 256>}, {transform_indices = @transform_9, window_bounds = array<i64: 1, 256, 512>}, {transform_indices = @transform_10, window_bounds = array<i64: 1, 1, 512>}, {transform_indices = @transform_11, window_bounds = array<i64: 1, 512, 256>}, {transform_indices = @transform_12, window_bounds = array<i64: 1, 1, 256>}, {pipeline_mode = #tpu.pipeline_mode<synchronous>, transform_indices = @transform_13, window_bounds = array<i64: 2, 8, 256>}]} {
    %c0_i32 = arith.constant 0 : i32
    %0 = arith.cmpi eq, %arg0, %c0_i32 : i32
    %1 = arith.extui %0 : i1 to i32
    %c0_i32_0 = arith.constant 0 : i32
    %2 = arith.cmpi ne, %1, %c0_i32_0 : i32
    scf.if %2 {
      %c0_71 = arith.constant 0 : index
      %c0_72 = arith.constant 0 : index
      %c0_73 = arith.constant 0 : index
      %161 = vector.load %arg1[%c0_71, %c0_72, %c0_73] : memref<2x8x256xf32, #tpu.memory_space<vmem>>, vector<2x8x256xf32>
      %c0_74 = arith.constant 0 : index
      %c0_75 = arith.constant 0 : index
      %c0_76 = arith.constant 0 : index
      %162 = vector.load %arg14[%c0_74, %c0_75, %c0_76] : memref<2x8x256xf32, #tpu.memory_space<vmem>>, vector<2x8x256xf32>
      tpu.vector_store %arg14[%c0_74, %c0_75, %c0_76], %161 {strides = array<i32>} : memref<2x8x256xf32, #tpu.memory_space<vmem>>, vector<2x8x256xf32>,
    } else {
    }
    %c0 = arith.constant 0 : index
    %c0_1 = arith.constant 0 : index
    %c0_2 = arith.constant 0 : index
    %3 = vector.load %arg14[%c0, %c0_1, %c0_2] : memref<2x8x256xf32, #tpu.memory_space<vmem>>, vector<2x8x256xf32>
    %4 = vector.shape_cast %3 : vector<2x8x256xf32> to vector<16x256xf32>
    %c0_3 = arith.constant 0 : index
    %c0_4 = arith.constant 0 : index
    %c0_5 = arith.constant 0 : index
    %5 = vector.load %arg2[%c0_3, %c0_4, %c0_5] : memref<1x1x256xf32, #tpu.memory_space<vmem>>, vector<1x1x256xf32>
    %6 = vector.shape_cast %5 : vector<1x1x256xf32> to vector<1x256xf32>
    %c0_6 = arith.constant 0 : index
    %c0_7 = arith.constant 0 : index
    %c0_8 = arith.constant 0 : index
    %7 = vector.load %arg3[%c0_6, %c0_7, %c0_8] : memref<1x1x256xf32, #tpu.memory_space<vmem>>, vector<1x1x256xf32>
    %8 = vector.shape_cast %7 : vector<1x1x256xf32> to vector<1x256xf32>
    %cst = arith.constant dense<0.000000e+00> : vector<16xf32>
    %9 = vector.multi_reduction <add>, %4, %cst [1] : vector<16x256xf32> to vector<16xf32>
    %10 = vector.shape_cast %9 : vector<16xf32> to vector<16x1xf32>
    %cst_9 = arith.constant 2.560000e+02 : f32
    %11 = vector.broadcast %cst_9 : f32 to vector<16x1xf32>
    %12 = arith.divf %10, %11 : vector<16x1xf32>
    %13 = vector.broadcast %12 : vector<16x1xf32> to vector<16x256xf32>
    %14 = arith.subf %4, %13 : vector<16x256xf32>
    %15 = arith.mulf %14, %14 : vector<16x256xf32>
    %cst_10 = arith.constant dense<0.000000e+00> : vector<16xf32>
    %16 = vector.multi_reduction <add>, %15, %cst_10 [1] : vector<16x256xf32> to vector<16xf32>
    %17 = vector.shape_cast %16 : vector<16xf32> to vector<16x1xf32>
    %cst_11 = arith.constant 2.560000e+02 : f32
    %18 = vector.broadcast %cst_11 : f32 to vector<16x1xf32>
    %19 = arith.divf %17, %18 : vector<16x1xf32>
    %20 = vector.broadcast %12 : vector<16x1xf32> to vector<16x256xf32>
    %21 = arith.subf %4, %20 : vector<16x256xf32>
    %cst_12 = arith.constant 9.99999996E-13 : f32
    %22 = vector.broadcast %cst_12 : f32 to vector<16x1xf32>
    %23 = arith.addf %19, %22 : vector<16x1xf32>
    %24 = math.rsqrt %23 : vector<16x1xf32>
    %25 = vector.broadcast %24 : vector<16x1xf32> to vector<16x256xf32>
    %26 = arith.mulf %21, %25 : vector<16x256xf32>
    %27 = vector.broadcast %6 : vector<1x256xf32> to vector<16x256xf32>
    %28 = arith.mulf %26, %27 : vector<16x256xf32>
    %29 = vector.broadcast %8 : vector<1x256xf32> to vector<16x256xf32>
    %30 = arith.addf %28, %29 : vector<16x256xf32>
    %c0_13 = arith.constant 0 : index
    %c0_14 = arith.constant 0 : index
    %c0_15 = arith.constant 0 : index
    %31 = vector.load %arg4[%c0_13, %c0_14, %c0_15] : memref<1x256x768xbf16, #tpu.memory_space<vmem>>, vector<1x256x768xbf16>
    %32 = vector.shape_cast %31 : vector<1x256x768xbf16> to vector<256x768xbf16>
    %33 = arith.truncf %30 : vector<16x256xf32> to vector<16x256xbf16>
    %cst_16 = arith.constant dense<0.000000e+00> : vector<16x768xf32>
    %34 = tpu.matmul %33, %32, %cst_16 {dimension_numbers = #tpu.dot_dimension_numbers<[1], [0], [0], [1], [0, 0, 1, 1], [], []>} : vector<16x256xbf16>, vector<256x768xbf16>, vector<16x768xf32> -> vector<16x768xf32>
    %c0_17 = arith.constant 0 : index
    %c0_18 = arith.constant 0 : index
    %c0_19 = arith.constant 0 : index
    %35 = vector.load %arg5[%c0_17, %c0_18, %c0_19] : memref<1x1x768xf32, #tpu.memory_space<vmem>>, vector<1x1x768xf32>
    %36 = vector.shape_cast %35 : vector<1x1x768xf32> to vector<1x768xf32>
    %37 = vector.broadcast %36 : vector<1x768xf32> to vector<16x768xf32>
    %38 = arith.addf %34, %37 : vector<16x768xf32>
    %39 = vector.shape_cast %38 : vector<16x768xf32> to vector<2x8x768xf32>
    %40 = tpu.iota {dimensions = array<i32: 2>} : vector<1x1x8xi32>
    %c5_i32 = arith.constant 5 : i32
    %41 = vector.broadcast %c5_i32 : i32 to vector<1x1x8xi32>
    %42 = arith.cmpi slt, %40, %41 : vector<1x1x8xi32>
    %cst_20 = arith.constant 0.000000e+00 : f32
    %cst_21 = arith.constant -1.000000e+30 : f32
    %43 = vector.broadcast %cst_20 : f32 to vector<1x1x8xf32>
    %44 = vector.broadcast %cst_21 : f32 to vector<1x1x8xf32>
    %45 = arith.select %42, %43, %44 : vector<1x1x8xi1>, vector<1x1x8xf32>
    %46 = vector.extract_strided_slice %39 {offsets = [0, 0, 0], sizes = [2, 8, 128], strides = [1, 1, 1]} : vector<2x8x768xf32> to vector<2x8x128xf32>
    %47 = vector.extract_strided_slice %39 {offsets = [0, 0, 256], sizes = [2, 8, 128], strides = [1, 1, 1]} : vector<2x8x768xf32> to vector<2x8x128xf32>
    %48 = vector.extract_strided_slice %39 {offsets = [0, 0, 512], sizes = [2, 8, 128], strides = [1, 1, 1]} : vector<2x8x768xf32> to vector<2x8x128xf32>
    %49 = arith.truncf %46 : vector<2x8x128xf32> to vector<2x8x128xbf16>
    %50 = arith.truncf %47 : vector<2x8x128xf32> to vector<2x8x128xbf16>
    "tpu.trace_start"() <{level = 10 : i32, message = "bqd,bkd->bqk"}> : () -> ()
    %cst_22 = arith.constant dense<0.000000e+00> : vector<2x8x8xf32>
    %51 = tpu.matmul %49, %50, %cst_22 {dimension_numbers = #tpu.dot_dimension_numbers<[2], [2], [1], [1], [0, 0, 0, 1, 1, 1], [0], [0]>} : vector<2x8x128xbf16>, vector<2x8x128xbf16>, vector<2x8x8xf32> -> vector<2x8x8xf32>
    "tpu.trace_stop"() : () -> ()
    %cst_23 = arith.constant 0.0883883461 : f32
    %52 = vector.broadcast %cst_23 : f32 to vector<2x8x8xf32>
    %53 = arith.mulf %51, %52 : vector<2x8x8xf32>
    %54 = vector.broadcast %45 : vector<1x1x8xf32> to vector<2x8x8xf32>
    %55 = arith.addf %53, %54 : vector<2x8x8xf32>
    %cst_24 = arith.constant dense<0xFF800000> : vector<2x8xf32>
    %56 = vector.multi_reduction <maximumf>, %55, %cst_24 [2] : vector<2x8x8xf32> to vector<2x8xf32>
    %57 = vector.shape_cast %56 : vector<2x8xf32> to vector<2x8x1xf32>
    %58 = vector.broadcast %57 : vector<2x8x1xf32> to vector<2x8x8xf32>
    %59 = arith.subf %55, %58 : vector<2x8x8xf32>
    %60 = math.exp %59 : vector<2x8x8xf32>
    %cst_25 = arith.constant dense<0.000000e+00> : vector<2x8xf32>
    %61 = vector.multi_reduction <add>, %60, %cst_25 [2] : vector<2x8x8xf32> to vector<2x8xf32>
    %62 = vector.shape_cast %61 : vector<2x8xf32> to vector<2x8x1xf32>
    %63 = tpu.reciprocal %62 {approx = true} : vector<2x8x1xf32> -> vector<2x8x1xf32>
    %64 = vector.broadcast %63 : vector<2x8x1xf32> to vector<2x8x8xf32>
    %65 = arith.mulf %60, %64 : vector<2x8x8xf32>
    %66 = arith.truncf %65 : vector<2x8x8xf32> to vector<2x8x8xbf16>
    %67 = arith.truncf %48 : vector<2x8x128xf32> to vector<2x8x128xbf16>
    "tpu.trace_start"() <{level = 10 : i32, message = "bqk,bkd->bqd"}> : () -> ()
    %cst_26 = arith.constant dense<0.000000e+00> : vector<2x8x128xf32>
    %68 = tpu.matmul %66, %67, %cst_26 {dimension_numbers = #tpu.dot_dimension_numbers<[2], [1], [1], [2], [0, 0, 0, 1, 1, 2], [0], [0]>} : vector<2x8x8xbf16>, vector<2x8x128xbf16>, vector<2x8x128xf32> -> vector<2x8x128xf32>
    "tpu.trace_stop"() : () -> ()
    %69 = vector.extract_strided_slice %39 {offsets = [0, 0, 128], sizes = [2, 8, 128], strides = [1, 1, 1]} : vector<2x8x768xf32> to vector<2x8x128xf32>
    %70 = vector.extract_strided_slice %39 {offsets = [0, 0, 384], sizes = [2, 8, 128], strides = [1, 1, 1]} : vector<2x8x768xf32> to vector<2x8x128xf32>
    %71 = vector.extract_strided_slice %39 {offsets = [0, 0, 640], sizes = [2, 8, 128], strides = [1, 1, 1]} : vector<2x8x768xf32> to vector<2x8x128xf32>
    %72 = arith.truncf %69 : vector<2x8x128xf32> to vector<2x8x128xbf16>
    %73 = arith.truncf %70 : vector<2x8x128xf32> to vector<2x8x128xbf16>
    "tpu.trace_start"() <{level = 10 : i32, message = "bqd,bkd->bqk"}> : () -> ()
    %cst_27 = arith.constant dense<0.000000e+00> : vector<2x8x8xf32>
    %74 = tpu.matmul %72, %73, %cst_27 {dimension_numbers = #tpu.dot_dimension_numbers<[2], [2], [1], [1], [0, 0, 0, 1, 1, 1], [0], [0]>} : vector<2x8x128xbf16>, vector<2x8x128xbf16>, vector<2x8x8xf32> -> vector<2x8x8xf32>
    "tpu.trace_stop"() : () -> ()
    %cst_28 = arith.constant 0.0883883461 : f32
    %75 = vector.broadcast %cst_28 : f32 to vector<2x8x8xf32>
    %76 = arith.mulf %74, %75 : vector<2x8x8xf32>
    %77 = vector.broadcast %45 : vector<1x1x8xf32> to vector<2x8x8xf32>
    %78 = arith.addf %76, %77 : vector<2x8x8xf32>
    %cst_29 = arith.constant dense<0xFF800000> : vector<2x8xf32>
    %79 = vector.multi_reduction <maximumf>, %78, %cst_29 [2] : vector<2x8x8xf32> to vector<2x8xf32>
    %80 = vector.shape_cast %79 : vector<2x8xf32> to vector<2x8x1xf32>
    %81 = vector.broadcast %80 : vector<2x8x1xf32> to vector<2x8x8xf32>
    %82 = arith.subf %78, %81 : vector<2x8x8xf32>
    %83 = math.exp %82 : vector<2x8x8xf32>
    %cst_30 = arith.constant dense<0.000000e+00> : vector<2x8xf32>
    %84 = vector.multi_reduction <add>, %83, %cst_30 [2] : vector<2x8x8xf32> to vector<2x8xf32>
    %85 = vector.shape_cast %84 : vector<2x8xf32> to vector<2x8x1xf32>
    %86 = tpu.reciprocal %85 {approx = true} : vector<2x8x1xf32> -> vector<2x8x1xf32>
    %87 = vector.broadcast %86 : vector<2x8x1xf32> to vector<2x8x8xf32>
    %88 = arith.mulf %83, %87 : vector<2x8x8xf32>
    %89 = arith.truncf %88 : vector<2x8x8xf32> to vector<2x8x8xbf16>
    %90 = arith.truncf %71 : vector<2x8x128xf32> to vector<2x8x128xbf16>
    "tpu.trace_start"() <{level = 10 : i32, message = "bqk,bkd->bqd"}> : () -> ()
    %cst_31 = arith.constant dense<0.000000e+00> : vector<2x8x128xf32>
    %91 = tpu.matmul %89, %90, %cst_31 {dimension_numbers = #tpu.dot_dimension_numbers<[2], [1], [1], [2], [0, 0, 0, 1, 1, 2], [0], [0]>} : vector<2x8x8xbf16>, vector<2x8x128xbf16>, vector<2x8x128xf32> -> vector<2x8x128xf32>
    "tpu.trace_stop"() : () -> ()
    %92 = tpu.concatenate %68, %91 in 2 : vector<2x8x128xf32>, vector<2x8x128xf32> -> vector<2x8x256xf32>
    %93 = vector.shape_cast %92 : vector<2x8x256xf32> to vector<16x256xf32>
    %c0_32 = arith.constant 0 : index
    %c0_33 = arith.constant 0 : index
    %c0_34 = arith.constant 0 : index
    %94 = vector.load %arg6[%c0_32, %c0_33, %c0_34] : memref<1x256x256xbf16, #tpu.memory_space<vmem>>, vector<1x256x256xbf16>
    %95 = vector.shape_cast %94 : vector<1x256x256xbf16> to vector<256x256xbf16>
    %96 = arith.truncf %93 : vector<16x256xf32> to vector<16x256xbf16>
    %cst_35 = arith.constant dense<0.000000e+00> : vector<16x256xf32>
    %97 = tpu.matmul %96, %95, %cst_35 {dimension_numbers = #tpu.dot_dimension_numbers<[1], [0], [0], [1], [0, 0, 1, 1], [], []>} : vector<16x256xbf16>, vector<256x256xbf16>, vector<16x256xf32> -> vector<16x256xf32>
    %98 = arith.addf %4, %97 : vector<16x256xf32>
    %c0_36 = arith.constant 0 : index
    %c0_37 = arith.constant 0 : index
    %c0_38 = arith.constant 0 : index
    %99 = vector.load %arg7[%c0_36, %c0_37, %c0_38] : memref<1x1x256xf32, #tpu.memory_space<vmem>>, vector<1x1x256xf32>
    %100 = vector.shape_cast %99 : vector<1x1x256xf32> to vector<1x256xf32>
    %101 = vector.broadcast %100 : vector<1x256xf32> to vector<16x256xf32>
    %102 = arith.addf %98, %101 : vector<16x256xf32>
    %c0_39 = arith.constant 0 : index
    %c0_40 = arith.constant 0 : index
    %c0_41 = arith.constant 0 : index
    %103 = vector.load %arg8[%c0_39, %c0_40, %c0_41] : memref<1x1x256xf32, #tpu.memory_space<vmem>>, vector<1x1x256xf32>
    %104 = vector.shape_cast %103 : vector<1x1x256xf32> to vector<1x256xf32>
    %c0_42 = arith.constant 0 : index
    %c0_43 = arith.constant 0 : index
    %c0_44 = arith.constant 0 : index
    %105 = vector.load %arg9[%c0_42, %c0_43, %c0_44] : memref<1x1x256xf32, #tpu.memory_space<vmem>>, vector<1x1x256xf32>
    %106 = vector.shape_cast %105 : vector<1x1x256xf32> to vector<1x256xf32>
    %cst_45 = arith.constant dense<0.000000e+00> : vector<16xf32>
    %107 = vector.multi_reduction <add>, %102, %cst_45 [1] : vector<16x256xf32> to vector<16xf32>
    %108 = vector.shape_cast %107 : vector<16xf32> to vector<16x1xf32>
    %cst_46 = arith.constant 2.560000e+02 : f32
    %109 = vector.broadcast %cst_46 : f32 to vector<16x1xf32>
    %110 = arith.divf %108, %109 : vector<16x1xf32>
    %111 = vector.broadcast %110 : vector<16x1xf32> to vector<16x256xf32>
    %112 = arith.subf %102, %111 : vector<16x256xf32>
    %113 = arith.mulf %112, %112 : vector<16x256xf32>
    %cst_47 = arith.constant dense<0.000000e+00> : vector<16xf32>
    %114 = vector.multi_reduction <add>, %113, %cst_47 [1] : vector<16x256xf32> to vector<16xf32>
    %115 = vector.shape_cast %114 : vector<16xf32> to vector<16x1xf32>
    %cst_48 = arith.constant 2.560000e+02 : f32
    %116 = vector.broadcast %cst_48 : f32 to vector<16x1xf32>
    %117 = arith.divf %115, %116 : vector<16x1xf32>
    %118 = vector.broadcast %110 : vector<16x1xf32> to vector<16x256xf32>
    %119 = arith.subf %102, %118 : vector<16x256xf32>
    %cst_49 = arith.constant 9.99999996E-13 : f32
    %120 = vector.broadcast %cst_49 : f32 to vector<16x1xf32>
    %121 = arith.addf %117, %120 : vector<16x1xf32>
    %122 = math.rsqrt %121 : vector<16x1xf32>
    %123 = vector.broadcast %122 : vector<16x1xf32> to vector<16x256xf32>
    %124 = arith.mulf %119, %123 : vector<16x256xf32>
    %125 = vector.broadcast %104 : vector<1x256xf32> to vector<16x256xf32>
    %126 = arith.mulf %124, %125 : vector<16x256xf32>
    %127 = vector.broadcast %106 : vector<1x256xf32> to vector<16x256xf32>
    %128 = arith.addf %126, %127 : vector<16x256xf32>
    %c0_50 = arith.constant 0 : index
    %c0_51 = arith.constant 0 : index
    %c0_52 = arith.constant 0 : index
    %129 = vector.load %arg10[%c0_50, %c0_51, %c0_52] : memref<1x256x512xbf16, #tpu.memory_space<vmem>>, vector<1x256x512xbf16>
    %130 = vector.shape_cast %129 : vector<1x256x512xbf16> to vector<256x512xbf16>
    %131 = arith.truncf %128 : vector<16x256xf32> to vector<16x256xbf16>
    %cst_53 = arith.constant dense<0.000000e+00> : vector<16x512xf32>
    %132 = tpu.matmul %131, %130, %cst_53 {dimension_numbers = #tpu.dot_dimension_numbers<[1], [0], [0], [1], [0, 0, 1, 1], [], []>} : vector<16x256xbf16>, vector<256x512xbf16>, vector<16x512xf32> -> vector<16x512xf32>
    %c0_54 = arith.constant 0 : index
    %c0_55 = arith.constant 0 : index
    %c0_56 = arith.constant 0 : index
    %133 = vector.load %arg11[%c0_54, %c0_55, %c0_56] : memref<1x1x512xf32, #tpu.memory_space<vmem>>, vector<1x1x512xf32>
    %134 = vector.shape_cast %133 : vector<1x1x512xf32> to vector<1x512xf32>
    %135 = vector.broadcast %134 : vector<1x512xf32> to vector<16x512xf32>
    %136 = arith.addf %132, %135 : vector<16x512xf32>
    %cst_57 = arith.constant 5.000000e-01 : f32
    %137 = vector.broadcast %cst_57 : f32 to vector<16x512xf32>
    %138 = arith.mulf %137, %136 : vector<16x512xf32>
    %cst_58 = arith.constant 4.471500e-02 : f32
    %139 = vector.broadcast %cst_58 : f32 to vector<16x512xf32>
    %140 = arith.mulf %139, %136 : vector<16x512xf32>
    %141 = arith.mulf %140, %136 : vector<16x512xf32>
    %142 = arith.mulf %141, %136 : vector<16x512xf32>
    %143 = arith.addf %136, %142 : vector<16x512xf32>
    %cst_59 = arith.constant 0.797884583 : f32
    %144 = vector.broadcast %cst_59 : f32 to vector<16x512xf32>
    %145 = arith.mulf %144, %143 : vector<16x512xf32>
    %146 = math.tanh %145 : vector<16x512xf32>
    %cst_60 = arith.constant 1.000000e+00 : f32
    %147 = vector.broadcast %cst_60 : f32 to vector<16x512xf32>
    %148 = arith.addf %147, %146 : vector<16x512xf32>
    %149 = arith.mulf %138, %148 : vector<16x512xf32>
    %c0_61 = arith.constant 0 : index
    %c0_62 = arith.constant 0 : index
    %c0_63 = arith.constant 0 : index
    %150 = vector.load %arg12[%c0_61, %c0_62, %c0_63] : memref<1x512x256xbf16, #tpu.memory_space<vmem>>, vector<1x512x256xbf16>
    %151 = vector.shape_cast %150 : vector<1x512x256xbf16> to vector<512x256xbf16>
    %152 = arith.truncf %149 : vector<16x512xf32> to vector<16x512xbf16>
    %cst_64 = arith.constant dense<0.000000e+00> : vector<16x256xf32>
    %153 = tpu.matmul %152, %151, %cst_64 {dimension_numbers = #tpu.dot_dimension_numbers<[1], [0], [0], [1], [0, 0, 1, 1], [], []>} : vector<16x512xbf16>, vector<512x256xbf16>, vector<16x256xf32> -> vector<16x256xf32>
    %154 = arith.addf %102, %153 : vector<16x256xf32>
    %c0_65 = arith.constant 0 : index
    %c0_66 = arith.constant 0 : index
    %c0_67 = arith.constant 0 : index
    %155 = vector.load %arg13[%c0_65, %c0_66, %c0_67] : memref<1x1x256xf32, #tpu.memory_space<vmem>>, vector<1x1x256xf32>
    %156 = vector.shape_cast %155 : vector<1x1x256xf32> to vector<1x256xf32>
    %157 = vector.broadcast %156 : vector<1x256xf32> to vector<16x256xf32>
    %158 = arith.addf %154, %157 : vector<16x256xf32>
    %159 = vector.shape_cast %158 : vector<16x256xf32> to vector<2x8x256xf32>
    %c0_68 = arith.constant 0 : index
    %c0_69 = arith.constant 0 : index
    %c0_70 = arith.constant 0 : index
    %160 = vector.load %arg14[%c0_68, %c0_69, %c0_70] : memref<2x8x256xf32, #tpu.memory_space<vmem>>, vector<2x8x256xf32>
    tpu.vector_store %arg14[%c0_68, %c0_69, %c0_70], %159 {strides = array<i32>} : memref<2x8x256xf32, #tpu.memory_space<vmem>>, vector<2x8x256xf32>,
    return
  }
  func.func @transform_0(%arg0: i32) -> (i32, i32, i32) {
    %c0_i32 = arith.constant 0 : i32
    %c0_i32_0 = arith.constant 0 : i32
    %c0_i32_1 = arith.constant 0 : i32
    %c0_i32_2 = arith.constant 0 : i32
    return %c0_i32, %c0_i32_0, %c0_i32_1 : i32, i32, i32
  }
  func.func @transform_1(%arg0: i32) -> (i32, i32, i32) {
    %c0_i32 = arith.constant 0 : i32
    %c0_i32_0 = arith.constant 0 : i32
    %c0_i32_1 = arith.constant 0 : i32
    return %arg0, %c0_i32, %c0_i32_0 : i32, i32, i32
  }
  func.func @transform_2(%arg0: i32) -> (i32, i32, i32) {
    %c0_i32 = arith.constant 0 : i32
    %c0_i32_0 = arith.constant 0 : i32
    %c0_i32_1 = arith.constant 0 : i32
    return %arg0, %c0_i32, %c0_i32_0 : i32, i32, i32
  }
  func.func @transform_3(%arg0: i32) -> (i32, i32, i32) {
    %c0_i32 = arith.constant 0 : i32
    %c0_i32_0 = arith.constant 0 : i32
    %c0_i32_1 = arith.constant 0 : i32
    return %arg0, %c0_i32, %c0_i32_0 : i32, i32, i32
  }
  func.func @transform_4(%arg0: i32) -> (i32, i32, i32) {
    %c0_i32 = arith.constant 0 : i32
    %c0_i32_0 = arith.constant 0 : i32
    %c0_i32_1 = arith.constant 0 : i32
    return %arg0, %c0_i32, %c0_i32_0 : i32, i32, i32
  }
  func.func @transform_5(%arg0: i32) -> (i32, i32, i32) {
    %c0_i32 = arith.constant 0 : i32
    %c0_i32_0 = arith.constant 0 : i32
    %c0_i32_1 = arith.constant 0 : i32
    return %arg0, %c0_i32, %c0_i32_0 : i32, i32, i32
  }
  func.func @transform_6(%arg0: i32) -> (i32, i32, i32) {
    %c0_i32 = arith.constant 0 : i32
    %c0_i32_0 = arith.constant 0 : i32
    %c0_i32_1 = arith.constant 0 : i32
    return %arg0, %c0_i32, %c0_i32_0 : i32, i32, i32
  }
  func.func @transform_7(%arg0: i32) -> (i32, i32, i32) {
    %c0_i32 = arith.constant 0 : i32
    %c0_i32_0 = arith.constant 0 : i32
    %c0_i32_1 = arith.constant 0 : i32
    return %arg0, %c0_i32, %c0_i32_0 : i32, i32, i32
  }
  func.func @transform_8(%arg0: i32) -> (i32, i32, i32) {
    %c0_i32 = arith.constant 0 : i32
    %c0_i32_0 = arith.constant 0 : i32
    %c0_i32_1 = arith.constant 0 : i32
    return %arg0, %c0_i32, %c0_i32_0 : i32, i32, i32
  }
  func.func @transform_9(%arg0: i32) -> (i32, i32, i32) {
    %c0_i32 = arith.constant 0 : i32
    %c0_i32_0 = arith.constant 0 : i32
    %c0_i32_1 = arith.constant 0 : i32
    return %arg0, %c0_i32, %c0_i32_0 : i32, i32, i32
  }
  func.func @transform_10(%arg0: i32) -> (i32, i32, i32) {
    %c0_i32 = arith.constant 0 : i32
    %c0_i32_0 = arith.constant 0 : i32
    %c0_i32_1 = arith.constant 0 : i32
    return %arg0, %c0_i32, %c0_i32_0 : i32, i32, i32
  }
  func.func @transform_11(%arg0: i32) -> (i32, i32, i32) {
    %c0_i32 = arith.constant 0 : i32
    %c0_i32_0 = arith.constant 0 : i32
    %c0_i32_1 = arith.constant 0 : i32
    return %arg0, %c0_i32, %c0_i32_0 : i32, i32, i32
  }
  func.func @transform_12(%arg0: i32) -> (i32, i32, i32) {
    %c0_i32 = arith.constant 0 : i32
    %c0_i32_0 = arith.constant 0 : i32
    %c0_i32_1 = arith.constant 0 : i32
    return %arg0, %c0_i32, %c0_i32_0 : i32, i32, i32
  }
  func.func @transform_13(%arg0: i32) -> (i32, i32, i32) {
    %c0_i32 = arith.constant 0 : i32
    %c0_i32_0 = arith.constant 0 : i32
    %c0_i32_1 = arith.constant 0 : i32
    %c0_i32_2 = arith.constant 0 : i32
    return %c0_i32, %c0_i32_0, %c0_i32_1 : i32, i32, i32
  }
}

module attributes {stable_mosaic.version = 11 : i64} {
  func.func @_final_kernel(%arg0: memref<2x8x256xf32, #tpu.memory_space<vmem>>, %arg1: memref<1x256xf32, #tpu.memory_space<vmem>>, %arg2: memref<1x256xf32, #tpu.memory_space<vmem>>, %arg3: memref<256x256xbf16, #tpu.memory_space<vmem>>, %arg4: memref<1x256xf32, #tpu.memory_space<vmem>>, %arg5: memref<2x256xf32, #tpu.memory_space<vmem>>, %arg6: memref<2x256xf32, #tpu.memory_space<vmem>>) attributes {dimension_semantics = [], scalar_prefetch = 0 : i64, scratch_operands = 0 : i64, tpu.core_type = #tpu.core_type<tc>} {
    %c0 = arith.constant 0 : index
    %c0_0 = arith.constant 0 : index
    %c0_1 = arith.constant 0 : index
    %0 = vector.load %arg0[%c0, %c0_0, %c0_1] : memref<2x8x256xf32, #tpu.memory_space<vmem>>, vector<2x8x256xf32>
    %1 = vector.extract_strided_slice %0 {offsets = [0, 0, 0], sizes = [2, 1, 256], strides = [1, 1, 1]} : vector<2x8x256xf32> to vector<2x1x256xf32>
    %2 = vector.shape_cast %1 : vector<2x1x256xf32> to vector<2x256xf32>
    %c0_2 = arith.constant 0 : index
    %c0_3 = arith.constant 0 : index
    %3 = vector.load %arg1[%c0_2, %c0_3] : memref<1x256xf32, #tpu.memory_space<vmem>>, vector<1x256xf32>
    %c0_4 = arith.constant 0 : index
    %c0_5 = arith.constant 0 : index
    %4 = vector.load %arg2[%c0_4, %c0_5] : memref<1x256xf32, #tpu.memory_space<vmem>>, vector<1x256xf32>
    %cst = arith.constant dense<0.000000e+00> : vector<2xf32>
    %5 = vector.multi_reduction <add>, %2, %cst [1] : vector<2x256xf32> to vector<2xf32>
    %6 = vector.shape_cast %5 : vector<2xf32> to vector<2x1xf32>
    %cst_6 = arith.constant 2.560000e+02 : f32
    %7 = vector.broadcast %cst_6 : f32 to vector<2x1xf32>
    %8 = arith.divf %6, %7 : vector<2x1xf32>
    %9 = vector.broadcast %8 : vector<2x1xf32> to vector<2x256xf32>
    %10 = arith.subf %2, %9 : vector<2x256xf32>
    %11 = arith.mulf %10, %10 : vector<2x256xf32>
    %cst_7 = arith.constant dense<0.000000e+00> : vector<2xf32>
    %12 = vector.multi_reduction <add>, %11, %cst_7 [1] : vector<2x256xf32> to vector<2xf32>
    %13 = vector.shape_cast %12 : vector<2xf32> to vector<2x1xf32>
    %cst_8 = arith.constant 2.560000e+02 : f32
    %14 = vector.broadcast %cst_8 : f32 to vector<2x1xf32>
    %15 = arith.divf %13, %14 : vector<2x1xf32>
    %16 = vector.broadcast %8 : vector<2x1xf32> to vector<2x256xf32>
    %17 = arith.subf %2, %16 : vector<2x256xf32>
    %cst_9 = arith.constant 9.99999996E-13 : f32
    %18 = vector.broadcast %cst_9 : f32 to vector<2x1xf32>
    %19 = arith.addf %15, %18 : vector<2x1xf32>
    %20 = math.rsqrt %19 : vector<2x1xf32>
    %21 = vector.broadcast %20 : vector<2x1xf32> to vector<2x256xf32>
    %22 = arith.mulf %17, %21 : vector<2x256xf32>
    %23 = vector.broadcast %3 : vector<1x256xf32> to vector<2x256xf32>
    %24 = arith.mulf %22, %23 : vector<2x256xf32>
    %25 = vector.broadcast %4 : vector<1x256xf32> to vector<2x256xf32>
    %26 = arith.addf %24, %25 : vector<2x256xf32>
    %c0_10 = arith.constant 0 : index
    %c0_11 = arith.constant 0 : index
    %27 = vector.load %arg5[%c0_10, %c0_11] : memref<2x256xf32, #tpu.memory_space<vmem>>, vector<2x256xf32>
    tpu.vector_store %arg5[%c0_10, %c0_11], %26 {strides = array<i32>} : memref<2x256xf32, #tpu.memory_space<vmem>>, vector<2x256xf32>,
    %c0_12 = arith.constant 0 : index
    %c0_13 = arith.constant 0 : index
    %28 = vector.load %arg3[%c0_12, %c0_13] : memref<256x256xbf16, #tpu.memory_space<vmem>>, vector<256x256xbf16>
    %29 = arith.truncf %26 : vector<2x256xf32> to vector<2x256xbf16>
    %cst_14 = arith.constant dense<0.000000e+00> : vector<2x256xf32>
    %30 = tpu.matmul %29, %28, %cst_14 {dimension_numbers = #tpu.dot_dimension_numbers<[1], [0], [0], [1], [0, 0, 1, 1], [], []>} : vector<2x256xbf16>, vector<256x256xbf16>, vector<2x256xf32> -> vector<2x256xf32>
    %c0_15 = arith.constant 0 : index
    %c0_16 = arith.constant 0 : index
    %31 = vector.load %arg4[%c0_15, %c0_16] : memref<1x256xf32, #tpu.memory_space<vmem>>, vector<1x256xf32>
    %32 = vector.broadcast %31 : vector<1x256xf32> to vector<2x256xf32>
    %33 = arith.addf %30, %32 : vector<2x256xf32>
    %34 = math.tanh %33 : vector<2x256xf32>
    %c0_17 = arith.constant 0 : index
    %c0_18 = arith.constant 0 : index
    %35 = vector.load %arg6[%c0_17, %c0_18] : memref<2x256xf32, #tpu.memory_space<vmem>>, vector<2x256xf32>
    tpu.vector_store %arg6[%c0_17, %c0_18], %34 {strides = array<i32>} : memref<2x256xf32, #tpu.memory_space<vmem>>, vector<2x256xf32>,
    return
  }
}

</mosaic_0001>

<llo_original>
// kernel: vit_forward.3
$region0: #{vit_forward.3}
  #allocation0 [shape = 'u32[]', space=smem, size = 0x4, offset = 0x4, fixed_abs, tag = 'smem constant byte address 0x4 - core index']
  #allocation1 [shape = 'u32[144,128]{1,0:T(1,128)}', space=vmem, size = 0x12000, scoped, tag = 'internal scratch']
  %s0 = inlined_call_operand.vmem [shape: f32[2,8,256], index: 0, kind: input, shape index: {}]
  %s1 = inlined_call_operand.hbm [shape: bf16[256,256], index: 1, kind: input, shape index: {}]
  %s2 = inlined_call_operand.hbm [shape: f32[1,256], index: 2, kind: input, shape index: {}]
  %s3 = inlined_call_operand.hbm [shape: f32[8,256], index: 3, kind: input, shape index: {}]
  %s4 = inlined_call_operand.vmem [shape: f32[2,8,256], index: 4, kind: output, shape index: {}]
  %s5 = sld [smem:[#allocation0]]
  $region61: #{vit_forward.3} parent=0
    _
  %s7 = ssub.s32 1, %s5
  %s8 = scalar_select 0, %s7, %s5
  $region1: #{vit_forward.3} parent=0
    #allocation2 [shape = 'u8[131072]{0}', space=vmem, size = 0x20000, scoped, tag = 'input window, operand 1, single buffered']
    #allocation3 [shape = 's32[2]{0}', space=sflag, size = 0x8, scoped, tag = 'scoped memory for vit_forward.3']
    #allocation4 [shape = 'u8[1024]{0}', space=vmem, size = 0x400, scoped, tag = 'input window, operand 2, single buffered']
    #allocation5 [shape = 's32[1]{0}', space=sflag, size = 0x4, scoped, tag = 'scoped memory for vit_forward.3']
    #allocation6 [shape = 'u8[8192]{0}', space=vmem, size = 0x2000, scoped, tag = 'input window, operand 3, single buffered']
    %9 = vsyncpa [#allocation3], 0
    %10 = vsyncpa [#allocation5], 0
    loop: start=0, step=1, limit=4
    $region2: #{vit_forward.3} parent=1 // loop_pre_header
      _
    $region3: #{vit_forward.3} parent=1 // loop_header
      %s12 = sphi 0, %s16
      %p13 = scmp.ge.s32.totalorder %s12, 4
      %s22 = sphi 0, %s24
      %s25 = sphi 0, %s22
      %s26 = sphi 0, %s25
      %s42 = sphi 0, %s26
      %s46 = sphi 0, %s46
      %s48 = sphi 0, %s46
      %s49 = sphi 0, %s48
      %s63 = sphi 0, %s49
      %s67 = sphi 0, %s67
      %s69 = sphi 0, %s67
      %s70 = sphi 0, %s69
      %s84 = sphi 0, %s70
      %s88 = sphi 0, %s88
      %s90 = sphi 0, %s88
      %s91 = sphi 0, %s90
      %s105 = sphi 0, %s91
      %s111 = sphi 0, %s113
      %s114 = sphi 0, %s111
      %s115 = sphi 0, %s114
      %s131 = sphi 0, %s115
    $region4: #{vit_forward.3} parent=1 // loop_header_branch
      %15 = sbr.rel (%p13) target = $region8
    $region5: #{vit_forward.3} parent=1 // loop_body
      %s17 = ssub.s32 %s12, 1
      %s18 = ssub.s32 %s12, 2
      %s19 = sadd.s32 %s12, 1
      %s20 = ssub.s32 %s12, %s19
      %p21 = scmp.eq.s32.totalorder %s20, 0
      %s23 = sadd.s32 %s22, 1
      %s24 = scalar_select %p21, %s22, %s23
      %p27 = pneg %p21
      %p28 = scmp.eq.s32.totalorder %s12, 1
      %p29 = por %p27, %p28
      %p30 = scmp.ne.s32.totalorder %s22, %s25
      %p31 = scmp.eq.s32.totalorder %s12, 0
      %p32 = por %p30, %p31
      %p33 = scmp.ne.s32.totalorder %s22, %s25
      %p34 = scmp.eq.s32.totalorder %s17, 1
      %p35 = por %p33, %p34
      %p36 = scmp.ne.s32.totalorder %s25, %s26
      %p37 = scmp.eq.s32.totalorder %s17, 0
      %p38 = por %p36, %p37
      %p39 = scmp.ne.s32.totalorder %s25, %s26
      %p40 = scmp.eq.s32.totalorder %s18, 1
      %p41 = por %p39, %p40
      %p43 = scmp.ne.s32.totalorder %s26, %s42
      %p44 = scmp.eq.s32.totalorder %s18, 0
      %p45 = por %p43, %p44
      %s47 = sadd.s32 %s46, 1
      %p50 = scmp.eq.s32.totalorder %s12, 1
      %p51 = scmp.ne.s32.totalorder %s46, %s48
      %p52 = scmp.eq.s32.totalorder %s12, 0
      %p53 = por %p51, %p52
      %p54 = scmp.ne.s32.totalorder %s46, %s48
      %p55 = scmp.eq.s32.totalorder %s17, 1
      %p56 = por %p54, %p55
      %p57 = scmp.ne.s32.totalorder %s48, %s49
      %p58 = scmp.eq.s32.totalorder %s17, 0
      %p59 = por %p57, %p58
      %p60 = scmp.ne.s32.totalorder %s48, %s49
      %p61 = scmp.eq.s32.totalorder %s18, 1
      %p62 = por %p60, %p61
      %p64 = scmp.ne.s32.totalorder %s49, %s63
      %p65 = scmp.eq.s32.totalorder %s18, 0
      %p66 = por %p64, %p65
      %s68 = sadd.s32 %s67, 1
      %p71 = scmp.eq.s32.totalorder %s12, 1
      %p72 = scmp.ne.s32.totalorder %s67, %s69
      %p73 = scmp.eq.s32.totalorder %s12, 0
      %p74 = por %p72, %p73
      %p75 = scmp.ne.s32.totalorder %s67, %s69
      %p76 = scmp.eq.s32.totalorder %s17, 1
      %p77 = por %p75, %p76
      %p78 = scmp.ne.s32.totalorder %s69, %s70
      %p79 = scmp.eq.s32.totalorder %s17, 0
      %p80 = por %p78, %p79
      %p81 = scmp.ne.s32.totalorder %s69, %s70
      %p82 = scmp.eq.s32.totalorder %s18, 1
      %p83 = por %p81, %p82
      %p85 = scmp.ne.s32.totalorder %s70, %s84
      %p86 = scmp.eq.s32.totalorder %s18, 0
      %p87 = por %p85, %p86
      %s89 = sadd.s32 %s88, 1
      %p92 = scmp.eq.s32.totalorder %s12, 1
      %p93 = scmp.ne.s32.totalorder %s88, %s90
      %p94 = scmp.eq.s32.totalorder %s12, 0
      %p95 = por %p93, %p94
      %p96 = scmp.ne.s32.totalorder %s88, %s90
      %p97 = scmp.eq.s32.totalorder %s17, 1
      %p98 = por %p96, %p97
      %p99 = scmp.ne.s32.totalorder %s90, %s91
      %p100 = scmp.eq.s32.totalorder %s17, 0
      %p101 = por %p99, %p100
      %p102 = scmp.ne.s32.totalorder %s90, %s91
      %p103 = scmp.eq.s32.totalorder %s18, 1
      %p104 = por %p102, %p103
      %p106 = scmp.ne.s32.totalorder %s91, %s105
      %p107 = scmp.eq.s32.totalorder %s18, 0
      %p108 = por %p106, %p107
      %s109 = ssub.s32 %s12, %s19
      %p110 = scmp.eq.s32.totalorder %s109, 0
      %s112 = sadd.s32 %s111, 1
      %s113 = scalar_select %p110, %s111, %s112
      %p116 = pneg %p110
      %p117 = scmp.eq.s32.totalorder %s12, 1
      %p118 = por %p116, %p117
      %p119 = scmp.ne.s32.totalorder %s111, %s114
      %p120 = scmp.eq.s32.totalorder %s12, 0
      %p121 = por %p119, %p120
      %p122 = scmp.ne.s32.totalorder %s111, %s114
      %p123 = scmp.eq.s32.totalorder %s17, 1
      %p124 = por %p122, %p123
      %p125 = scmp.ne.s32.totalorder %s114, %s115
      %p126 = scmp.eq.s32.totalorder %s17, 0
      %p127 = por %p125, %p126
      %p128 = scmp.ne.s32.totalorder %s114, %s115
      %p129 = scmp.eq.s32.totalorder %s18, 1
      %p130 = por %p128, %p129
      %p132 = scmp.ne.s32.totalorder %s115, %s131
      %p133 = scmp.eq.s32.totalorder %s18, 0
      %p134 = por %p132, %p133
      %p135 = scmp.le.s32.totalorder 1, %s12
      %p136 = scmp.lt.s32.totalorder %s12, 3
      %p137 = pnand %p135, %p136
      %p138 = pneg %p137
      // Predicated region
      $region9: #{vit_forward.3} parent=5 // pred_check
        _
      $region10: #{vit_forward.3} parent=5 // pred_check_branch
        %140 = sbr.rel (%p137) target = $region12
      $region11: #{vit_forward.3} parent=5 // pred_region
        %s141 = ssub.s32 %s12, 1
        // Predicated region
        $region13: #{vit_forward.3} parent=11 // pred_check
          %p142 = pneg %p59
        $region14: #{vit_forward.3} parent=11 // pred_check_branch
          %144 = sbr.rel (%p142) target = $region16
        $region15: #{vit_forward.3} parent=11 // pred_region
          %s146 = ssub.s32 4096, 4096
          %147 = vsyncadd [#allocation3], %s146
          %s148 = sshll.u32 [#allocation2], 4
          %s149 = int_to_ptr.vmem [resolvable:$true] %s148
          %154 = dma.hbm_to_vmem [thread:$0]  %s1, 4096, %s149, [#allocation3], 128, 128, 8
        $region16: #{vit_forward.3} parent=11 // pred_fallthru
          _
        // Predicated region
        $region17: #{vit_forward.3} parent=11 // pred_check
          %p155 = pneg %p80
        $region18: #{vit_forward.3} parent=11 // pred_check_branch
          %157 = sbr.rel (%p155) target = $region20
        $region19: #{vit_forward.3} parent=11 // pred_region
          %s159 = ssub.s32 32, 32
          %160 = vsyncadd [#allocation5], %s159
          %s162 = sshll.u32 [#allocation4], 4
          %s163 = int_to_ptr.vmem [resolvable:$true] %s162
          %165 = dma.hbm_to_vmem [thread:$0]  %s2, 32, %s163, [#allocation5]
        $region20: #{vit_forward.3} parent=11 // pred_fallthru
          _
        // Predicated region
        $region21: #{vit_forward.3} parent=11 // pred_check
          %p166 = pneg %p101
        $region22: #{vit_forward.3} parent=11 // pred_check_branch
          %168 = sbr.rel (%p166) target = $region24
        $region23: #{vit_forward.3} parent=11 // pred_region
          %s170 = ssub.s32 256, 256
          %171 = vsyncadd [#allocation5], %s170
          %s173 = sshll.u32 [#allocation6], 4
          %s174 = int_to_ptr.vmem [resolvable:$true] %s173
          %176 = dma.hbm_to_vmem [thread:$0]  %s3, 256, %s174, [#allocation5]
        $region24: #{vit_forward.3} parent=11 // pred_fallthru
          _
      $region12: #{vit_forward.3} parent=5 // pred_fallthru
        _
      %p177 = scmp.lt.s32.totalorder %s12, 2
      // Predicated region
      $region25: #{vit_forward.3} parent=5 // pred_check
        %p178 = pneg %p177
      $region26: #{vit_forward.3} parent=5 // pred_check_branch
        %180 = sbr.rel (%p178) target = $region28
      $region27: #{vit_forward.3} parent=5 // pred_region
        // Predicated region
        $region29: #{vit_forward.3} parent=27 // pred_check
          %p181 = pneg %p32
        $region30: #{vit_forward.3} parent=27 // pred_check_branch
          %183 = sbr.rel (%p181) target = $region32
        $region31: #{vit_forward.3} parent=27 // pred_region
          %p184 = scmp.lt.s32.totalorder %s12, 1
          %s185 = scalar_select %p184, %s12, 1
          %s186 = smul.addr %s185, 2
          %s187 = smul.addr %s186, 8
          %s188 = scalar_lea.vmem %s0, %s187
        $region32: #{vit_forward.3} parent=27 // pred_fallthru
          _
      $region28: #{vit_forward.3} parent=5 // pred_fallthru
        _
      %p189 = scmp.le.s32.totalorder 1, %s12
      %p190 = scmp.lt.s32.totalorder %s12, 3
      %p191 = pnand %p189, %p190
      %p192 = pneg %p191
      // Predicated region
      $region33: #{vit_forward.3} parent=5 // pred_check
        _
      $region34: #{vit_forward.3} parent=5 // pred_check_branch
        %194 = sbr.rel (%p191) target = $region36
      $region35: #{vit_forward.3} parent=5 // pred_region
        %s195 = ssub.s32 %s12, 1
        // Predicated region
        $region37: #{vit_forward.3} parent=35 // pred_check
          %p196 = pneg %p59
        $region38: #{vit_forward.3} parent=35 // pred_check_branch
          %198 = sbr.rel (%p196) target = $region40
        $region39: #{vit_forward.3} parent=35 // pred_region
          %199 = dma.done [#allocation3], 4096
        $region40: #{vit_forward.3} parent=35 // pred_fallthru
          _
        // Predicated region
        $region41: #{vit_forward.3} parent=35 // pred_check
          %p200 = pneg %p80
        $region42: #{vit_forward.3} parent=35 // pred_check_branch
          %202 = sbr.rel (%p200) target = $region44
        $region43: #{vit_forward.3} parent=35 // pred_region
          %203 = dma.done [#allocation5], 32
        $region44: #{vit_forward.3} parent=35 // pred_fallthru
          _
        // Predicated region
        $region45: #{vit_forward.3} parent=35 // pred_check
          %p204 = pneg %p101
        $region46: #{vit_forward.3} parent=35 // pred_check_branch
          %206 = sbr.rel (%p204) target = $region48
        $region47: #{vit_forward.3} parent=35 // pred_region
          %207 = dma.done [#allocation5], 256
        $region48: #{vit_forward.3} parent=35 // pred_fallthru
          _
        %p208 = scmp.lt.s32.totalorder %s17, 1
        %s209 = scalar_select %p208, %s17, 1
        %s210 = smul.addr %s209, 2
        %s211 = smul.addr %s210, 8
        %s212 = scalar_lea.vmem %s0, %s211
        %p213 = pneg %p38
        %p214 = pneg %p35
        %p215 = pneg %p59
        %p216 = pneg %p56
        %p217 = pneg %p80
        %p218 = pneg %p77
        %p219 = pneg %p101
        %p220 = pneg %p98
        %p221 = pneg %p127
        %p222 = pneg %p124
        %p223 = scmp.lt.s32.totalorder %s17, 1
        %s224 = scalar_select %p223, %s17, 1
        %s225 = smul.addr %s224, 2
        %s226 = smul.addr %s225, 8
        %s227 = scalar_lea.vmem %s4, %s226
        %p228 = scmp.lt.s32.totalorder %s17, 1
        %s229 = scalar_select %p228, %s17, 1
        %s230 = smul.addr %s229, 2
        %s231 = smul.addr %s230, 8
        %s232 = scalar_lea.vmem %s0, %s231
        %p233 = scmp.lt.s32.totalorder %s17, 1
        %s234 = scalar_select %p233, %s17, 1
        %s235 = smul.addr %s234, 2
        %s236 = smul.addr %s235, 8
        %s237 = scalar_lea.vmem %s4, %s236
        %v238 = vld [vmem:[%s232] sm:$0xff]
        %v239 = vld [vmem:[%s232 + $0x8] sm:$0xff]
        %v240 = vld [vmem:[#allocation2] sm:$0xff]
        %v241 = vld [vmem:[#allocation2 + $0x8] sm:$0xff]
        %v242 = vld [vmem:[#allocation2 + $0x10] sm:$0xff]
        %v243 = vld [vmem:[#allocation2 + $0x18] sm:$0xff]
        %v244 = vld [vmem:[#allocation2 + $0x20] sm:$0xff]
        %v245 = vld [vmem:[#allocation2 + $0x28] sm:$0xff]
        %v246 = vld [vmem:[#allocation2 + $0x30] sm:$0xff]
        %v247 = vld [vmem:[#allocation2 + $0x38] sm:$0xff]
        %v248 = vld [vmem:[#allocation2 + $0x40] sm:$0xff]
        %v249 = vld [vmem:[#allocation2 + $0x48] sm:$0xff]
        %v250 = vld [vmem:[#allocation2 + $0x50] sm:$0xff]
        %v251 = vld [vmem:[#allocation2 + $0x58] sm:$0xff]
        %v252 = vld [vmem:[#allocation2 + $0x60] sm:$0xff]
        %v253 = vld [vmem:[#allocation2 + $0x68] sm:$0xff]
        %v254 = vld [vmem:[#allocation2 + $0x70] sm:$0xff]
        %v255 = vld [vmem:[#allocation2 + $0x78] sm:$0xff]
        %v256 = vld [vmem:[#allocation2 + $0x80] sm:$0xff]
        %v257 = vld [vmem:[#allocation2 + $0x88] sm:$0xff]
        %v258 = vld [vmem:[#allocation2 + $0x90] sm:$0xff]
        %v259 = vld [vmem:[#allocation2 + $0x98] sm:$0xff]
        %v260 = vld [vmem:[#allocation2 + $0xa0] sm:$0xff]
        %v261 = vld [vmem:[#allocation2 + $0xa8] sm:$0xff]
        %v262 = vld [vmem:[#allocation2 + $0xb0] sm:$0xff]
        %v263 = vld [vmem:[#allocation2 + $0xb8] sm:$0xff]
        %v264 = vld [vmem:[#allocation2 + $0xc0] sm:$0xff]
        %v265 = vld [vmem:[#allocation2 + $0xc8] sm:$0xff]
        %v266 = vld [vmem:[#allocation2 + $0xd0] sm:$0xff]
        %v267 = vld [vmem:[#allocation2 + $0xd8] sm:$0xff]
        %v268 = vld [vmem:[#allocation2 + $0xe0] sm:$0xff]
        %v269 = vld [vmem:[#allocation2 + $0xe8] sm:$0xff]
        %v270 = vld [vmem:[#allocation2 + $0xf0] sm:$0xff]
        %v271 = vld [vmem:[#allocation2 + $0xf8] sm:$0xff]
        %v272 = vpack.c.bf16 %v238, %v238
        %v273 = vpack.c.bf16 %v239, %v239
        %v274 = vld [vmem:[#allocation4] sm:$0x3]
        %v276 = vlaneseq
        %v277 = vshrl.u32 %v276, 7
        %v278 = vsub.s32 0, %v277
        %v279 = vrot.slane %v274, %v278
        %v280 = vlaneseq
        %v281 = vshrl.u32 %v280, 7
        %v282 = vsub.s32 1, %v281
        %v283 = vrot.slane %v274, %v282
        %v318 = vunpack.c.l.b16 %v240
        %v319 = vunpack.c.h.b16 %v240
        %v320 = vunpack.c.l.b16 %v241
        %v321 = vunpack.c.h.b16 %v241
        %v322 = vunpack.c.l.b16 %v242
        %v323 = vunpack.c.h.b16 %v242
        %v324 = vunpack.c.l.b16 %v243
        %v325 = vunpack.c.h.b16 %v243
        %v326 = vunpack.c.l.b16 %v244
        %v327 = vunpack.c.h.b16 %v244
        %v328 = vunpack.c.l.b16 %v245
        %v329 = vunpack.c.h.b16 %v245
        %v330 = vunpack.c.l.b16 %v246
        %v331 = vunpack.c.h.b16 %v246
        %v332 = vunpack.c.l.b16 %v247
        %v333 = vunpack.c.h.b16 %v247
        %v334 = vunpack.c.l.b16 %v248
        %v335 = vunpack.c.h.b16 %v248
        %v336 = vunpack.c.l.b16 %v249
        %v337 = vunpack.c.h.b16 %v249
        %v338 = vunpack.c.l.b16 %v250
        %v339 = vunpack.c.h.b16 %v250
        %v340 = vunpack.c.l.b16 %v251
        %v341 = vunpack.c.h.b16 %v251
        %v342 = vunpack.c.l.b16 %v252
        %v343 = vunpack.c.h.b16 %v252
        %v344 = vunpack.c.l.b16 %v253
        %v345 = vunpack.c.h.b16 %v253
        %v346 = vunpack.c.l.b16 %v254
        %v347 = vunpack.c.h.b16 %v254
        %v348 = vunpack.c.l.b16 %v255
        %v349 = vunpack.c.h.b16 %v255
        %v350 = vunpack.c.l.b16 %v256
        %v351 = vunpack.c.h.b16 %v256
        %v352 = vunpack.c.l.b16 %v257
        %v353 = vunpack.c.h.b16 %v257
        %v354 = vunpack.c.l.b16 %v258
        %v355 = vunpack.c.h.b16 %v258
        %v356 = vunpack.c.l.b16 %v259
        %v357 = vunpack.c.h.b16 %v259
        %v358 = vunpack.c.l.b16 %v260
        %v359 = vunpack.c.h.b16 %v260
        %v360 = vunpack.c.l.b16 %v261
        %v361 = vunpack.c.h.b16 %v261
        %v362 = vunpack.c.l.b16 %v262
        %v363 = vunpack.c.h.b16 %v262
        %v364 = vunpack.c.l.b16 %v263
        %v365 = vunpack.c.h.b16 %v263
        %v366 = vunpack.c.l.b16 %v264
        %v367 = vunpack.c.h.b16 %v264
        %v368 = vunpack.c.l.b16 %v265
        %v369 = vunpack.c.h.b16 %v265
        %v370 = vunpack.c.l.b16 %v266
        %v371 = vunpack.c.h.b16 %v266
        %v372 = vunpack.c.l.b16 %v267
        %v373 = vunpack.c.h.b16 %v267
        %v374 = vunpack.c.l.b16 %v268
        %v375 = vunpack.c.h.b16 %v268
        %v376 = vunpack.c.l.b16 %v269
        %v377 = vunpack.c.h.b16 %v269
        %v378 = vunpack.c.l.b16 %v270
        %v379 = vunpack.c.h.b16 %v270
        %v380 = vunpack.c.l.b16 %v271
        %v381 = vunpack.c.h.b16 %v271
        %v382 = vpack.c.b16 %v320, %v318
        %v383 = vpack.c.b16 %v321, %v319
        %v384 = vpack.c.b16 %v324, %v322
        %v385 = vpack.c.b16 %v325, %v323
        %v386 = vpack.c.b16 %v328, %v326
        %v387 = vpack.c.b16 %v329, %v327
        %v388 = vpack.c.b16 %v332, %v330
        %v389 = vpack.c.b16 %v333, %v331
        %v390 = vpack.c.b16 %v336, %v334
        %v391 = vpack.c.b16 %v337, %v335
        %v392 = vpack.c.b16 %v340, %v338
        %v393 = vpack.c.b16 %v341, %v339
        %v394 = vpack.c.b16 %v344, %v342
        %v395 = vpack.c.b16 %v345, %v343
        %v396 = vpack.c.b16 %v348, %v346
        %v397 = vpack.c.b16 %v349, %v347
        %v398 = vpack.c.b16 %v352, %v350
        %v399 = vpack.c.b16 %v353, %v351
        %v400 = vpack.c.b16 %v356, %v354
        %v401 = vpack.c.b16 %v357, %v355
        %v402 = vpack.c.b16 %v360, %v358
        %v403 = vpack.c.b16 %v361, %v359
        %v404 = vpack.c.b16 %v364, %v362
        %v405 = vpack.c.b16 %v365, %v363
        %v406 = vpack.c.b16 %v368, %v366
        %v407 = vpack.c.b16 %v369, %v367
        %v408 = vpack.c.b16 %v372, %v370
        %v409 = vpack.c.b16 %v373, %v371
        %v410 = vpack.c.b16 %v376, %v374
        %v411 = vpack.c.b16 %v377, %v375
        %v412 = vpack.c.b16 %v380, %v378
        %v413 = vpack.c.b16 %v381, %v379
        %446 = vmatprep.subr.bf16.mxu0 %v383
        %447 = vmatpush1.bf16.msra.mxu0 %v382
        %448 = vmatprep.subr.bf16.mxu0 %v385
        %449 = vmatpush1.bf16.msra.mxu0 %v384
        %450 = vmatprep.subr.bf16.mxu0 %v387
        %451 = vmatpush1.bf16.msra.mxu0 %v386
        %452 = vmatprep.subr.bf16.mxu0 %v389
        %453 = vmatpush1.bf16.msra.mxu0 %v388
        %454 = vmatprep.subr.bf16.mxu0 %v391
        %455 = vmatpush1.bf16.msra.mxu0 %v390
        %456 = vmatprep.subr.bf16.mxu0 %v393
        %457 = vmatpush1.bf16.msra.mxu0 %v392
        %458 = vmatprep.subr.bf16.mxu0 %v395
        %459 = vmatpush1.bf16.msra.mxu0 %v394
        %460 = vmatprep.subr.bf16.mxu0 %v397
        %461 = vmatpush1.bf16.msra.mxu0 %v396
        %462 = vmatprep.subr.bf16.mxu0 %v399
        %463 = vmatpush1.bf16.msra.mxu0 %v398
        %464 = vmatprep.subr.bf16.mxu0 %v401
        %465 = vmatpush1.bf16.msra.mxu0 %v400
        %466 = vmatprep.subr.bf16.mxu0 %v403
        %467 = vmatpush1.bf16.msra.mxu0 %v402
        %468 = vmatprep.subr.bf16.mxu0 %v405
        %469 = vmatpush1.bf16.msra.mxu0 %v404
        %470 = vmatprep.subr.bf16.mxu0 %v407
        %471 = vmatpush1.bf16.msra.mxu0 %v406
        %472 = vmatprep.subr.bf16.mxu0 %v409
        %473 = vmatpush1.bf16.msra.mxu0 %v408
        %474 = vmatprep.subr.bf16.mxu0 %v411
        %475 = vmatpush1.bf16.msra.mxu0 %v410
        %476 = vmatprep.subr.bf16.mxu0 %v413
        %477 = vmatpush1.bf16.msra.mxu0 %v412
        %478 = vmatprep.mubr.bf16.mxu0 %v273
        %479 = vmatmul.mubr.bf16.gmra.mrb[0].mxu0 %v272
        %v480 = vpop.f32.mrb[0].mxu0
        %v481 = vadd.f32 %v279, %v480
        %v482 = vpop.f32.mrb[0].mxu0
        %v483 = vadd.f32 %v283, %v482
        %v484 = vpop.f32.mrb[0].mxu0
        %v485 = vpop.f32.mrb[0].mxu0
        %486 = vdwg.mxu0
        %v487 = vlaneseq
        %v488 = vshrl.u32 %v487, 7
        %vm489 = vcmp.ge.s32.totalorder %v488, 1
        %vm490 = vcmp.lt.s32.totalorder %v488, 5
        %vm491 = vmand %vm489, %vm490
        %v492 = vsel %vm491, 1, 0
        %v493 = vcvt.s32.f32 %v492
        %v494 = vmul.f32 %v481, %v493
        %v495 = vmul.f32 %v483, %v493
        %v496 = vld [vmem:[#allocation6] sm:$0xff]
        %v497 = vld [vmem:[#allocation6 + $0x8] sm:$0xff]
        %v498 = vadd.f32 %v494, %v496
        %v499 = vadd.f32 %v495, %v497
        %500 = vst [vmem:[%s237] sm:$0xff] %v498
        %501 = vst [vmem:[%s237 + $0x8] sm:$0xff] %v499
        %p502 = scmp.lt.s32.totalorder %s17, 1
        %s503 = scalar_select %p502, %s17, 1
        %s504 = smul.addr %s503, 2
        %s505 = smul.addr %s504, 8
        %s506 = scalar_lea.vmem %s4, %s505
        // Predicated region
        $region49: #{vit_forward.3} parent=35 // pred_check
          %p507 = pneg %p124
        $region50: #{vit_forward.3} parent=35 // pred_check_branch
          %509 = sbr.rel (%p507) target = $region52
        $region51: #{vit_forward.3} parent=35 // pred_region
          _
        $region52: #{vit_forward.3} parent=35 // pred_fallthru
          _
      $region36: #{vit_forward.3} parent=5 // pred_fallthru
        _
      %p510 = scmp.le.s32.totalorder 2, %s12
      // Predicated region
      $region53: #{vit_forward.3} parent=5 // pred_check
        %p511 = pneg %p510
      $region54: #{vit_forward.3} parent=5 // pred_check_branch
        %513 = sbr.rel (%p511) target = $region56
      $region55: #{vit_forward.3} parent=5 // pred_region
        %s514 = ssub.s32 %s12, 2
        // Predicated region
        $region57: #{vit_forward.3} parent=55 // pred_check
          %p515 = pneg %p130
        $region58: #{vit_forward.3} parent=55 // pred_check_branch
          %517 = sbr.rel (%p515) target = $region60
        $region59: #{vit_forward.3} parent=55 // pred_region
          %p518 = scmp.lt.s32.totalorder %s18, 1
          %s519 = scalar_select %p518, %s18, 1
          %s520 = smul.addr %s519, 2
          %s521 = smul.addr %s520, 8
          %s522 = scalar_lea.vmem %s4, %s521
        $region60: #{vit_forward.3} parent=55 // pred_fallthru
          _
      $region56: #{vit_forward.3} parent=5 // pred_fallthru
        _
    $region6: #{vit_forward.3} parent=1 // loop_footer
      %s16 = sadd.s32 1, %s12
    $region7: #{vit_forward.3} parent=1 // loop_footer_branch
      %11 = sbr.rel target = $region3
    $region8: #{vit_forward.3} parent=1 // loop_exit
      _
    %523 = vsyncpa [#allocation3], 1
    %s524 = scalar_lea.sflag [#allocation3], 1
    %525 = vsyncpa %s524, 1
    %526 = vsyncpa [#allocation5], 1

// kernel: vit_forward.5
$region0: #{vit_forward.5}
  #allocation0 [shape = 'u32[]', space=smem, size = 0x4, offset = 0x4, fixed_abs, tag = 'smem constant byte address 0x4 - core index']
  #allocation1 [shape = 'u32[144,128]{1,0:T(1,128)}', space=vmem, size = 0x12000, scoped, tag = 'internal scratch']
  %s0 = inlined_call_operand.vmem [shape: f32[2,8,256], index: 0, kind: input, shape index: {}]
  %s1 = inlined_call_operand.vmem [shape: f32[1,256], index: 1, kind: input, shape index: {}]
  %s2 = inlined_call_operand.vmem [shape: f32[1,256], index: 2, kind: input, shape index: {}]
  %s3 = inlined_call_operand.vmem [shape: bf16[256,256], index: 3, kind: input, shape index: {}]
  %s4 = inlined_call_operand.vmem [shape: f32[1,256], index: 4, kind: input, shape index: {}]
  %s5 = inlined_call_operand.hbm [shape: f32[2,256], index: 5, kind: output, shape index: {0}]
  %s6 = inlined_call_operand.hbm [shape: f32[2,256], index: 6, kind: output, shape index: {1}]
  %7 = xla_tuple %s5, %s6
  %s8 = sld [smem:[#allocation0]]
  $region38: #{vit_forward.5} parent=0
    _
  %s10 = ssub.s32 1, %s8
  %s11 = scalar_select 0, %s10, %s8
  $region1: #{vit_forward.5} parent=0
    #allocation2 [shape = 'u8[2048]{0}', space=vmem, size = 0x800, scoped, tag = 'output window, operand 0, single buffered']
    #allocation3 [shape = 's32[1]{0}', space=sflag, size = 0x4, scoped, tag = 'scoped memory for vit_forward.5']
    #allocation4 [shape = 'u8[2048]{0}', space=vmem, size = 0x800, scoped, tag = 'output window, operand 1, single buffered']
    #allocation5 [shape = 's32[1]{0}', space=sflag, size = 0x4, scoped, tag = 'scoped memory for vit_forward.5']
    %12 = vsyncpa [#allocation3], 0
    %13 = vsyncpa [#allocation5], 0
    // Predicated region
    $region2: #{vit_forward.5} parent=1 // pred_check
      _
    $region3: #{vit_forward.5} parent=1 // pred_check_branch
      %15 = sbr.rel (0) target = $region5
    $region4: #{vit_forward.5} parent=1 // pred_region
      _
    $region5: #{vit_forward.5} parent=1 // pred_fallthru
      _
    // Predicated region
    $region6: #{vit_forward.5} parent=1 // pred_check
      _
    $region7: #{vit_forward.5} parent=1 // pred_check_branch
      %17 = sbr.rel (0) target = $region9
    $region8: #{vit_forward.5} parent=1 // pred_region
      _
    $region9: #{vit_forward.5} parent=1 // pred_fallthru
      _
    // Predicated region
    $region10: #{vit_forward.5} parent=1 // pred_check
      _
    $region11: #{vit_forward.5} parent=1 // pred_check_branch
      %19 = sbr.rel (0) target = $region13
    $region12: #{vit_forward.5} parent=1 // pred_region
      _
    $region13: #{vit_forward.5} parent=1 // pred_fallthru
      _
    // Predicated region
    $region14: #{vit_forward.5} parent=1 // pred_check
      _
    $region15: #{vit_forward.5} parent=1 // pred_check_branch
      %21 = sbr.rel (0) target = $region17
    $region16: #{vit_forward.5} parent=1 // pred_region
      _
    $region17: #{vit_forward.5} parent=1 // pred_fallthru
      _
    // Predicated region
    $region18: #{vit_forward.5} parent=1 // pred_check
      _
    $region19: #{vit_forward.5} parent=1 // pred_check_branch
      %23 = sbr.rel (0) target = $region21
    $region20: #{vit_forward.5} parent=1 // pred_region
      _
    $region21: #{vit_forward.5} parent=1 // pred_fallthru
      _
    %v24 = vld [vmem:[%s0] sm:$0xff]
    %v25 = vld [vmem:[%s0 + $0x8] sm:$0xff]
    %v26 = vld [vmem:[%s0 + $0x10] sm:$0xff]
    %v27 = vld [vmem:[%s0 + $0x18] sm:$0xff]
    %v28 = vld [vmem:[%s1] sm:$0x3]
    %v29 = vld [vmem:[%s2] sm:$0x3]
    %v34 = vrot.slane %v26, 7
    %vm35 = vcmask 1041409
    %v36 = vsel %vm35, %v34, %v24
    %v37 = vrot.slane %v27, 7
    %v38 = vsel %vm35, %v37, %v25
    %vm41 = vcmask 1041408
    %v42 = vsel %vm41, %v36, 0.0
    %v43 = vsel %vm41, %v38, 0.0
    %v44 = vadd.f32 %v42, %v43
    %45 = vadd.xlane.f32.xlu0 %v44
    %v46 = vpop.xlane.xlu0 %45
    %v47 = vrcp.pop 256.0
    %v48 = vmul.f32 %v46, %v47
    %v50 = vrot.slane %v48, 1
    %v53 = vsub.f32 %v24, %v48
    %v54 = vsub.f32 %v25, %v48
    %v55 = vsub.f32 %v26, %v50
    %v56 = vsub.f32 %v27, %v50
    %v57 = vmul.f32 %v53, %v53
    %v58 = vmul.f32 %v54, %v54
    %v59 = vmul.f32 %v55, %v55
    %v60 = vmul.f32 %v56, %v56
    %v65 = vrot.slane %v59, 7
    %v66 = vsel %vm35, %v65, %v57
    %v67 = vrot.slane %v60, 7
    %v68 = vsel %vm35, %v67, %v58
    %v71 = vsel %vm41, %v66, 0.0
    %v72 = vsel %vm41, %v68, 0.0
    %v73 = vadd.f32 %v71, %v72
    %74 = vadd.xlane.f32.xlu0 %v73
    %v75 = vpop.xlane.xlu0 %74
    %v76 = vmul.f32 %v75, %v47
    %v77 = vadd.f32 %v76, 1e-12
    %v78 = vrsqrt.pop %v77
    %v80 = vrot.slane %v78, 1
    %v83 = vmul.f32 %v53, %v78
    %v84 = vmul.f32 %v54, %v78
    %v85 = vmul.f32 %v55, %v80
    %v86 = vmul.f32 %v56, %v80
    %v88 = vlaneseq
    %v89 = vshrl.u32 %v88, 7
    %v90 = vsub.s32 0, %v89
    %v91 = vrot.slane %v28, %v90
    %v92 = vlaneseq
    %v93 = vshrl.u32 %v92, 7
    %v94 = vsub.s32 1, %v93
    %v95 = vrot.slane %v28, %v94
    %v98 = vmul.f32 %v83, %v91
    %v99 = vmul.f32 %v84, %v95
    %v100 = vmul.f32 %v85, %v91
    %v101 = vmul.f32 %v86, %v95
    %v103 = vlaneseq
    %v104 = vshrl.u32 %v103, 7
    %v105 = vsub.s32 0, %v104
    %v106 = vrot.slane %v29, %v105
    %v107 = vlaneseq
    %v108 = vshrl.u32 %v107, 7
    %v109 = vsub.s32 1, %v108
    %v110 = vrot.slane %v29, %v109
    %v113 = vadd.f32 %v98, %v106
    %v114 = vadd.f32 %v99, %v110
    %v115 = vadd.f32 %v100, %v106
    %v116 = vadd.f32 %v101, %v110
    %v121 = vcombine.low %v113, %v114
    %v123 = vunpack.c.l.s4 1983009808
    %v124 = vunpack.c.0.s8 %v123
    %v125 = vlaneseq
    %v126 = vshrl.u32 %v125, 7
    %v127 = vsub.s32 %v124, %v126
    %v128 = vrot.slane %v121, %v127
    %v129 = vcombine.low %v115, %v116
    %v131 = vunpack.c.l.s4 1983009808
    %v132 = vunpack.c.0.s8 %v131
    %v133 = vlaneseq
    %v134 = vshrl.u32 %v133, 7
    %v135 = vsub.s32 %v132, %v134
    %v136 = vrot.slane %v129, %v135
    %vm137 = vcmask 1044484
    %v138 = vsel %vm137, %v128, %v128
    %vm139 = vcmask 1046534
    %v140 = vsel %vm139, %v128, %v138
    %v141 = vrot.slane %v136, 7
    %v142 = vsel %vm35, %v141, %v140
    %vm143 = vcmask 1043459
    %v144 = vsel %vm143, %v141, %v142
    %vm145 = vcmask 1045509
    %v146 = vsel %vm145, %v141, %v144
    %vm147 = vcmask 1047559
    %v148 = vsel %vm147, %v141, %v146
    %150 = vst [vmem:[#allocation2] sm:$0xf] %v148
    %v151 = vld [vmem:[%s3] sm:$0xff]
    %v152 = vld [vmem:[%s3 + $0x8] sm:$0xff]
    %v153 = vld [vmem:[%s3 + $0x10] sm:$0xff]
    %v154 = vld [vmem:[%s3 + $0x18] sm:$0xff]
    %v155 = vld [vmem:[%s3 + $0x20] sm:$0xff]
    %v156 = vld [vmem:[%s3 + $0x28] sm:$0xff]
    %v157 = vld [vmem:[%s3 + $0x30] sm:$0xff]
    %v158 = vld [vmem:[%s3 + $0x38] sm:$0xff]
    %v159 = vld [vmem:[%s3 + $0x40] sm:$0xff]
    %v160 = vld [vmem:[%s3 + $0x48] sm:$0xff]
    %v161 = vld [vmem:[%s3 + $0x50] sm:$0xff]
    %v162 = vld [vmem:[%s3 + $0x58] sm:$0xff]
    %v163 = vld [vmem:[%s3 + $0x60] sm:$0xff]
    %v164 = vld [vmem:[%s3 + $0x68] sm:$0xff]
    %v165 = vld [vmem:[%s3 + $0x70] sm:$0xff]
    %v166 = vld [vmem:[%s3 + $0x78] sm:$0xff]
    %v167 = vld [vmem:[%s3 + $0x80] sm:$0xff]
    %v168 = vld [vmem:[%s3 + $0x88] sm:$0xff]
    %v169 = vld [vmem:[%s3 + $0x90] sm:$0xff]
    %v170 = vld [vmem:[%s3 + $0x98] sm:$0xff]
    %v171 = vld [vmem:[%s3 + $0xa0] sm:$0xff]
    %v172 = vld [vmem:[%s3 + $0xa8] sm:$0xff]
    %v173 = vld [vmem:[%s3 + $0xb0] sm:$0xff]
    %v174 = vld [vmem:[%s3 + $0xb8] sm:$0xff]
    %v175 = vld [vmem:[%s3 + $0xc0] sm:$0xff]
    %v176 = vld [vmem:[%s3 + $0xc8] sm:$0xff]
    %v177 = vld [vmem:[%s3 + $0xd0] sm:$0xff]
    %v178 = vld [vmem:[%s3 + $0xd8] sm:$0xff]
    %v179 = vld [vmem:[%s3 + $0xe0] sm:$0xff]
    %v180 = vld [vmem:[%s3 + $0xe8] sm:$0xff]
    %v181 = vld [vmem:[%s3 + $0xf0] sm:$0xff]
    %v182 = vld [vmem:[%s3 + $0xf8] sm:$0xff]
    %v183 = vpack.c.bf16 %v113, %v113
    %v184 = vpack.c.bf16 %v114, %v114
    %v185 = vpack.c.bf16 %v115, %v115
    %v186 = vpack.c.bf16 %v116, %v116
    %v187 = vld [vmem:[%s4] sm:$0x3]
    %v189 = vlaneseq
    %v190 = vshrl.u32 %v189, 7
    %v191 = vsub.s32 0, %v190
    %v192 = vrot.slane %v187, %v191
    %v193 = vlaneseq
    %v194 = vshrl.u32 %v193, 7
    %v195 = vsub.s32 1, %v194
    %v196 = vrot.slane %v187, %v195
    %v203 = vunpack.c.l.b16 %v183
    %v204 = vunpack.c.l.b16 %v184
    %v205 = vunpack.c.l.b16 %v185
    %v206 = vunpack.c.l.b16 %v186
    %v207 = vrot.slane %v205, 7
    %v208 = vsel %vm35, %v207, %v203
    %v209 = vrot.slane %v206, 7
    %v210 = vsel %vm35, %v209, %v204
    %v211 = vpack.c.b16 %v208, %v208
    %v212 = vpack.c.b16 %v210, %v210
    %v247 = vunpack.c.l.b16 %v151
    %v248 = vunpack.c.h.b16 %v151
    %v249 = vunpack.c.l.b16 %v152
    %v250 = vunpack.c.h.b16 %v152
    %v251 = vunpack.c.l.b16 %v153
    %v252 = vunpack.c.h.b16 %v153
    %v253 = vunpack.c.l.b16 %v154
    %v254 = vunpack.c.h.b16 %v154
    %v255 = vunpack.c.l.b16 %v155
    %v256 = vunpack.c.h.b16 %v155
    %v257 = vunpack.c.l.b16 %v156
    %v258 = vunpack.c.h.b16 %v156
    %v259 = vunpack.c.l.b16 %v157
    %v260 = vunpack.c.h.b16 %v157
    %v261 = vunpack.c.l.b16 %v158
    %v262 = vunpack.c.h.b16 %v158
    %v263 = vunpack.c.l.b16 %v159
    %v264 = vunpack.c.h.b16 %v159
    %v265 = vunpack.c.l.b16 %v160
    %v266 = vunpack.c.h.b16 %v160
    %v267 = vunpack.c.l.b16 %v161
    %v268 = vunpack.c.h.b16 %v161
    %v269 = vunpack.c.l.b16 %v162
    %v270 = vunpack.c.h.b16 %v162
    %v271 = vunpack.c.l.b16 %v163
    %v272 = vunpack.c.h.b16 %v163
    %v273 = vunpack.c.l.b16 %v164
    %v274 = vunpack.c.h.b16 %v164
    %v275 = vunpack.c.l.b16 %v165
    %v276 = vunpack.c.h.b16 %v165
    %v277 = vunpack.c.l.b16 %v166
    %v278 = vunpack.c.h.b16 %v166
    %v279 = vunpack.c.l.b16 %v167
    %v280 = vunpack.c.h.b16 %v167
    %v281 = vunpack.c.l.b16 %v168
    %v282 = vunpack.c.h.b16 %v168
    %v283 = vunpack.c.l.b16 %v169
    %v284 = vunpack.c.h.b16 %v169
    %v285 = vunpack.c.l.b16 %v170
    %v286 = vunpack.c.h.b16 %v170
    %v287 = vunpack.c.l.b16 %v171
    %v288 = vunpack.c.h.b16 %v171
    %v289 = vunpack.c.l.b16 %v172
    %v290 = vunpack.c.h.b16 %v172
    %v291 = vunpack.c.l.b16 %v173
    %v292 = vunpack.c.h.b16 %v173
    %v293 = vunpack.c.l.b16 %v174
    %v294 = vunpack.c.h.b16 %v174
    %v295 = vunpack.c.l.b16 %v175
    %v296 = vunpack.c.h.b16 %v175
    %v297 = vunpack.c.l.b16 %v176
    %v298 = vunpack.c.h.b16 %v176
    %v299 = vunpack.c.l.b16 %v177
    %v300 = vunpack.c.h.b16 %v177
    %v301 = vunpack.c.l.b16 %v178
    %v302 = vunpack.c.h.b16 %v178
    %v303 = vunpack.c.l.b16 %v179
    %v304 = vunpack.c.h.b16 %v179
    %v305 = vunpack.c.l.b16 %v180
    %v306 = vunpack.c.h.b16 %v180
    %v307 = vunpack.c.l.b16 %v181
    %v308 = vunpack.c.h.b16 %v181
    %v309 = vunpack.c.l.b16 %v182
    %v310 = vunpack.c.h.b16 %v182
    %v311 = vpack.c.b16 %v249, %v247
    %v312 = vpack.c.b16 %v250, %v248
    %v313 = vpack.c.b16 %v253, %v251
    %v314 = vpack.c.b16 %v254, %v252
    %v315 = vpack.c.b16 %v257, %v255
    %v316 = vpack.c.b16 %v258, %v256
    %v317 = vpack.c.b16 %v261, %v259
    %v318 = vpack.c.b16 %v262, %v260
    %v319 = vpack.c.b16 %v265, %v263
    %v320 = vpack.c.b16 %v266, %v264
    %v321 = vpack.c.b16 %v269, %v267
    %v322 = vpack.c.b16 %v270, %v268
    %v323 = vpack.c.b16 %v273, %v271
    %v324 = vpack.c.b16 %v274, %v272
    %v325 = vpack.c.b16 %v277, %v275
    %v326 = vpack.c.b16 %v278, %v276
    %v327 = vpack.c.b16 %v281, %v279
    %v328 = vpack.c.b16 %v282, %v280
    %v329 = vpack.c.b16 %v285, %v283
    %v330 = vpack.c.b16 %v286, %v284
    %v331 = vpack.c.b16 %v289, %v287
    %v332 = vpack.c.b16 %v290, %v288
    %v333 = vpack.c.b16 %v293, %v291
    %v334 = vpack.c.b16 %v294, %v292
    %v335 = vpack.c.b16 %v297, %v295
    %v336 = vpack.c.b16 %v298, %v296
    %v337 = vpack.c.b16 %v301, %v299
    %v338 = vpack.c.b16 %v302, %v300
    %v339 = vpack.c.b16 %v305, %v303
    %v340 = vpack.c.b16 %v306, %v304
    %v341 = vpack.c.b16 %v309, %v307
    %v342 = vpack.c.b16 %v310, %v308
    %375 = vmatprep.subr.bf16.mxu0 %v312
    %376 = vmatpush1.bf16.msra.mxu0 %v311
    %377 = vmatprep.subr.bf16.mxu0 %v314
    %378 = vmatpush1.bf16.msra.mxu0 %v313
    %379 = vmatprep.subr.bf16.mxu0 %v316
    %380 = vmatpush1.bf16.msra.mxu0 %v315
    %381 = vmatprep.subr.bf16.mxu0 %v318
    %382 = vmatpush1.bf16.msra.mxu0 %v317
    %383 = vmatprep.subr.bf16.mxu0 %v320
    %384 = vmatpush1.bf16.msra.mxu0 %v319
    %385 = vmatprep.subr.bf16.mxu0 %v322
    %386 = vmatpush1.bf16.msra.mxu0 %v321
    %387 = vmatprep.subr.bf16.mxu0 %v324
    %388 = vmatpush1.bf16.msra.mxu0 %v323
    %389 = vmatprep.subr.bf16.mxu0 %v326
    %390 = vmatpush1.bf16.msra.mxu0 %v325
    %391 = vmatprep.subr.bf16.mxu0 %v328
    %392 = vmatpush1.bf16.msra.mxu0 %v327
    %393 = vmatprep.subr.bf16.mxu0 %v330
    %394 = vmatpush1.bf16.msra.mxu0 %v329
    %395 = vmatprep.subr.bf16.mxu0 %v332
    %396 = vmatpush1.bf16.msra.mxu0 %v331
    %397 = vmatprep.subr.bf16.mxu0 %v334
    %398 = vmatpush1.bf16.msra.mxu0 %v333
    %399 = vmatprep.subr.bf16.mxu0 %v336
    %400 = vmatpush1.bf16.msra.mxu0 %v335
    %401 = vmatprep.subr.bf16.mxu0 %v338
    %402 = vmatpush1.bf16.msra.mxu0 %v337
    %403 = vmatprep.subr.bf16.mxu0 %v340
    %404 = vmatpush1.bf16.msra.mxu0 %v339
    %405 = vmatprep.subr.bf16.mxu0 %v342
    %406 = vmatpush1.bf16.msra.mxu0 %v341
    %407 = vmatprep.mubr.bf16.mxu0 %v212
    %408 = vmatmul.mubr.bf16.gmra.mrb[0].mxu0 %v211
    %v409 = vpop.f32.mrb[0].mxu0
    %v410 = vadd.f32 %v192, %v409
    %v411 = vpop.f32.mrb[0].mxu0
    %v412 = vadd.f32 %v196, %v411
    %v413 = vpop.f32.mrb[0].mxu0
    %v414 = vpop.f32.mrb[0].mxu0
    %415 = vdwg.mxu0
    %v416 = vtanh.pop %v410
    %v417 = vtanh.pop %v412
    %v420 = vcombine.low %v416, %v417
    %v422 = vunpack.c.l.s4 1983009808
    %v423 = vunpack.c.0.s8 %v422
    %v424 = vlaneseq
    %v425 = vshrl.u32 %v424, 7
    %v426 = vsub.s32 %v423, %v425
    %v427 = vrot.slane %v420, %v426
    %429 = vst [vmem:[#allocation4] sm:$0xf] %v427
    // Predicated region
    $region22: #{vit_forward.5} parent=1 // pred_check
      _
    $region23: #{vit_forward.5} parent=1 // pred_check_branch
      %431 = sbr.rel (0) target = $region25
    $region24: #{vit_forward.5} parent=1 // pred_region
      %s433 = ssub.s32 64, 64
      %434 = vsyncadd [#allocation3], %s433
      %s436 = sshll.u32 [#allocation2], 4
      %s437 = int_to_ptr.vmem [resolvable:$true] %s436
      %439 = dma.vmem_to_hbm [thread:$0]  %s437, 64, %s5, [#allocation3]
    $region25: #{vit_forward.5} parent=1 // pred_fallthru
      _
    // Predicated region
    $region26: #{vit_forward.5} parent=1 // pred_check
      _
    $region27: #{vit_forward.5} parent=1 // pred_check_branch
      %441 = sbr.rel (0) target = $region29
    $region28: #{vit_forward.5} parent=1 // pred_region
      %s443 = ssub.s32 64, 64
      %444 = vsyncadd [#allocation5], %s443
      %s446 = sshll.u32 [#allocation4], 4
      %s447 = int_to_ptr.vmem [resolvable:$true] %s446
      %449 = dma.vmem_to_hbm [thread:$0]  %s447, 64, %s6, [#allocation5]
    $region29: #{vit_forward.5} parent=1 // pred_fallthru
      _
    // Predicated region
    $region30: #{vit_forward.5} parent=1 // pred_check
      _
    $region31: #{vit_forward.5} parent=1 // pred_check_branch
      %451 = sbr.rel (0) target = $region33
    $region32: #{vit_forward.5} parent=1 // pred_region
      %452 = dma.done [#allocation3], 64
    $region33: #{vit_forward.5} parent=1 // pred_fallthru
      _
    // Predicated region
    $region34: #{vit_forward.5} parent=1 // pred_check
      _
    $region35: #{vit_forward.5} parent=1 // pred_check_branch
      %454 = sbr.rel (0) target = $region37
    $region36: #{vit_forward.5} parent=1 // pred_region
      %455 = dma.done [#allocation5], 64
    $region37: #{vit_forward.5} parent=1 // pred_fallthru
      _
    %456 = vsyncpa [#allocation3], 1
    %457 = vsyncpa [#allocation5], 1

// kernel: vit_forward.4
$region0: #{vit_forward.4}
  #allocation0 [shape = 'u32[]', space=smem, size = 0x4, offset = 0x4, fixed_abs, tag = 'smem constant byte address 0x4 - core index']
  #allocation1 [shape = 'u32[144,128]{1,0:T(1,128)}', space=vmem, size = 0x12000, scoped, tag = 'internal scratch']
  %s0 = inlined_call_operand.vmem [shape: f32[2,8,256], index: 0, kind: input, shape index: {}]
  %s1 = inlined_call_operand.vmem [shape: f32[2,1,256], index: 1, kind: input, shape index: {}]
  %s2 = inlined_call_operand.vmem [shape: f32[2,1,256], index: 2, kind: input, shape index: {}]
  %s3 = inlined_call_operand.vmem [shape: bf16[2,256,768], index: 3, kind: input, shape index: {}]
  %s4 = inlined_call_operand.vmem [shape: f32[2,1,768], index: 4, kind: input, shape index: {}]
  %s5 = inlined_call_operand.hbm [shape: bf16[2,256,256], index: 5, kind: input, shape index: {}]
  %s6 = inlined_call_operand.vmem [shape: f32[2,1,256], index: 6, kind: input, shape index: {}]
  %s7 = inlined_call_operand.vmem [shape: f32[2,1,256], index: 7, kind: input, shape index: {}]
  %s8 = inlined_call_operand.vmem [shape: f32[2,1,256], index: 8, kind: input, shape index: {}]
  %s9 = inlined_call_operand.hbm [shape: bf16[2,256,512], index: 9, kind: input, shape index: {}]
  %s10 = inlined_call_operand.vmem [shape: f32[2,1,512], index: 10, kind: input, shape index: {}]
  %s11 = inlined_call_operand.hbm [shape: bf16[2,512,256], index: 11, kind: input, shape index: {}]
  %s12 = inlined_call_operand.vmem [shape: f32[2,1,256], index: 12, kind: input, shape index: {}]
  %s13 = inlined_call_operand.vmem [shape: f32[2,8,256], index: 13, kind: output, shape index: {}]
  %s14 = sld [smem:[#allocation0]]
  $region101: #{vit_forward.4} parent=0
    _
  %s16 = ssub.s32 1, %s14
  %s17 = scalar_select 0, %s16, %s14
  $region1: #{vit_forward.4} parent=0
    #allocation2 [shape = 'u8[262144]{0}', space=vmem, size = 0x40000, scoped, tag = 'input window, operand 5']
    #allocation3 [shape = 's32[2]{0}', space=sflag, size = 0x8, scoped, tag = 'scoped memory for vit_forward.4']
    #allocation4 [shape = 'u8[524288]{0}', space=vmem, size = 0x80000, scoped, tag = 'input window, operand 9']
    #allocation5 [shape = 's32[2]{0}', space=sflag, size = 0x8, scoped, tag = 'scoped memory for vit_forward.4']
    #allocation6 [shape = 'u8[524288]{0}', space=vmem, size = 0x80000, scoped, tag = 'input window, operand 11']
    %18 = vsyncpa [#allocation3], 0
    %s19 = scalar_lea.sflag [#allocation3], 1
    %20 = vsyncpa %s19, 0
    %21 = vsyncpa [#allocation5], 0
    %s22 = scalar_lea.sflag [#allocation5], 1
    %23 = vsyncpa %s22, 0
    loop: start=0, step=1, limit=4
    $region2: #{vit_forward.4} parent=1 // loop_pre_header
      _
    $region3: #{vit_forward.4} parent=1 // loop_header
      %s25 = sphi 0, %s29
      %p26 = scmp.ge.s32.totalorder %s25, 4
      %s33 = sphi 0, %s33
      %s35 = sphi 0, %s33
      %s36 = sphi 0, %s35
      %s50 = sphi 0, %s36
      %s56 = sphi 0, %s58
      %s59 = sphi 0, %s56
      %s60 = sphi 0, %s59
      %s76 = sphi 0, %s60
      %s82 = sphi 0, %s84
      %s85 = sphi 0, %s82
      %s86 = sphi 0, %s85
      %s102 = sphi 0, %s86
      %s108 = sphi 0, %s110
      %s111 = sphi 0, %s108
      %s112 = sphi 0, %s111
      %s128 = sphi 0, %s112
      %s134 = sphi 0, %s136
      %s137 = sphi 0, %s134
      %s138 = sphi 0, %s137
      %s154 = sphi 0, %s138
      %s160 = sphi 0, %s162
      %s163 = sphi 0, %s160
      %s164 = sphi 0, %s163
      %s180 = sphi 0, %s164
      %s186 = sphi 0, %s188
      %s189 = sphi 0, %s186
      %s190 = sphi 0, %s189
      %s206 = sphi 0, %s190
      %s212 = sphi 0, %s214
      %s215 = sphi 0, %s212
      %s216 = sphi 0, %s215
      %s232 = sphi 0, %s216
      %s238 = sphi 0, %s240
      %s241 = sphi 0, %s238
      %s242 = sphi 0, %s241
      %s258 = sphi 0, %s242
      %s264 = sphi 0, %s266
      %s267 = sphi 0, %s264
      %s268 = sphi 0, %s267
      %s284 = sphi 0, %s268
      %s290 = sphi 0, %s292
      %s293 = sphi 0, %s290
      %s294 = sphi 0, %s293
      %s310 = sphi 0, %s294
      %s316 = sphi 0, %s318
      %s319 = sphi 0, %s316
      %s320 = sphi 0, %s319
      %s336 = sphi 0, %s320
      %s342 = sphi 0, %s344
      %s345 = sphi 0, %s342
      %s346 = sphi 0, %s345
      %s362 = sphi 0, %s346
      %s366 = sphi 0, %s366
      %s368 = sphi 0, %s366
      %s369 = sphi 0, %s368
      %s383 = sphi 0, %s369
    $region4: #{vit_forward.4} parent=1 // loop_header_branch
      %28 = sbr.rel (%p26) target = $region8
    $region5: #{vit_forward.4} parent=1 // loop_body
      %s30 = ssub.s32 %s25, 1
      %s31 = ssub.s32 %s25, 2
      %s32 = sadd.s32 %s25, 1
      %s34 = sadd.s32 %s33, 1
      %p37 = scmp.eq.s32.totalorder %s25, 1
      %p38 = scmp.ne.s32.totalorder %s33, %s35
      %p39 = scmp.eq.s32.totalorder %s25, 0
      %p40 = por %p38, %p39
      %p41 = scmp.ne.s32.totalorder %s33, %s35
      %p42 = scmp.eq.s32.totalorder %s30, 1
      %p43 = por %p41, %p42
      %p44 = scmp.ne.s32.totalorder %s35, %s36
      %p45 = scmp.eq.s32.totalorder %s30, 0
      %p46 = por %p44, %p45
      %p47 = scmp.ne.s32.totalorder %s35, %s36
      %p48 = scmp.eq.s32.totalorder %s31, 1
      %p49 = por %p47, %p48
      %p51 = scmp.ne.s32.totalorder %s36, %s50
      %p52 = scmp.eq.s32.totalorder %s31, 0
      %p53 = por %p51, %p52
      %s54 = ssub.s32 %s25, %s32
      %p55 = scmp.eq.s32.totalorder %s54, 0
      %s57 = sadd.s32 %s56, 1
      %s58 = scalar_select %p55, %s56, %s57
      %p61 = pneg %p55
      %p62 = scmp.eq.s32.totalorder %s25, 1
      %p63 = por %p61, %p62
      %p64 = scmp.ne.s32.totalorder %s56, %s59
      %p65 = scmp.eq.s32.totalorder %s25, 0
      %p66 = por %p64, %p65
      %p67 = scmp.ne.s32.totalorder %s56, %s59
      %p68 = scmp.eq.s32.totalorder %s30, 1
      %p69 = por %p67, %p68
      %p70 = scmp.ne.s32.totalorder %s59, %s60
      %p71 = scmp.eq.s32.totalorder %s30, 0
      %p72 = por %p70, %p71
      %p73 = scmp.ne.s32.totalorder %s59, %s60
      %p74 = scmp.eq.s32.totalorder %s31, 1
      %p75 = por %p73, %p74
      %p77 = scmp.ne.s32.totalorder %s60, %s76
      %p78 = scmp.eq.s32.totalorder %s31, 0
      %p79 = por %p77, %p78
      %s80 = ssub.s32 %s25, %s32
      %p81 = scmp.eq.s32.totalorder %s80, 0
      %s83 = sadd.s32 %s82, 1
      %s84 = scalar_select %p81, %s82, %s83
      %p87 = pneg %p81
      %p88 = scmp.eq.s32.totalorder %s25, 1
      %p89 = por %p87, %p88
      %p90 = scmp.ne.s32.totalorder %s82, %s85
      %p91 = scmp.eq.s32.totalorder %s25, 0
      %p92 = por %p90, %p91
      %p93 = scmp.ne.s32.totalorder %s82, %s85
      %p94 = scmp.eq.s32.totalorder %s30, 1
      %p95 = por %p93, %p94
      %p96 = scmp.ne.s32.totalorder %s85, %s86
      %p97 = scmp.eq.s32.totalorder %s30, 0
      %p98 = por %p96, %p97
      %p99 = scmp.ne.s32.totalorder %s85, %s86
      %p100 = scmp.eq.s32.totalorder %s31, 1
      %p101 = por %p99, %p100
      %p103 = scmp.ne.s32.totalorder %s86, %s102
      %p104 = scmp.eq.s32.totalorder %s31, 0
      %p105 = por %p103, %p104
      %s106 = ssub.s32 %s25, %s32
      %p107 = scmp.eq.s32.totalorder %s106, 0
      %s109 = sadd.s32 %s108, 1
      %s110 = scalar_select %p107, %s108, %s109
      %p113 = pneg %p107
      %p114 = scmp.eq.s32.totalorder %s25, 1
      %p115 = por %p113, %p114
      %p116 = scmp.ne.s32.totalorder %s108, %s111
      %p117 = scmp.eq.s32.totalorder %s25, 0
      %p118 = por %p116, %p117
      %p119 = scmp.ne.s32.totalorder %s108, %s111
      %p120 = scmp.eq.s32.totalorder %s30, 1
      %p121 = por %p119, %p120
      %p122 = scmp.ne.s32.totalorder %s111, %s112
      %p123 = scmp.eq.s32.totalorder %s30, 0
      %p124 = por %p122, %p123
      %p125 = scmp.ne.s32.totalorder %s111, %s112
      %p126 = scmp.eq.s32.totalorder %s31, 1
      %p127 = por %p125, %p126
      %p129 = scmp.ne.s32.totalorder %s112, %s128
      %p130 = scmp.eq.s32.totalorder %s31, 0
      %p131 = por %p129, %p130
      %s132 = ssub.s32 %s25, %s32
      %p133 = scmp.eq.s32.totalorder %s132, 0
      %s135 = sadd.s32 %s134, 1
      %s136 = scalar_select %p133, %s134, %s135
      %p139 = pneg %p133
      %p140 = scmp.eq.s32.totalorder %s25, 1
      %p141 = por %p139, %p140
      %p142 = scmp.ne.s32.totalorder %s134, %s137
      %p143 = scmp.eq.s32.totalorder %s25, 0
      %p144 = por %p142, %p143
      %p145 = scmp.ne.s32.totalorder %s134, %s137
      %p146 = scmp.eq.s32.totalorder %s30, 1
      %p147 = por %p145, %p146
      %p148 = scmp.ne.s32.totalorder %s137, %s138
      %p149 = scmp.eq.s32.totalorder %s30, 0
      %p150 = por %p148, %p149
      %p151 = scmp.ne.s32.totalorder %s137, %s138
      %p152 = scmp.eq.s32.totalorder %s31, 1
      %p153 = por %p151, %p152
      %p155 = scmp.ne.s32.totalorder %s138, %s154
      %p156 = scmp.eq.s32.totalorder %s31, 0
      %p157 = por %p155, %p156
      %s158 = ssub.s32 %s25, %s32
      %p159 = scmp.eq.s32.totalorder %s158, 0
      %s161 = sadd.s32 %s160, 1
      %s162 = scalar_select %p159, %s160, %s161
      %p165 = pneg %p159
      %p166 = scmp.eq.s32.totalorder %s25, 1
      %p167 = por %p165, %p166
      %p168 = scmp.ne.s32.totalorder %s160, %s163
      %p169 = scmp.eq.s32.totalorder %s25, 0
      %p170 = por %p168, %p169
      %p171 = scmp.ne.s32.totalorder %s160, %s163
      %p172 = scmp.eq.s32.totalorder %s30, 1
      %p173 = por %p171, %p172
      %p174 = scmp.ne.s32.totalorder %s163, %s164
      %p175 = scmp.eq.s32.totalorder %s30, 0
      %p176 = por %p174, %p175
      %p177 = scmp.ne.s32.totalorder %s163, %s164
      %p178 = scmp.eq.s32.totalorder %s31, 1
      %p179 = por %p177, %p178
      %p181 = scmp.ne.s32.totalorder %s164, %s180
      %p182 = scmp.eq.s32.totalorder %s31, 0
      %p183 = por %p181, %p182
      %s184 = ssub.s32 %s25, %s32
      %p185 = scmp.eq.s32.totalorder %s184, 0
      %s187 = sadd.s32 %s186, 1
      %s188 = scalar_select %p185, %s186, %s187
      %p191 = pneg %p185
      %p192 = scmp.eq.s32.totalorder %s25, 1
      %p193 = por %p191, %p192
      %p194 = scmp.ne.s32.totalorder %s186, %s189
      %p195 = scmp.eq.s32.totalorder %s25, 0
      %p196 = por %p194, %p195
      %p197 = scmp.ne.s32.totalorder %s186, %s189
      %p198 = scmp.eq.s32.totalorder %s30, 1
      %p199 = por %p197, %p198
      %p200 = scmp.ne.s32.totalorder %s189, %s190
      %p201 = scmp.eq.s32.totalorder %s30, 0
      %p202 = por %p200, %p201
      %p203 = scmp.ne.s32.totalorder %s189, %s190
      %p204 = scmp.eq.s32.totalorder %s31, 1
      %p205 = por %p203, %p204
      %p207 = scmp.ne.s32.totalorder %s190, %s206
      %p208 = scmp.eq.s32.totalorder %s31, 0
      %p209 = por %p207, %p208
      %s210 = ssub.s32 %s25, %s32
      %p211 = scmp.eq.s32.totalorder %s210, 0
      %s213 = sadd.s32 %s212, 1
      %s214 = scalar_select %p211, %s212, %s213
      %p217 = pneg %p211
      %p218 = scmp.eq.s32.totalorder %s25, 1
      %p219 = por %p217, %p218
      %p220 = scmp.ne.s32.totalorder %s212, %s215
      %p221 = scmp.eq.s32.totalorder %s25, 0
      %p222 = por %p220, %p221
      %p223 = scmp.ne.s32.totalorder %s212, %s215
      %p224 = scmp.eq.s32.totalorder %s30, 1
      %p225 = por %p223, %p224
      %p226 = scmp.ne.s32.totalorder %s215, %s216
      %p227 = scmp.eq.s32.totalorder %s30, 0
      %p228 = por %p226, %p227
      %p229 = scmp.ne.s32.totalorder %s215, %s216
      %p230 = scmp.eq.s32.totalorder %s31, 1
      %p231 = por %p229, %p230
      %p233 = scmp.ne.s32.totalorder %s216, %s232
      %p234 = scmp.eq.s32.totalorder %s31, 0
      %p235 = por %p233, %p234
      %s236 = ssub.s32 %s25, %s32
      %p237 = scmp.eq.s32.totalorder %s236, 0
      %s239 = sadd.s32 %s238, 1
      %s240 = scalar_select %p237, %s238, %s239
      %p243 = pneg %p237
      %p244 = scmp.eq.s32.totalorder %s25, 1
      %p245 = por %p243, %p244
      %p246 = scmp.ne.s32.totalorder %s238, %s241
      %p247 = scmp.eq.s32.totalorder %s25, 0
      %p248 = por %p246, %p247
      %p249 = scmp.ne.s32.totalorder %s238, %s241
      %p250 = scmp.eq.s32.totalorder %s30, 1
      %p251 = por %p249, %p250
      %p252 = scmp.ne.s32.totalorder %s241, %s242
      %p253 = scmp.eq.s32.totalorder %s30, 0
      %p254 = por %p252, %p253
      %p255 = scmp.ne.s32.totalorder %s241, %s242
      %p256 = scmp.eq.s32.totalorder %s31, 1
      %p257 = por %p255, %p256
      %p259 = scmp.ne.s32.totalorder %s242, %s258
      %p260 = scmp.eq.s32.totalorder %s31, 0
      %p261 = por %p259, %p260
      %s262 = ssub.s32 %s25, %s32
      %p263 = scmp.eq.s32.totalorder %s262, 0
      %s265 = sadd.s32 %s264, 1
      %s266 = scalar_select %p263, %s264, %s265
      %p269 = pneg %p263
      %p270 = scmp.eq.s32.totalorder %s25, 1
      %p271 = por %p269, %p270
      %p272 = scmp.ne.s32.totalorder %s264, %s267
      %p273 = scmp.eq.s32.totalorder %s25, 0
      %p274 = por %p272, %p273
      %p275 = scmp.ne.s32.totalorder %s264, %s267
      %p276 = scmp.eq.s32.totalorder %s30, 1
      %p277 = por %p275, %p276
      %p278 = scmp.ne.s32.totalorder %s267, %s268
      %p279 = scmp.eq.s32.totalorder %s30, 0
      %p280 = por %p278, %p279
      %p281 = scmp.ne.s32.totalorder %s267, %s268
      %p282 = scmp.eq.s32.totalorder %s31, 1
      %p283 = por %p281, %p282
      %p285 = scmp.ne.s32.totalorder %s268, %s284
      %p286 = scmp.eq.s32.totalorder %s31, 0
      %p287 = por %p285, %p286
      %s288 = ssub.s32 %s25, %s32
      %p289 = scmp.eq.s32.totalorder %s288, 0
      %s291 = sadd.s32 %s290, 1
      %s292 = scalar_select %p289, %s290, %s291
      %p295 = pneg %p289
      %p296 = scmp.eq.s32.totalorder %s25, 1
      %p297 = por %p295, %p296
      %p298 = scmp.ne.s32.totalorder %s290, %s293
      %p299 = scmp.eq.s32.totalorder %s25, 0
      %p300 = por %p298, %p299
      %p301 = scmp.ne.s32.totalorder %s290, %s293
      %p302 = scmp.eq.s32.totalorder %s30, 1
      %p303 = por %p301, %p302
      %p304 = scmp.ne.s32.totalorder %s293, %s294
      %p305 = scmp.eq.s32.totalorder %s30, 0
      %p306 = por %p304, %p305
      %p307 = scmp.ne.s32.totalorder %s293, %s294
      %p308 = scmp.eq.s32.totalorder %s31, 1
      %p309 = por %p307, %p308
      %p311 = scmp.ne.s32.totalorder %s294, %s310
      %p312 = scmp.eq.s32.totalorder %s31, 0
      %p313 = por %p311, %p312
      %s314 = ssub.s32 %s25, %s32
      %p315 = scmp.eq.s32.totalorder %s314, 0
      %s317 = sadd.s32 %s316, 1
      %s318 = scalar_select %p315, %s316, %s317
      %p321 = pneg %p315
      %p322 = scmp.eq.s32.totalorder %s25, 1
      %p323 = por %p321, %p322
      %p324 = scmp.ne.s32.totalorder %s316, %s319
      %p325 = scmp.eq.s32.totalorder %s25, 0
      %p326 = por %p324, %p325
      %p327 = scmp.ne.s32.totalorder %s316, %s319
      %p328 = scmp.eq.s32.totalorder %s30, 1
      %p329 = por %p327, %p328
      %p330 = scmp.ne.s32.totalorder %s319, %s320
      %p331 = scmp.eq.s32.totalorder %s30, 0
      %p332 = por %p330, %p331
      %p333 = scmp.ne.s32.totalorder %s319, %s320
      %p334 = scmp.eq.s32.totalorder %s31, 1
      %p335 = por %p333, %p334
      %p337 = scmp.ne.s32.totalorder %s320, %s336
      %p338 = scmp.eq.s32.totalorder %s31, 0
      %p339 = por %p337, %p338
      %s340 = ssub.s32 %s25, %s32
      %p341 = scmp.eq.s32.totalorder %s340, 0
      %s343 = sadd.s32 %s342, 1
      %s344 = scalar_select %p341, %s342, %s343
      %p347 = pneg %p341
      %p348 = scmp.eq.s32.totalorder %s25, 1
      %p349 = por %p347, %p348
      %p350 = scmp.ne.s32.totalorder %s342, %s345
      %p351 = scmp.eq.s32.totalorder %s25, 0
      %p352 = por %p350, %p351
      %p353 = scmp.ne.s32.totalorder %s342, %s345
      %p354 = scmp.eq.s32.totalorder %s30, 1
      %p355 = por %p353, %p354
      %p356 = scmp.ne.s32.totalorder %s345, %s346
      %p357 = scmp.eq.s32.totalorder %s30, 0
      %p358 = por %p356, %p357
      %p359 = scmp.ne.s32.totalorder %s345, %s346
      %p360 = scmp.eq.s32.totalorder %s31, 1
      %p361 = por %p359, %p360
      %p363 = scmp.ne.s32.totalorder %s346, %s362
      %p364 = scmp.eq.s32.totalorder %s31, 0
      %p365 = por %p363, %p364
      %s367 = sadd.s32 %s366, 1
      %p370 = scmp.eq.s32.totalorder %s25, 1
      %p371 = scmp.ne.s32.totalorder %s366, %s368
      %p372 = scmp.eq.s32.totalorder %s25, 0
      %p373 = por %p371, %p372
      %p374 = scmp.ne.s32.totalorder %s366, %s368
      %p375 = scmp.eq.s32.totalorder %s30, 1
      %p376 = por %p374, %p375
      %p377 = scmp.ne.s32.totalorder %s368, %s369
      %p378 = scmp.eq.s32.totalorder %s30, 0
      %p379 = por %p377, %p378
      %p380 = scmp.ne.s32.totalorder %s368, %s369
      %p381 = scmp.eq.s32.totalorder %s31, 1
      %p382 = por %p380, %p381
      %p384 = scmp.ne.s32.totalorder %s369, %s383
      %p385 = scmp.eq.s32.totalorder %s31, 0
      %p386 = por %p384, %p385
      %p387 = scmp.le.s32.totalorder 1, %s25
      %p388 = scmp.lt.s32.totalorder %s25, 3
      %p389 = pnand %p387, %p388
      %p390 = pneg %p389
      // Predicated region
      $region9: #{vit_forward.4} parent=5 // pred_check
        _
      $region10: #{vit_forward.4} parent=5 // pred_check_branch
        %392 = sbr.rel (%p389) target = $region12
      $region11: #{vit_forward.4} parent=5 // pred_region
        %s393 = ssub.s32 %s25, 1
        // Predicated region
        $region13: #{vit_forward.4} parent=11 // pred_check
          %p394 = pneg %p46
        $region14: #{vit_forward.4} parent=11 // pred_check_branch
          %396 = sbr.rel (%p394) target = $region16
        $region15: #{vit_forward.4} parent=11 // pred_region
          _
        $region16: #{vit_forward.4} parent=11 // pred_fallthru
          _
      $region12: #{vit_forward.4} parent=5 // pred_fallthru
        _
      %p397 = scmp.lt.s32.totalorder %s25, 2
      // Predicated region
      $region17: #{vit_forward.4} parent=5 // pred_check
        %p398 = pneg %p397
      $region18: #{vit_forward.4} parent=5 // pred_check_branch
        %400 = sbr.rel (%p398) target = $region20
      $region19: #{vit_forward.4} parent=5 // pred_region
        // Predicated region
        $region21: #{vit_forward.4} parent=19 // pred_check
          %p401 = pneg %p66
        $region22: #{vit_forward.4} parent=19 // pred_check_branch
          %403 = sbr.rel (%p401) target = $region24
        $region23: #{vit_forward.4} parent=19 // pred_region
          %p404 = scmp.lt.s32.totalorder %s25, 1
          %s405 = scalar_select %p404, %s25, 1
          %s406 = smul.addr %s405, 2
          %s407 = scalar_lea.vmem %s1, %s406
        $region24: #{vit_forward.4} parent=19 // pred_fallthru
          _
        // Predicated region
        $region25: #{vit_forward.4} parent=19 // pred_check
          %p408 = pneg %p92
        $region26: #{vit_forward.4} parent=19 // pred_check_branch
          %410 = sbr.rel (%p408) target = $region28
        $region27: #{vit_forward.4} parent=19 // pred_region
          %p411 = scmp.lt.s32.totalorder %s25, 1
          %s412 = scalar_select %p411, %s25, 1
          %s413 = smul.addr %s412, 2
          %s414 = scalar_lea.vmem %s2, %s413
        $region28: #{vit_forward.4} parent=19 // pred_fallthru
          _
        // Predicated region
        $region29: #{vit_forward.4} parent=19 // pred_check
          %p415 = pneg %p118
        $region30: #{vit_forward.4} parent=19 // pred_check_branch
          %417 = sbr.rel (%p415) target = $region32
        $region31: #{vit_forward.4} parent=19 // pred_region
          %p418 = scmp.lt.s32.totalorder %s25, 1
          %s419 = scalar_select %p418, %s25, 1
          %s420 = smul.addr %s419, 192
          %s421 = smul.addr %s420, 4
          %s422 = scalar_lea.vmem %s3, %s421
        $region32: #{vit_forward.4} parent=19 // pred_fallthru
          _
        // Predicated region
        $region33: #{vit_forward.4} parent=19 // pred_check
          %p423 = pneg %p144
        $region34: #{vit_forward.4} parent=19 // pred_check_branch
          %425 = sbr.rel (%p423) target = $region36
        $region35: #{vit_forward.4} parent=19 // pred_region
          %p426 = scmp.lt.s32.totalorder %s25, 1
          %s427 = scalar_select %p426, %s25, 1
          %s428 = smul.addr %s427, 6
          %s429 = scalar_lea.vmem %s4, %s428
        $region36: #{vit_forward.4} parent=19 // pred_fallthru
          _
        // Predicated region
        $region37: #{vit_forward.4} parent=19 // pred_check
          %p430 = pneg %p170
        $region38: #{vit_forward.4} parent=19 // pred_check_branch
          %432 = sbr.rel (%p430) target = $region40
        $region39: #{vit_forward.4} parent=19 // pred_region
          %s433 = sand.u32 %s160, 1
          %s434 = scalar_lea.sflag [#allocation3], %s433
          %s435 = sand.u32 %s160, 1
          %s436 = smul.addr %s435, 256
          %s437 = scalar_lea.vmem [#allocation2], %s436
          %s439 = ssub.s32 4096, 4096
          %440 = vsyncadd %s434, %s439
          %s441 = smul.addr %s25, 64
          %s442 = smul.addr %s441, 64
          %s443 = scalar_lea.hbm %s5, %s442
          %s444 = sshll.u32 %s437, 4
          %s445 = int_to_ptr.vmem [resolvable:$true] %s444
          %450 = dma.hbm_to_vmem [thread:$0]  %s443, 4096, %s445, %s434, 128, 128, 8
        $region40: #{vit_forward.4} parent=19 // pred_fallthru
          _
        // Predicated region
        $region41: #{vit_forward.4} parent=19 // pred_check
          %p451 = pneg %p196
        $region42: #{vit_forward.4} parent=19 // pred_check_branch
          %453 = sbr.rel (%p451) target = $region44
        $region43: #{vit_forward.4} parent=19 // pred_region
          %p454 = scmp.lt.s32.totalorder %s25, 1
          %s455 = scalar_select %p454, %s25, 1
          %s456 = smul.addr %s455, 2
          %s457 = scalar_lea.vmem %s6, %s456
        $region44: #{vit_forward.4} parent=19 // pred_fallthru
          _
        // Predicated region
        $region45: #{vit_forward.4} parent=19 // pred_check
          %p458 = pneg %p222
        $region46: #{vit_forward.4} parent=19 // pred_check_branch
          %460 = sbr.rel (%p458) target = $region48
        $region47: #{vit_forward.4} parent=19 // pred_region
          %p461 = scmp.lt.s32.totalorder %s25, 1
          %s462 = scalar_select %p461, %s25, 1
          %s463 = smul.addr %s462, 2
          %s464 = scalar_lea.vmem %s7, %s463
        $region48: #{vit_forward.4} parent=19 // pred_fallthru
          _
        // Predicated region
        $region49: #{vit_forward.4} parent=19 // pred_check
          %p465 = pneg %p248
        $region50: #{vit_forward.4} parent=19 // pred_check_branch
          %467 = sbr.rel (%p465) target = $region52
        $region51: #{vit_forward.4} parent=19 // pred_region
          %p468 = scmp.lt.s32.totalorder %s25, 1
          %s469 = scalar_select %p468, %s25, 1
          %s470 = smul.addr %s469, 2
          %s471 = scalar_lea.vmem %s8, %s470
        $region52: #{vit_forward.4} parent=19 // pred_fallthru
          _
        // Predicated region
        $region53: #{vit_forward.4} parent=19 // pred_check
          %p472 = pneg %p274
        $region54: #{vit_forward.4} parent=19 // pred_check_branch
          %474 = sbr.rel (%p472) target = $region56
        $region55: #{vit_forward.4} parent=19 // pred_region
          %s475 = sand.u32 %s25, 1
          %s476 = scalar_lea.sflag [#allocation5], %s475
          %s477 = sand.u32 %s264, 1
          %s478 = smul.addr %s477, 512
          %s479 = scalar_lea.vmem [#allocation4], %s478
          %s481 = ssub.s32 8192, 8192
          %482 = vsyncadd %s476, %s481
          %s483 = smul.addr %s25, 128
          %s484 = smul.addr %s483, 64
          %s485 = scalar_lea.hbm %s9, %s484
          %s486 = sshll.u32 %s479, 4
          %s487 = int_to_ptr.vmem [resolvable:$true] %s486
          %492 = dma.hbm_to_vmem [thread:$0]  %s485, 8192, %s487, %s476, 256, 256, 16
        $region56: #{vit_forward.4} parent=19 // pred_fallthru
          _
        // Predicated region
        $region57: #{vit_forward.4} parent=19 // pred_check
          %p493 = pneg %p300
        $region58: #{vit_forward.4} parent=19 // pred_check_branch
          %495 = sbr.rel (%p493) target = $region60
        $region59: #{vit_forward.4} parent=19 // pred_region
          %p496 = scmp.lt.s32.totalorder %s25, 1
          %s497 = scalar_select %p496, %s25, 1
          %s498 = smul.addr %s497, 4
          %s499 = scalar_lea.vmem %s10, %s498
        $region60: #{vit_forward.4} parent=19 // pred_fallthru
          _
        // Predicated region
        $region61: #{vit_forward.4} parent=19 // pred_check
          %p500 = pneg %p326
        $region62: #{vit_forward.4} parent=19 // pred_check_branch
          %502 = sbr.rel (%p500) target = $region64
        $region63: #{vit_forward.4} parent=19 // pred_region
          %s503 = sand.u32 %s25, 1
          %s504 = scalar_lea.sflag [#allocation5], %s503
          %s505 = sand.u32 %s316, 1
          %s506 = smul.addr %s505, 512
          %s507 = scalar_lea.vmem [#allocation6], %s506
          %s509 = ssub.s32 8192, 8192
          %510 = vsyncadd %s504, %s509
          %s511 = smul.addr %s25, 128
          %s512 = smul.addr %s511, 64
          %s513 = scalar_lea.hbm %s11, %s512
          %s514 = sshll.u32 %s507, 4
          %s515 = int_to_ptr.vmem [resolvable:$true] %s514
          %520 = dma.hbm_to_vmem [thread:$0]  %s513, 8192, %s515, %s504, 128, 128, 8
        $region64: #{vit_forward.4} parent=19 // pred_fallthru
          _
        // Predicated region
        $region65: #{vit_forward.4} parent=19 // pred_check
          %p521 = pneg %p352
        $region66: #{vit_forward.4} parent=19 // pred_check_branch
          %523 = sbr.rel (%p521) target = $region68
        $region67: #{vit_forward.4} parent=19 // pred_region
          %p524 = scmp.lt.s32.totalorder %s25, 1
          %s525 = scalar_select %p524, %s25, 1
          %s526 = smul.addr %s525, 2
          %s527 = scalar_lea.vmem %s12, %s526
        $region68: #{vit_forward.4} parent=19 // pred_fallthru
          _
      $region20: #{vit_forward.4} parent=5 // pred_fallthru
        _
      %p528 = scmp.le.s32.totalorder 1, %s25
      %p529 = scmp.lt.s32.totalorder %s25, 3
      %p530 = pnand %p528, %p529
      %p531 = pneg %p530
      // Predicated region
      $region69: #{vit_forward.4} parent=5 // pred_check
        _
      $region70: #{vit_forward.4} parent=5 // pred_check_branch
        %533 = sbr.rel (%p530) target = $region72
      $region71: #{vit_forward.4} parent=5 // pred_region
        %s534 = ssub.s32 %s25, 1
        %s535 = sand.u32 %s163, 1
        %s536 = scalar_lea.sflag [#allocation3], %s535
        %s537 = sand.u32 %s163, 1
        %s538 = smul.addr %s537, 256
        %s539 = scalar_lea.vmem [#allocation2], %s538
        // Predicated region
        $region73: #{vit_forward.4} parent=71 // pred_check
          %p540 = pneg %p176
        $region74: #{vit_forward.4} parent=71 // pred_check_branch
          %542 = sbr.rel (%p540) target = $region76
        $region75: #{vit_forward.4} parent=71 // pred_region
          %543 = dma.done %s536, 4096
        $region76: #{vit_forward.4} parent=71 // pred_fallthru
          _
        %s544 = sand.u32 %s30, 1
        %s545 = scalar_lea.sflag [#allocation5], %s544
        %s546 = sand.u32 %s267, 1
        %s547 = smul.addr %s546, 512
        %s548 = scalar_lea.vmem [#allocation4], %s547
        // Predicated region
        $region77: #{vit_forward.4} parent=71 // pred_check
          %p549 = pneg %p280
        $region78: #{vit_forward.4} parent=71 // pred_check_branch
          %551 = sbr.rel (%p549) target = $region80
        $region79: #{vit_forward.4} parent=71 // pred_region
          %552 = dma.done %s545, 8192
        $region80: #{vit_forward.4} parent=71 // pred_fallthru
          _
        %s553 = sand.u32 %s30, 1
        %s554 = scalar_lea.sflag [#allocation5], %s553
        %s555 = sand.u32 %s319, 1
        %s556 = smul.addr %s555, 512
        %s557 = scalar_lea.vmem [#allocation6], %s556
        // Predicated region
        $region81: #{vit_forward.4} parent=71 // pred_check
          %p558 = pneg %p332
        $region82: #{vit_forward.4} parent=71 // pred_check_branch
          %560 = sbr.rel (%p558) target = $region84
        $region83: #{vit_forward.4} parent=71 // pred_region
          %561 = dma.done %s554, 8192
        $region84: #{vit_forward.4} parent=71 // pred_fallthru
          _
        %p562 = pneg %p46
        %p563 = pneg %p43
        %p564 = scmp.lt.s32.totalorder %s30, 1
        %s565 = scalar_select %p564, %s30, 1
        %s566 = smul.addr %s565, 2
        %s567 = scalar_lea.vmem %s1, %s566
        %p568 = pneg %p72
        %p569 = pneg %p69
        %p570 = scmp.lt.s32.totalorder %s30, 1
        %s571 = scalar_select %p570, %s30, 1
        %s572 = smul.addr %s571, 2
        %s573 = scalar_lea.vmem %s2, %s572
        %p574 = pneg %p98
        %p575 = pneg %p95
        %p576 = scmp.lt.s32.totalorder %s30, 1
        %s577 = scalar_select %p576, %s30, 1
        %s578 = smul.addr %s577, 192
        %s579 = smul.addr %s578, 4
        %s580 = scalar_lea.vmem %s3, %s579
        %p581 = pneg %p124
        %p582 = pneg %p121
        %p583 = scmp.lt.s32.totalorder %s30, 1
        %s584 = scalar_select %p583, %s30, 1
        %s585 = smul.addr %s584, 6
        %s586 = scalar_lea.vmem %s4, %s585
        %p587 = pneg %p150
        %p588 = pneg %p147
        %s589 = sand.u32 %s163, 1
        %s590 = scalar_lea.sflag [#allocation3], %s589
        %s591 = sand.u32 %s163, 1
        %s592 = smul.addr %s591, 256
        %s593 = scalar_lea.vmem [#allocation2], %s592
        %p594 = pneg %p176
        %p595 = pneg %p173
        %p596 = scmp.lt.s32.totalorder %s30, 1
        %s597 = scalar_select %p596, %s30, 1
        %s598 = smul.addr %s597, 2
        %s599 = scalar_lea.vmem %s6, %s598
        %p600 = pneg %p202
        %p601 = pneg %p199
        %p602 = scmp.lt.s32.totalorder %s30, 1
        %s603 = scalar_select %p602, %s30, 1
        %s604 = smul.addr %s603, 2
        %s605 = scalar_lea.vmem %s7, %s604
        %p606 = pneg %p228
        %p607 = pneg %p225
        %p608 = scmp.lt.s32.totalorder %s30, 1
        %s609 = scalar_select %p608, %s30, 1
        %s610 = smul.addr %s609, 2
        %s611 = scalar_lea.vmem %s8, %s610
        %p612 = pneg %p254
        %p613 = pneg %p251
        %s614 = sand.u32 %s30, 1
        %s615 = scalar_lea.sflag [#allocation5], %s614
        %s616 = sand.u32 %s267, 1
        %s617 = smul.addr %s616, 512
        %s618 = scalar_lea.vmem [#allocation4], %s617
        %p619 = pneg %p280
        %p620 = pneg %p277
        %p621 = scmp.lt.s32.totalorder %s30, 1
        %s622 = scalar_select %p621, %s30, 1
        %s623 = smul.addr %s622, 4
        %s624 = scalar_lea.vmem %s10, %s623
        %p625 = pneg %p306
        %p626 = pneg %p303
        %s627 = sand.u32 %s30, 1
        %s628 = scalar_lea.sflag [#allocation5], %s627
        %s629 = sand.u32 %s319, 1
        %s630 = smul.addr %s629, 512
        %s631 = scalar_lea.vmem [#allocation6], %s630
        %p632 = pneg %p332
        %p633 = pneg %p329
        %p634 = scmp.lt.s32.totalorder %s30, 1
        %s635 = scalar_select %p634, %s30, 1
        %s636 = smul.addr %s635, 2
        %s637 = scalar_lea.vmem %s12, %s636
        %p638 = pneg %p358
        %p639 = pneg %p355
        %p640 = pneg %p379
        %p641 = pneg %p376
        %p642 = scmp.lt.s32.totalorder %s30, 1
        %s643 = scalar_select %p642, %s30, 1
        %s644 = smul.addr %s643, 2
        %s645 = scalar_lea.vmem %s1, %s644
        %p646 = scmp.lt.s32.totalorder %s30, 1
        %s647 = scalar_select %p646, %s30, 1
        %s648 = smul.addr %s647, 2
        %s649 = scalar_lea.vmem %s2, %s648
        %p650 = scmp.lt.s32.totalorder %s30, 1
        %s651 = scalar_select %p650, %s30, 1
        %s652 = smul.addr %s651, 192
        %s653 = smul.addr %s652, 4
        %s654 = scalar_lea.vmem %s3, %s653
        %p655 = scmp.lt.s32.totalorder %s30, 1
        %s656 = scalar_select %p655, %s30, 1
        %s657 = smul.addr %s656, 6
        %s658 = scalar_lea.vmem %s4, %s657
        %p659 = scmp.lt.s32.totalorder %s30, 1
        %s660 = scalar_select %p659, %s30, 1
        %s661 = smul.addr %s660, 2
        %s662 = scalar_lea.vmem %s6, %s661
        %p663 = scmp.lt.s32.totalorder %s30, 1
        %s664 = scalar_select %p663, %s30, 1
        %s665 = smul.addr %s664, 2
        %s666 = scalar_lea.vmem %s7, %s665
        %p667 = scmp.lt.s32.totalorder %s30, 1
        %s668 = scalar_select %p667, %s30, 1
        %s669 = smul.addr %s668, 2
        %s670 = scalar_lea.vmem %s8, %s669
        %p671 = scmp.lt.s32.totalorder %s30, 1
        %s672 = scalar_select %p671, %s30, 1
        %s673 = smul.addr %s672, 4
        %s674 = scalar_lea.vmem %s10, %s673
        %p675 = scmp.lt.s32.totalorder %s30, 1
        %s676 = scalar_select %p675, %s30, 1
        %s677 = smul.addr %s676, 2
        %s678 = scalar_lea.vmem %s12, %s677
        %p680 = scmp.eq.s32.totalorder %s30, 0
        // Predicated region
        $region85: #{vit_forward.4} parent=71 // pred_check
          %p681 = pneg %p680
        $region86: #{vit_forward.4} parent=71 // pred_check_branch
          %683 = sbr.rel (%p681) target = $region88
        $region87: #{vit_forward.4} parent=71 // pred_region
          %v684 = vld [vmem:[%s0] sm:$0xff]
          %v685 = vld [vmem:[%s0 + $0x8] sm:$0xff]
          %v686 = vld [vmem:[%s0 + $0x10] sm:$0xff]
          %v687 = vld [vmem:[%s0 + $0x18] sm:$0xff]
          %688 = vst [vmem:[%s13] sm:$0xff] %v684
          %689 = vst [vmem:[%s13 + $0x8] sm:$0xff] %v685
          %690 = vst [vmem:[%s13 + $0x10] sm:$0xff] %v686
          %691 = vst [vmem:[%s13 + $0x18] sm:$0xff] %v687
        $region88: #{vit_forward.4} parent=71 // pred_fallthru
          _
        %v692 = vld [vmem:[%s13] sm:$0xff]
        %v693 = vld [vmem:[%s13 + $0x8] sm:$0xff]
        %v694 = vld [vmem:[%s13 + $0x10] sm:$0xff]
        %v695 = vld [vmem:[%s13 + $0x18] sm:$0xff]
        %v696 = vld [vmem:[%s645] sm:$0x3]
        %v697 = vld [vmem:[%s649] sm:$0x3]
        %v698 = vadd.f32 %v692, %v693
        %699 = vadd.xlane.f32.xlu0 %v698
        %v700 = vpop.xlane.xlu0 %699
        %v701 = vadd.f32 %v694, %v695
        %702 = vadd.xlane.f32.xlu0 %v701
        %v703 = vpop.xlane.xlu0 %702
        %v704 = vrcp.pop 256.0
        %v705 = vmul.f32 %v700, %v704
        %v706 = vmul.f32 %v703, %v704
        %v707 = vsub.f32 %v692, %v705
        %v708 = vsub.f32 %v693, %v705
        %v709 = vsub.f32 %v694, %v706
        %v710 = vsub.f32 %v695, %v706
        %v711 = vmul.f32 %v707, %v707
        %v712 = vmul.f32 %v708, %v708
        %v713 = vmul.f32 %v709, %v709
        %v714 = vmul.f32 %v710, %v710
        %v715 = vadd.f32 %v711, %v712
        %716 = vadd.xlane.f32.xlu0 %v715
        %v717 = vpop.xlane.xlu0 %716
        %v718 = vadd.f32 %v713, %v714
        %719 = vadd.xlane.f32.xlu0 %v718
        %v720 = vpop.xlane.xlu0 %719
        %v721 = vmul.f32 %v717, %v704
        %v722 = vmul.f32 %v720, %v704
        %v723 = vadd.f32 %v721, 1e-12
        %v724 = vadd.f32 %v722, 1e-12
        %v725 = vrsqrt.pop %v723
        %v726 = vrsqrt.pop %v724
        %v727 = vmul.f32 %v707, %v725
        %v728 = vmul.f32 %v708, %v725
        %v729 = vmul.f32 %v709, %v726
        %v730 = vmul.f32 %v710, %v726
        %v732 = vlaneseq
        %v733 = vshrl.u32 %v732, 7
        %v734 = vsub.s32 0, %v733
        %v735 = vrot.slane %v696, %v734
        %v736 = vlaneseq
        %v737 = vshrl.u32 %v736, 7
        %v738 = vsub.s32 1, %v737
        %v739 = vrot.slane %v696, %v738
        %v742 = vmul.f32 %v727, %v735
        %v743 = vmul.f32 %v728, %v739
        %v744 = vmul.f32 %v729, %v735
        %v745 = vmul.f32 %v730, %v739
        %v747 = vlaneseq
        %v748 = vshrl.u32 %v747, 7
        %v749 = vsub.s32 0, %v748
        %v750 = vrot.slane %v697, %v749
        %v751 = vlaneseq
        %v752 = vshrl.u32 %v751, 7
        %v753 = vsub.s32 1, %v752
        %v754 = vrot.slane %v697, %v753
        %v757 = vadd.f32 %v742, %v750
        %v758 = vadd.f32 %v743, %v754
        %v759 = vadd.f32 %v744, %v750
        %v760 = vadd.f32 %v745, %v754
        %v761 = vld [vmem:[%s654] sm:$0xff]
        %v762 = vld [vmem:[%s654 + $0x8] sm:$0xff]
        %v763 = vld [vmem:[%s654 + $0x10] sm:$0xff]
        %v764 = vld [vmem:[%s654 + $0x18] sm:$0xff]
        %v765 = vld [vmem:[%s654 + $0x20] sm:$0xff]
        %v766 = vld [vmem:[%s654 + $0x28] sm:$0xff]
        %v767 = vld [vmem:[%s654 + $0x30] sm:$0xff]
        %v768 = vld [vmem:[%s654 + $0x38] sm:$0xff]
        %v769 = vld [vmem:[%s654 + $0x40] sm:$0xff]
        %v770 = vld [vmem:[%s654 + $0x48] sm:$0xff]
        %v771 = vld [vmem:[%s654 + $0x50] sm:$0xff]
        %v772 = vld [vmem:[%s654 + $0x58] sm:$0xff]
        %v773 = vld [vmem:[%s654 + $0x60] sm:$0xff]
        %v774 = vld [vmem:[%s654 + $0x68] sm:$0xff]
        %v775 = vld [vmem:[%s654 + $0x70] sm:$0xff]
        %v776 = vld [vmem:[%s654 + $0x78] sm:$0xff]
        %v777 = vld [vmem:[%s654 + $0x80] sm:$0xff]
        %v778 = vld [vmem:[%s654 + $0x88] sm:$0xff]
        %v779 = vld [vmem:[%s654 + $0x90] sm:$0xff]
        %v780 = vld [vmem:[%s654 + $0x98] sm:$0xff]
        %v781 = vld [vmem:[%s654 + $0xa0] sm:$0xff]
        %v782 = vld [vmem:[%s654 + $0xa8] sm:$0xff]
        %v783 = vld [vmem:[%s654 + $0xb0] sm:$0xff]
        %v784 = vld [vmem:[%s654 + $0xb8] sm:$0xff]
        %v785 = vld [vmem:[%s654 + $0xc0] sm:$0xff]
        %v786 = vld [vmem:[%s654 + $0xc8] sm:$0xff]
        %v787 = vld [vmem:[%s654 + $0xd0] sm:$0xff]
        %v788 = vld [vmem:[%s654 + $0xd8] sm:$0xff]
        %v789 = vld [vmem:[%s654 + $0xe0] sm:$0xff]
        %v790 = vld [vmem:[%s654 + $0xe8] sm:$0xff]
        %v791 = vld [vmem:[%s654 + $0xf0] sm:$0xff]
        %v792 = vld [vmem:[%s654 + $0xf8] sm:$0xff]
        %v793 = vld [vmem:[%s654 + $0x100] sm:$0xff]
        %v794 = vld [vmem:[%s654 + $0x108] sm:$0xff]
        %v795 = vld [vmem:[%s654 + $0x110] sm:$0xff]
        %v796 = vld [vmem:[%s654 + $0x118] sm:$0xff]
        %v797 = vld [vmem:[%s654 + $0x120] sm:$0xff]
        %v798 = vld [vmem:[%s654 + $0x128] sm:$0xff]
        %v799 = vld [vmem:[%s654 + $0x130] sm:$0xff]
        %v800 = vld [vmem:[%s654 + $0x138] sm:$0xff]
        %v801 = vld [vmem:[%s654 + $0x140] sm:$0xff]
        %v802 = vld [vmem:[%s654 + $0x148] sm:$0xff]
        %v803 = vld [vmem:[%s654 + $0x150] sm:$0xff]
        %v804 = vld [vmem:[%s654 + $0x158] sm:$0xff]
        %v805 = vld [vmem:[%s654 + $0x160] sm:$0xff]
        %v806 = vld [vmem:[%s654 + $0x168] sm:$0xff]
        %v807 = vld [vmem:[%s654 + $0x170] sm:$0xff]
        %v808 = vld [vmem:[%s654 + $0x178] sm:$0xff]
        %v809 = vld [vmem:[%s654 + $0x180] sm:$0xff]
        %v810 = vld [vmem:[%s654 + $0x188] sm:$0xff]
        %v811 = vld [vmem:[%s654 + $0x190] sm:$0xff]
        %v812 = vld [vmem:[%s654 + $0x198] sm:$0xff]
        %v813 = vld [vmem:[%s654 + $0x1a0] sm:$0xff]
        %v814 = vld [vmem:[%s654 + $0x1a8] sm:$0xff]
        %v815 = vld [vmem:[%s654 + $0x1b0] sm:$0xff]
        %v816 = vld [vmem:[%s654 + $0x1b8] sm:$0xff]
        %v817 = vld [vmem:[%s654 + $0x1c0] sm:$0xff]
        %v818 = vld [vmem:[%s654 + $0x1c8] sm:$0xff]
        %v819 = vld [vmem:[%s654 + $0x1d0] sm:$0xff]
        %v820 = vld [vmem:[%s654 + $0x1d8] sm:$0xff]
        %v821 = vld [vmem:[%s654 + $0x1e0] sm:$0xff]
        %v822 = vld [vmem:[%s654 + $0x1e8] sm:$0xff]
        %v823 = vld [vmem:[%s654 + $0x1f0] sm:$0xff]
        %v824 = vld [vmem:[%s654 + $0x1f8] sm:$0xff]
        %v825 = vld [vmem:[%s654 + $0x200] sm:$0xff]
        %v826 = vld [vmem:[%s654 + $0x208] sm:$0xff]
        %v827 = vld [vmem:[%s654 + $0x210] sm:$0xff]
        %v828 = vld [vmem:[%s654 + $0x218] sm:$0xff]
        %v829 = vld [vmem:[%s654 + $0x220] sm:$0xff]
        %v830 = vld [vmem:[%s654 + $0x228] sm:$0xff]
        %v831 = vld [vmem:[%s654 + $0x230] sm:$0xff]
        %v832 = vld [vmem:[%s654 + $0x238] sm:$0xff]
        %v833 = vld [vmem:[%s654 + $0x240] sm:$0xff]
        %v834 = vld [vmem:[%s654 + $0x248] sm:$0xff]
        %v835 = vld [vmem:[%s654 + $0x250] sm:$0xff]
        %v836 = vld [vmem:[%s654 + $0x258] sm:$0xff]
        %v837 = vld [vmem:[%s654 + $0x260] sm:$0xff]
        %v838 = vld [vmem:[%s654 + $0x268] sm:$0xff]
        %v839 = vld [vmem:[%s654 + $0x270] sm:$0xff]
        %v840 = vld [vmem:[%s654 + $0x278] sm:$0xff]
        %v841 = vld [vmem:[%s654 + $0x280] sm:$0xff]
        %v842 = vld [vmem:[%s654 + $0x288] sm:$0xff]
        %v843 = vld [vmem:[%s654 + $0x290] sm:$0xff]
        %v844 = vld [vmem:[%s654 + $0x298] sm:$0xff]
        %v845 = vld [vmem:[%s654 + $0x2a0] sm:$0xff]
        %v846 = vld [vmem:[%s654 + $0x2a8] sm:$0xff]
        %v847 = vld [vmem:[%s654 + $0x2b0] sm:$0xff]
        %v848 = vld [vmem:[%s654 + $0x2b8] sm:$0xff]
        %v849 = vld [vmem:[%s654 + $0x2c0] sm:$0xff]
        %v850 = vld [vmem:[%s654 + $0x2c8] sm:$0xff]
        %v851 = vld [vmem:[%s654 + $0x2d0] sm:$0xff]
        %v852 = vld [vmem:[%s654 + $0x2d8] sm:$0xff]
        %v853 = vld [vmem:[%s654 + $0x2e0] sm:$0xff]
        %v854 = vld [vmem:[%s654 + $0x2e8] sm:$0xff]
        %v855 = vld [vmem:[%s654 + $0x2f0] sm:$0xff]
        %v856 = vld [vmem:[%s654 + $0x2f8] sm:$0xff]
        %v857 = vpack.c.bf16 %v759, %v757
        %v858 = vpack.c.bf16 %v760, %v758
        %v859 = vld [vmem:[%s658] sm:$0x3f]
        %v861 = vlaneseq
        %v862 = vshrl.u32 %v861, 7
        %v863 = vsub.s32 0, %v862
        %v864 = vrot.slane %v859, %v863
        %v865 = vlaneseq
        %v866 = vshrl.u32 %v865, 7
        %v867 = vsub.s32 1, %v866
        %v868 = vrot.slane %v859, %v867
        %v869 = vlaneseq
        %v870 = vshrl.u32 %v869, 7
        %v871 = vsub.s32 2, %v870
        %v872 = vrot.slane %v859, %v871
        %v873 = vlaneseq
        %v874 = vshrl.u32 %v873, 7
        %v875 = vsub.s32 3, %v874
        %v876 = vrot.slane %v859, %v875
        %v877 = vlaneseq
        %v878 = vshrl.u32 %v877, 7
        %v879 = vsub.s32 4, %v878
        %v880 = vrot.slane %v859, %v879
        %v881 = vlaneseq
        %v882 = vshrl.u32 %v881, 7
        %v883 = vsub.s32 5, %v882
        %v884 = vrot.slane %v859, %v883
        %v987 = vunpack.c.l.b16 %v761
        %v988 = vunpack.c.h.b16 %v761
        %v989 = vunpack.c.l.b16 %v762
        %v990 = vunpack.c.h.b16 %v762
        %v991 = vunpack.c.l.b16 %v763
        %v992 = vunpack.c.h.b16 %v763
        %v993 = vunpack.c.l.b16 %v764
        %v994 = vunpack.c.h.b16 %v764
        %v995 = vunpack.c.l.b16 %v765
        %v996 = vunpack.c.h.b16 %v765
        %v997 = vunpack.c.l.b16 %v766
        %v998 = vunpack.c.h.b16 %v766
        %v999 = vunpack.c.l.b16 %v767
        %v1000 = vunpack.c.h.b16 %v767
        %v1001 = vunpack.c.l.b16 %v768
        %v1002 = vunpack.c.h.b16 %v768
        %v1003 = vunpack.c.l.b16 %v769
        %v1004 = vunpack.c.h.b16 %v769
        %v1005 = vunpack.c.l.b16 %v770
        %v1006 = vunpack.c.h.b16 %v770
        %v1007 = vunpack.c.l.b16 %v771
        %v1008 = vunpack.c.h.b16 %v771
        %v1009 = vunpack.c.l.b16 %v772
        %v1010 = vunpack.c.h.b16 %v772
        %v1011 = vunpack.c.l.b16 %v773
        %v1012 = vunpack.c.h.b16 %v773
        %v1013 = vunpack.c.l.b16 %v774
        %v1014 = vunpack.c.h.b16 %v774
        %v1015 = vunpack.c.l.b16 %v775
        %v1016 = vunpack.c.h.b16 %v775
        %v1017 = vunpack.c.l.b16 %v776
        %v1018 = vunpack.c.h.b16 %v776
        %v1019 = vunpack.c.l.b16 %v777
        %v1020 = vunpack.c.h.b16 %v777
        %v1021 = vunpack.c.l.b16 %v778
        %v1022 = vunpack.c.h.b16 %v778
        %v1023 = vunpack.c.l.b16 %v779
        %v1024 = vunpack.c.h.b16 %v779
        %v1025 = vunpack.c.l.b16 %v780
        %v1026 = vunpack.c.h.b16 %v780
        %v1027 = vunpack.c.l.b16 %v781
        %v1028 = vunpack.c.h.b16 %v781
        %v1029 = vunpack.c.l.b16 %v782
        %v1030 = vunpack.c.h.b16 %v782
        %v1031 = vunpack.c.l.b16 %v783
        %v1032 = vunpack.c.h.b16 %v783
        %v1033 = vunpack.c.l.b16 %v784
        %v1034 = vunpack.c.h.b16 %v784
        %v1035 = vunpack.c.l.b16 %v785
        %v1036 = vunpack.c.h.b16 %v785
        %v1037 = vunpack.c.l.b16 %v786
        %v1038 = vunpack.c.h.b16 %v786
        %v1039 = vunpack.c.l.b16 %v787
        %v1040 = vunpack.c.h.b16 %v787
        %v1041 = vunpack.c.l.b16 %v788
        %v1042 = vunpack.c.h.b16 %v788
        %v1043 = vunpack.c.l.b16 %v789
        %v1044 = vunpack.c.h.b16 %v789
        %v1045 = vunpack.c.l.b16 %v790
        %v1046 = vunpack.c.h.b16 %v790
        %v1047 = vunpack.c.l.b16 %v791
        %v1048 = vunpack.c.h.b16 %v791
        %v1049 = vunpack.c.l.b16 %v792
        %v1050 = vunpack.c.h.b16 %v792
        %v1051 = vunpack.c.l.b16 %v793
        %v1052 = vunpack.c.h.b16 %v793
        %v1053 = vunpack.c.l.b16 %v794
        %v1054 = vunpack.c.h.b16 %v794
        %v1055 = vunpack.c.l.b16 %v795
        %v1056 = vunpack.c.h.b16 %v795
        %v1057 = vunpack.c.l.b16 %v796
        %v1058 = vunpack.c.h.b16 %v796
        %v1059 = vunpack.c.l.b16 %v797
        %v1060 = vunpack.c.h.b16 %v797
        %v1061 = vunpack.c.l.b16 %v798
        %v1062 = vunpack.c.h.b16 %v798
        %v1063 = vunpack.c.l.b16 %v799
        %v1064 = vunpack.c.h.b16 %v799
        %v1065 = vunpack.c.l.b16 %v800
        %v1066 = vunpack.c.h.b16 %v800
        %v1067 = vunpack.c.l.b16 %v801
        %v1068 = vunpack.c.h.b16 %v801
        %v1069 = vunpack.c.l.b16 %v802
        %v1070 = vunpack.c.h.b16 %v802
        %v1071 = vunpack.c.l.b16 %v803
        %v1072 = vunpack.c.h.b16 %v803
        %v1073 = vunpack.c.l.b16 %v804
        %v1074 = vunpack.c.h.b16 %v804
        %v1075 = vunpack.c.l.b16 %v805
        %v1076 = vunpack.c.h.b16 %v805
        %v1077 = vunpack.c.l.b16 %v806
        %v1078 = vunpack.c.h.b16 %v806
        %v1079 = vunpack.c.l.b16 %v807
        %v1080 = vunpack.c.h.b16 %v807
        %v1081 = vunpack.c.l.b16 %v808
        %v1082 = vunpack.c.h.b16 %v808
        %v1083 = vunpack.c.l.b16 %v809
        %v1084 = vunpack.c.h.b16 %v809
        %v1085 = vunpack.c.l.b16 %v810
        %v1086 = vunpack.c.h.b16 %v810
        %v1087 = vunpack.c.l.b16 %v811
        %v1088 = vunpack.c.h.b16 %v811
        %v1089 = vunpack.c.l.b16 %v812
        %v1090 = vunpack.c.h.b16 %v812
        %v1091 = vunpack.c.l.b16 %v813
        %v1092 = vunpack.c.h.b16 %v813
        %v1093 = vunpack.c.l.b16 %v814
        %v1094 = vunpack.c.h.b16 %v814
        %v1095 = vunpack.c.l.b16 %v815
        %v1096 = vunpack.c.h.b16 %v815
        %v1097 = vunpack.c.l.b16 %v816
        %v1098 = vunpack.c.h.b16 %v816
        %v1099 = vunpack.c.l.b16 %v817
        %v1100 = vunpack.c.h.b16 %v817
        %v1101 = vunpack.c.l.b16 %v818
        %v1102 = vunpack.c.h.b16 %v818
        %v1103 = vunpack.c.l.b16 %v819
        %v1104 = vunpack.c.h.b16 %v819
        %v1105 = vunpack.c.l.b16 %v820
        %v1106 = vunpack.c.h.b16 %v820
        %v1107 = vunpack.c.l.b16 %v821
        %v1108 = vunpack.c.h.b16 %v821
        %v1109 = vunpack.c.l.b16 %v822
        %v1110 = vunpack.c.h.b16 %v822
        %v1111 = vunpack.c.l.b16 %v823
        %v1112 = vunpack.c.h.b16 %v823
        %v1113 = vunpack.c.l.b16 %v824
        %v1114 = vunpack.c.h.b16 %v824
        %v1115 = vunpack.c.l.b16 %v825
        %v1116 = vunpack.c.h.b16 %v825
        %v1117 = vunpack.c.l.b16 %v826
        %v1118 = vunpack.c.h.b16 %v826
        %v1119 = vunpack.c.l.b16 %v827
        %v1120 = vunpack.c.h.b16 %v827
        %v1121 = vunpack.c.l.b16 %v828
        %v1122 = vunpack.c.h.b16 %v828
        %v1123 = vunpack.c.l.b16 %v829
        %v1124 = vunpack.c.h.b16 %v829
        %v1125 = vunpack.c.l.b16 %v830
        %v1126 = vunpack.c.h.b16 %v830
        %v1127 = vunpack.c.l.b16 %v831
        %v1128 = vunpack.c.h.b16 %v831
        %v1129 = vunpack.c.l.b16 %v832
        %v1130 = vunpack.c.h.b16 %v832
        %v1131 = vunpack.c.l.b16 %v833
        %v1132 = vunpack.c.h.b16 %v833
        %v1133 = vunpack.c.l.b16 %v834
        %v1134 = vunpack.c.h.b16 %v834
        %v1135 = vunpack.c.l.b16 %v835
        %v1136 = vunpack.c.h.b16 %v835
        %v1137 = vunpack.c.l.b16 %v836
        %v1138 = vunpack.c.h.b16 %v836
        %v1139 = vunpack.c.l.b16 %v837
        %v1140 = vunpack.c.h.b16 %v837
        %v1141 = vunpack.c.l.b16 %v838
        %v1142 = vunpack.c.h.b16 %v838
        %v1143 = vunpack.c.l.b16 %v839
        %v1144 = vunpack.c.h.b16 %v839
        %v1145 = vunpack.c.l.b16 %v840
        %v1146 = vunpack.c.h.b16 %v840
        %v1147 = vunpack.c.l.b16 %v841
        %v1148 = vunpack.c.h.b16 %v841
        %v1149 = vunpack.c.l.b16 %v842
        %v1150 = vunpack.c.h.b16 %v842
        %v1151 = vunpack.c.l.b16 %v843
        %v1152 = vunpack.c.h.b16 %v843
        %v1153 = vunpack.c.l.b16 %v844
        %v1154 = vunpack.c.h.b16 %v844
        %v1155 = vunpack.c.l.b16 %v845
        %v1156 = vunpack.c.h.b16 %v845
        %v1157 = vunpack.c.l.b16 %v846
        %v1158 = vunpack.c.h.b16 %v846
        %v1159 = vunpack.c.l.b16 %v847
        %v1160 = vunpack.c.h.b16 %v847
        %v1161 = vunpack.c.l.b16 %v848
        %v1162 = vunpack.c.h.b16 %v848
        %v1163 = vunpack.c.l.b16 %v849
        %v1164 = vunpack.c.h.b16 %v849
        %v1165 = vunpack.c.l.b16 %v850
        %v1166 = vunpack.c.h.b16 %v850
        %v1167 = vunpack.c.l.b16 %v851
        %v1168 = vunpack.c.h.b16 %v851
        %v1169 = vunpack.c.l.b16 %v852
        %v1170 = vunpack.c.h.b16 %v852
        %v1171 = vunpack.c.l.b16 %v853
        %v1172 = vunpack.c.h.b16 %v853
        %v1173 = vunpack.c.l.b16 %v854
        %v1174 = vunpack.c.h.b16 %v854
        %v1175 = vunpack.c.l.b16 %v855
        %v1176 = vunpack.c.h.b16 %v855
        %v1177 = vunpack.c.l.b16 %v856
        %v1178 = vunpack.c.h.b16 %v856
        %v1179 = vpack.c.b16 %v993, %v987
        %v1180 = vpack.c.b16 %v994, %v988
        %v1181 = vpack.c.b16 %v995, %v989
        %v1182 = vpack.c.b16 %v996, %v990
        %v1183 = vpack.c.b16 %v997, %v991
        %v1184 = vpack.c.b16 %v998, %v992
        %v1185 = vpack.c.b16 %v1005, %v999
        %v1186 = vpack.c.b16 %v1006, %v1000
        %v1187 = vpack.c.b16 %v1007, %v1001
        %v1188 = vpack.c.b16 %v1008, %v1002
        %v1189 = vpack.c.b16 %v1009, %v1003
        %v1190 = vpack.c.b16 %v1010, %v1004
        %v1191 = vpack.c.b16 %v1017, %v1011
        %v1192 = vpack.c.b16 %v1018, %v1012
        %v1193 = vpack.c.b16 %v1019, %v1013
        %v1194 = vpack.c.b16 %v1020, %v1014
        %v1195 = vpack.c.b16 %v1021, %v1015
        %v1196 = vpack.c.b16 %v1022, %v1016
        %v1197 = vpack.c.b16 %v1029, %v1023
        %v1198 = vpack.c.b16 %v1030, %v1024
        %v1199 = vpack.c.b16 %v1031, %v1025
        %v1200 = vpack.c.b16 %v1032, %v1026
        %v1201 = vpack.c.b16 %v1033, %v1027
        %v1202 = vpack.c.b16 %v1034, %v1028
        %v1203 = vpack.c.b16 %v1041, %v1035
        %v1204 = vpack.c.b16 %v1042, %v1036
        %v1205 = vpack.c.b16 %v1043, %v1037
        %v1206 = vpack.c.b16 %v1044, %v1038
        %v1207 = vpack.c.b16 %v1045, %v1039
        %v1208 = vpack.c.b16 %v1046, %v1040
        %v1209 = vpack.c.b16 %v1053, %v1047
        %v1210 = vpack.c.b16 %v1054, %v1048
        %v1211 = vpack.c.b16 %v1055, %v1049
        %v1212 = vpack.c.b16 %v1056, %v1050
        %v1213 = vpack.c.b16 %v1057, %v1051
        %v1214 = vpack.c.b16 %v1058, %v1052
        %v1215 = vpack.c.b16 %v1065, %v1059
        %v1216 = vpack.c.b16 %v1066, %v1060
        %v1217 = vpack.c.b16 %v1067, %v1061
        %v1218 = vpack.c.b16 %v1068, %v1062
        %v1219 = vpack.c.b16 %v1069, %v1063
        %v1220 = vpack.c.b16 %v1070, %v1064
        %v1221 = vpack.c.b16 %v1077, %v1071
        %v1222 = vpack.c.b16 %v1078, %v1072
        %v1223 = vpack.c.b16 %v1079, %v1073
        %v1224 = vpack.c.b16 %v1080, %v1074
        %v1225 = vpack.c.b16 %v1081, %v1075
        %v1226 = vpack.c.b16 %v1082, %v1076
        %v1227 = vpack.c.b16 %v1089, %v1083
        %v1228 = vpack.c.b16 %v1090, %v1084
        %v1229 = vpack.c.b16 %v1091, %v1085
        %v1230 = vpack.c.b16 %v1092, %v1086
        %v1231 = vpack.c.b16 %v1093, %v1087
        %v1232 = vpack.c.b16 %v1094, %v1088
        %v1233 = vpack.c.b16 %v1101, %v1095
        %v1234 = vpack.c.b16 %v1102, %v1096
        %v1235 = vpack.c.b16 %v1103, %v1097
        %v1236 = vpack.c.b16 %v1104, %v1098
        %v1237 = vpack.c.b16 %v1105, %v1099
        %v1238 = vpack.c.b16 %v1106, %v1100
        %v1239 = vpack.c.b16 %v1113, %v1107
        %v1240 = vpack.c.b16 %v1114, %v1108
        %v1241 = vpack.c.b16 %v1115, %v1109
        %v1242 = vpack.c.b16 %v1116, %v1110
        %v1243 = vpack.c.b16 %v1117, %v1111
        %v1244 = vpack.c.b16 %v1118, %v1112
        %v1245 = vpack.c.b16 %v1125, %v1119
        %v1246 = vpack.c.b16 %v1126, %v1120
        %v1247 = vpack.c.b16 %v1127, %v1121
        %v1248 = vpack.c.b16 %v1128, %v1122
        %v1249 = vpack.c.b16 %v1129, %v1123
        %v1250 = vpack.c.b16 %v1130, %v1124
        %v1251 = vpack.c.b16 %v1137, %v1131
        %v1252 = vpack.c.b16 %v1138, %v1132
        %v1253 = vpack.c.b16 %v1139, %v1133
        %v1254 = vpack.c.b16 %v1140, %v1134
        %v1255 = vpack.c.b16 %v1141, %v1135
        %v1256 = vpack.c.b16 %v1142, %v1136
        %v1257 = vpack.c.b16 %v1149, %v1143
        %v1258 = vpack.c.b16 %v1150, %v1144
        %v1259 = vpack.c.b16 %v1151, %v1145
        %v1260 = vpack.c.b16 %v1152, %v1146
        %v1261 = vpack.c.b16 %v1153, %v1147
        %v1262 = vpack.c.b16 %v1154, %v1148
        %v1263 = vpack.c.b16 %v1161, %v1155
        %v1264 = vpack.c.b16 %v1162, %v1156
        %v1265 = vpack.c.b16 %v1163, %v1157
        %v1266 = vpack.c.b16 %v1164, %v1158
        %v1267 = vpack.c.b16 %v1165, %v1159
        %v1268 = vpack.c.b16 %v1166, %v1160
        %v1269 = vpack.c.b16 %v1173, %v1167
        %v1270 = vpack.c.b16 %v1174, %v1168
        %v1271 = vpack.c.b16 %v1175, %v1169
        %v1272 = vpack.c.b16 %v1176, %v1170
        %v1273 = vpack.c.b16 %v1177, %v1171
        %v1274 = vpack.c.b16 %v1178, %v1172
        %1371 = vmatprep.subr.bf16.mxu0 %v1180
        %1372 = vmatpush1.bf16.msra.mxu0 %v1179
        %1373 = vmatprep.subr.bf16.mxu0 %v1186
        %1374 = vmatpush1.bf16.msra.mxu0 %v1185
        %1375 = vmatprep.subr.bf16.mxu0 %v1192
        %1376 = vmatpush1.bf16.msra.mxu0 %v1191
        %1377 = vmatprep.subr.bf16.mxu0 %v1198
        %1378 = vmatpush1.bf16.msra.mxu0 %v1197
        %1379 = vmatprep.subr.bf16.mxu0 %v1204
        %1380 = vmatpush1.bf16.msra.mxu0 %v1203
        %1381 = vmatprep.subr.bf16.mxu0 %v1210
        %1382 = vmatpush1.bf16.msra.mxu0 %v1209
        %1383 = vmatprep.subr.bf16.mxu0 %v1216
        %1384 = vmatpush1.bf16.msra.mxu0 %v1215
        %1385 = vmatprep.subr.bf16.mxu0 %v1222
        %1386 = vmatpush1.bf16.msra.mxu0 %v1221
        %1387 = vmatprep.subr.bf16.mxu0 %v1228
        %1388 = vmatpush1.bf16.msra.mxu0 %v1227
        %1389 = vmatprep.subr.bf16.mxu0 %v1234
        %1390 = vmatpush1.bf16.msra.mxu0 %v1233
        %1391 = vmatprep.subr.bf16.mxu0 %v1240
        %1392 = vmatpush1.bf16.msra.mxu0 %v1239
        %1393 = vmatprep.subr.bf16.mxu0 %v1246
        %1394 = vmatpush1.bf16.msra.mxu0 %v1245
        %1395 = vmatprep.subr.bf16.mxu0 %v1252
        %1396 = vmatpush1.bf16.msra.mxu0 %v1251
        %1397 = vmatprep.subr.bf16.mxu0 %v1258
        %1398 = vmatpush1.bf16.msra.mxu0 %v1257
        %1399 = vmatprep.subr.bf16.mxu0 %v1264
        %1400 = vmatpush1.bf16.msra.mxu0 %v1263
        %1401 = vmatprep.subr.bf16.mxu0 %v1270
        %1402 = vmatpush1.bf16.msra.mxu0 %v1269
        %1403 = vmatprep.mubr.bf16.mxu0 %v858
        %1404 = vmatmul.mubr.bf16.gmra.mrb[0].mxu0 %v857
        %v1405 = vpop.f32.mrb[0].mxu0
        %v1406 = vadd.f32 %v864, %v1405
        %v1407 = vpop.f32.mrb[0].mxu0
        %v1408 = vadd.f32 %v868, %v1407
        %v1409 = vpop.f32.mrb[0].mxu0
        %v1410 = vadd.f32 %v864, %v1409
        %v1411 = vpop.f32.mrb[0].mxu0
        %v1412 = vadd.f32 %v868, %v1411
        %1413 = vdwg.mxu0
        %1414 = vmatprep.subr.bf16.mxu0 %v1182
        %1415 = vmatpush1.bf16.msra.mxu0 %v1181
        %1416 = vmatprep.subr.bf16.mxu0 %v1188
        %1417 = vmatpush1.bf16.msra.mxu0 %v1187
        %1418 = vmatprep.subr.bf16.mxu0 %v1194
        %1419 = vmatpush1.bf16.msra.mxu0 %v1193
        %1420 = vmatprep.subr.bf16.mxu0 %v1200
        %1421 = vmatpush1.bf16.msra.mxu0 %v1199
        %1422 = vmatprep.subr.bf16.mxu0 %v1206
        %1423 = vmatpush1.bf16.msra.mxu0 %v1205
        %1424 = vmatprep.subr.bf16.mxu0 %v1212
        %1425 = vmatpush1.bf16.msra.mxu0 %v1211
        %1426 = vmatprep.subr.bf16.mxu0 %v1218
        %1427 = vmatpush1.bf16.msra.mxu0 %v1217
        %1428 = vmatprep.subr.bf16.mxu0 %v1224
        %1429 = vmatpush1.bf16.msra.mxu0 %v1223
        %1430 = vmatprep.subr.bf16.mxu0 %v1230
        %1431 = vmatpush1.bf16.msra.mxu0 %v1229
        %1432 = vmatprep.subr.bf16.mxu0 %v1236
        %1433 = vmatpush1.bf16.msra.mxu0 %v1235
        %1434 = vmatprep.subr.bf16.mxu0 %v1242
        %1435 = vmatpush1.bf16.msra.mxu0 %v1241
        %1436 = vmatprep.subr.bf16.mxu0 %v1248
        %1437 = vmatpush1.bf16.msra.mxu0 %v1247
        %1438 = vmatprep.subr.bf16.mxu0 %v1254
        %1439 = vmatpush1.bf16.msra.mxu0 %v1253
        %1440 = vmatprep.subr.bf16.mxu0 %v1260
        %1441 = vmatpush1.bf16.msra.mxu0 %v1259
        %1442 = vmatprep.subr.bf16.mxu0 %v1266
        %1443 = vmatpush1.bf16.msra.mxu0 %v1265
        %1444 = vmatprep.subr.bf16.mxu0 %v1272
        %1445 = vmatpush1.bf16.msra.mxu0 %v1271
        %1446 = vmatprep.mubr.bf16.mxu0 %v858
        %1447 = vmatmul.mubr.bf16.gmra.mrb[0].mxu0 %v857
        %v1448 = vpop.f32.mrb[0].mxu0
        %v1449 = vadd.f32 %v872, %v1448
        %v1450 = vpop.f32.mrb[0].mxu0
        %v1451 = vadd.f32 %v876, %v1450
        %v1452 = vpop.f32.mrb[0].mxu0
        %v1453 = vadd.f32 %v872, %v1452
        %v1454 = vpop.f32.mrb[0].mxu0
        %v1455 = vadd.f32 %v876, %v1454
        %1456 = vdwg.mxu0
        %1457 = vmatprep.subr.bf16.mxu0 %v1184
        %1458 = vmatpush1.bf16.msra.mxu0 %v1183
        %1459 = vmatprep.subr.bf16.mxu0 %v1190
        %1460 = vmatpush1.bf16.msra.mxu0 %v1189
        %1461 = vmatprep.subr.bf16.mxu0 %v1196
        %1462 = vmatpush1.bf16.msra.mxu0 %v1195
        %1463 = vmatprep.subr.bf16.mxu0 %v1202
        %1464 = vmatpush1.bf16.msra.mxu0 %v1201
        %1465 = vmatprep.subr.bf16.mxu0 %v1208
        %1466 = vmatpush1.bf16.msra.mxu0 %v1207
        %1467 = vmatprep.subr.bf16.mxu0 %v1214
        %1468 = vmatpush1.bf16.msra.mxu0 %v1213
        %1469 = vmatprep.subr.bf16.mxu0 %v1220
        %1470 = vmatpush1.bf16.msra.mxu0 %v1219
        %1471 = vmatprep.subr.bf16.mxu0 %v1226
        %1472 = vmatpush1.bf16.msra.mxu0 %v1225
        %1473 = vmatprep.subr.bf16.mxu0 %v1232
        %1474 = vmatpush1.bf16.msra.mxu0 %v1231
        %1475 = vmatprep.subr.bf16.mxu0 %v1238
        %1476 = vmatpush1.bf16.msra.mxu0 %v1237
        %1477 = vmatprep.subr.bf16.mxu0 %v1244
        %1478 = vmatpush1.bf16.msra.mxu0 %v1243
        %1479 = vmatprep.subr.bf16.mxu0 %v1250
        %1480 = vmatpush1.bf16.msra.mxu0 %v1249
        %1481 = vmatprep.subr.bf16.mxu0 %v1256
        %1482 = vmatpush1.bf16.msra.mxu0 %v1255
        %1483 = vmatprep.subr.bf16.mxu0 %v1262
        %1484 = vmatpush1.bf16.msra.mxu0 %v1261
        %1485 = vmatprep.subr.bf16.mxu0 %v1268
        %1486 = vmatpush1.bf16.msra.mxu0 %v1267
        %1487 = vmatprep.subr.bf16.mxu0 %v1274
        %1488 = vmatpush1.bf16.msra.mxu0 %v1273
        %1489 = vmatprep.mubr.bf16.mxu0 %v858
        %1490 = vmatmul.mubr.bf16.gmra.mrb[0].mxu0 %v857
        %v1491 = vpop.f32.mrb[0].mxu0
        %v1492 = vadd.f32 %v880, %v1491
        %v1493 = vpop.f32.mrb[0].mxu0
        %v1494 = vadd.f32 %v884, %v1493
        %v1495 = vpop.f32.mrb[0].mxu0
        %v1496 = vadd.f32 %v880, %v1495
        %v1497 = vpop.f32.mrb[0].mxu0
        %v1498 = vadd.f32 %v884, %v1497
        %1499 = vdwg.mxu0
        %v1500 = vlaneseq
        %v1501 = vand.u32 %v1500, 127
        %vm1502 = vcmp.lt.s32.totalorder %v1501, 5
        %v1503 = vsel %vm1502, 0.0, -1e+30
        %v1504 = vpack.c.bf16 %v1406, %v1406
        %v1505 = vpack.c.bf16 %v1410, %v1410
        %v1506 = vpack.c.bf16 %v1449, %v1449
        %v1507 = vpack.c.bf16 %v1453, %v1453
        %1508 = vmatprep.subr.bf16.mxu0 0
        %1509 = vmatpush1.bf16.xpose.msra.mxu0 %v1506
        %1510 = vmatprep.subr.bf16.mxu0 0
        %1511 = vmatpush1.bf16.xpose.msra.mxu0 0
        %1512 = vmatprep.subr.bf16.mxu0 0
        %1513 = vmatpush1.bf16.xpose.msra.mxu0 0
        %1514 = vmatprep.subr.bf16.mxu0 0
        %1515 = vmatpush1.bf16.xpose.msra.mxu0 0
        %1516 = vmatprep.subr.bf16.mxu0 0
        %1517 = vmatpush1.bf16.xpose.msra.mxu0 0
        %1518 = vmatprep.subr.bf16.mxu0 0
        %1519 = vmatpush1.bf16.xpose.msra.mxu0 0
        %1520 = vmatprep.subr.bf16.mxu0 0
        %1521 = vmatpush1.bf16.xpose.msra.mxu0 0
        %1522 = vmatprep.subr.bf16.mxu0 0
        %1523 = vmatpush1.bf16.xpose.msra.mxu0 0
        %1524 = vmatprep.subr.bf16.mxu0 0
        %1525 = vmatpush1.bf16.xpose.msra.mxu0 0
        %1526 = vmatprep.subr.bf16.mxu0 0
        %1527 = vmatpush1.bf16.xpose.msra.mxu0 0
        %1528 = vmatprep.subr.bf16.mxu0 0
        %1529 = vmatpush1.bf16.xpose.msra.mxu0 0
        %1530 = vmatprep.subr.bf16.mxu0 0
        %1531 = vmatpush1.bf16.xpose.msra.mxu0 0
        %1532 = vmatprep.subr.bf16.mxu0 0
        %1533 = vmatpush1.bf16.xpose.msra.mxu0 0
        %1534 = vmatprep.subr.bf16.mxu0 0
        %1535 = vmatpush1.bf16.xpose.msra.mxu0 0
        %1536 = vmatprep.subr.bf16.mxu0 0
        %1537 = vmatpush1.bf16.xpose.msra.mxu0 0
        %1538 = vmatprep.subr.bf16.mxu0 0
        %1539 = vmatpush1.bf16.xpose.msra.mxu0 0
        %1540 = vmatprep.mubr.bf16.mxu0 0
        %1541 = vmatmul.mubr.bf16.gmra.mrb[0].mxu0 %v1504
        %v1542 = vpop.f32.mrb[0].mxu0
        %v1543 = vadd.f32 0.0, %v1542
        %v1544 = vpop.f32.mrb[0].mxu0
        %v1545 = vpop.f32.mrb[0].mxu0
        %v1546 = vpop.f32.mrb[0].mxu0
        %1547 = vdwg.mxu0
        %1548 = vmatprep.subr.bf16.mxu0 0
        %1549 = vmatpush1.bf16.xpose.msra.mxu0 %v1507
        %1550 = vmatprep.subr.bf16.mxu0 0
        %1551 = vmatpush1.bf16.xpose.msra.mxu0 0
        %1552 = vmatprep.subr.bf16.mxu0 0
        %1553 = vmatpush1.bf16.xpose.msra.mxu0 0
        %1554 = vmatprep.subr.bf16.mxu0 0
        %1555 = vmatpush1.bf16.xpose.msra.mxu0 0
        %1556 = vmatprep.subr.bf16.mxu0 0
        %1557 = vmatpush1.bf16.xpose.msra.mxu0 0
        %1558 = vmatprep.subr.bf16.mxu0 0
        %1559 = vmatpush1.bf16.xpose.msra.mxu0 0
        %1560 = vmatprep.subr.bf16.mxu0 0
        %1561 = vmatpush1.bf16.xpose.msra.mxu0 0
        %1562 = vmatprep.subr.bf16.mxu0 0
        %1563 = vmatpush1.bf16.xpose.msra.mxu0 0
        %1564 = vmatprep.subr.bf16.mxu0 0
        %1565 = vmatpush1.bf16.xpose.msra.mxu0 0
        %1566 = vmatprep.subr.bf16.mxu0 0
        %1567 = vmatpush1.bf16.xpose.msra.mxu0 0
        %1568 = vmatprep.subr.bf16.mxu0 0
        %1569 = vmatpush1.bf16.xpose.msra.mxu0 0
        %1570 = vmatprep.subr.bf16.mxu0 0
        %1571 = vmatpush1.bf16.xpose.msra.mxu0 0
        %1572 = vmatprep.subr.bf16.mxu0 0
        %1573 = vmatpush1.bf16.xpose.msra.mxu0 0
        %1574 = vmatprep.subr.bf16.mxu0 0
        %1575 = vmatpush1.bf16.xpose.msra.mxu0 0
        %1576 = vmatprep.subr.bf16.mxu0 0
        %1577 = vmatpush1.bf16.xpose.msra.mxu0 0
        %1578 = vmatprep.subr.bf16.mxu0 0
        %1579 = vmatpush1.bf16.xpose.msra.mxu0 0
        %1580 = vmatprep.mubr.bf16.mxu0 0
        %1581 = vmatmul.mubr.bf16.gmra.mrb[0].mxu0 %v1505
        %v1582 = vpop.f32.mrb[0].mxu0
        %v1583 = vadd.f32 0.0, %v1582
        %v1584 = vpop.f32.mrb[0].mxu0
        %v1585 = vpop.f32.mrb[0].mxu0
        %v1586 = vpop.f32.mrb[0].mxu0
        %1587 = vdwg.mxu0
        %v1588 = vmul.f32 %v1543, 0.088388346
        %v1589 = vmul.f32 %v1583, 0.088388346
        %v1590 = vadd.f32 %v1588, %v1503
        %v1591 = vadd.f32 %v1589, %v1503
        %vm1592 = vcmask 64512
        %v1593 = vsel %vm1592, %v1590, -inf
        %1594 = vmax.xlane.f32.xlu0 %v1593
        %v1595 = vpop.xlane.xlu0 %1594
        %v1596 = vsel %vm1592, %v1591, -inf
        %1597 = vmax.xlane.f32.xlu0 %v1596
        %v1598 = vpop.xlane.xlu0 %1597
        %v1599 = vsub.f32 %v1590, %v1595
        %v1600 = vsub.f32 %v1591, %v1598
        %v1601 = vmul.f32 %v1599, 1.442695
        %v1602 = vpow.pop %v1601
        %v1603 = vmul.f32 %v1600, 1.442695
        %v1604 = vpow.pop %v1603
        %v1605 = vsel %vm1592, %v1602, 0.0
        %1606 = vadd.xlane.f32.xlu0 %v1605
        %v1607 = vpop.xlane.xlu0 %1606
        %v1608 = vsel %vm1592, %v1604, 0.0
        %1609 = vadd.xlane.f32.xlu0 %v1608
        %v1610 = vpop.xlane.xlu0 %1609
        %v1611 = vrcp.pop %v1607
        %v1612 = vrcp.pop %v1610
        %v1613 = vmul.f32 %v1602, %v1611
        %v1614 = vmul.f32 %v1604, %v1612
        %v1615 = vpack.c.bf16 %v1613, %v1613
        %v1616 = vpack.c.bf16 %v1614, %v1614
        %v1617 = vpack.c.bf16 %v1492, %v1492
        %v1618 = vpack.c.bf16 %v1496, %v1496
        %v1620 = vsel %vm1592, %v1615, 0
        %vm1622 = vcmask 1043456
        %v1624 = vsel %vm1622, %v1617, 0
        %1626 = vmatprep.subr.bf16.mxu0 0
        %1627 = vmatpush1.bf16.msra.mxu0 %v1624
        %1628 = vmatprep.subr.bf16.mxu0 0
        %1629 = vmatpush1.bf16.msra.mxu0 0
        %1630 = vmatprep.subr.bf16.mxu0 0
        %1631 = vmatpush1.bf16.msra.mxu0 0
        %1632 = vmatprep.subr.bf16.mxu0 0
        %1633 = vmatpush1.bf16.msra.mxu0 0
        %1634 = vmatprep.subr.bf16.mxu0 0
        %1635 = vmatpush1.bf16.msra.mxu0 0
        %1636 = vmatprep.subr.bf16.mxu0 0
        %1637 = vmatpush1.bf16.msra.mxu0 0
        %1638 = vmatprep.subr.bf16.mxu0 0
        %1639 = vmatpush1.bf16.msra.mxu0 0
        %1640 = vmatprep.subr.bf16.mxu0 0
        %1641 = vmatpush1.bf16.msra.mxu0 0
        %1642 = vmatprep.subr.bf16.mxu0 0
        %1643 = vmatpush1.bf16.msra.mxu0 0
        %1644 = vmatprep.subr.bf16.mxu0 0
        %1645 = vmatpush1.bf16.msra.mxu0 0
        %1646 = vmatprep.subr.bf16.mxu0 0
        %1647 = vmatpush1.bf16.msra.mxu0 0
        %1648 = vmatprep.subr.bf16.mxu0 0
        %1649 = vmatpush1.bf16.msra.mxu0 0
        %1650 = vmatprep.subr.bf16.mxu0 0
        %1651 = vmatpush1.bf16.msra.mxu0 0
        %1652 = vmatprep.subr.bf16.mxu0 0
        %1653 = vmatpush1.bf16.msra.mxu0 0
        %1654 = vmatprep.subr.bf16.mxu0 0
        %1655 = vmatpush1.bf16.msra.mxu0 0
        %1656 = vmatprep.subr.bf16.mxu0 0
        %1657 = vmatpush1.bf16.msra.mxu0 0
        %1658 = vmatprep.mubr.bf16.mxu0 0
        %1659 = vmatmul.mubr.bf16.gmra.mrb[0].mxu0 %v1620
        %v1660 = vpop.f32.mrb[0].mxu0
        %v1661 = vadd.f32 0.0, %v1660
        %v1662 = vpop.f32.mrb[0].mxu0
        %v1663 = vpop.f32.mrb[0].mxu0
        %v1664 = vpop.f32.mrb[0].mxu0
        %1665 = vdwg.mxu0
        %v1667 = vsel %vm1592, %v1616, 0
        %v1670 = vsel %vm1622, %v1618, 0
        %1672 = vmatprep.subr.bf16.mxu0 0
        %1673 = vmatpush1.bf16.msra.mxu0 %v1670
        %1674 = vmatprep.subr.bf16.mxu0 0
        %1675 = vmatpush1.bf16.msra.mxu0 0
        %1676 = vmatprep.subr.bf16.mxu0 0
        %1677 = vmatpush1.bf16.msra.mxu0 0
        %1678 = vmatprep.subr.bf16.mxu0 0
        %1679 = vmatpush1.bf16.msra.mxu0 0
        %1680 = vmatprep.subr.bf16.mxu0 0
        %1681 = vmatpush1.bf16.msra.mxu0 0
        %1682 = vmatprep.subr.bf16.mxu0 0
        %1683 = vmatpush1.bf16.msra.mxu0 0
        %1684 = vmatprep.subr.bf16.mxu0 0
        %1685 = vmatpush1.bf16.msra.mxu0 0
        %1686 = vmatprep.subr.bf16.mxu0 0
        %1687 = vmatpush1.bf16.msra.mxu0 0
        %1688 = vmatprep.subr.bf16.mxu0 0
        %1689 = vmatpush1.bf16.msra.mxu0 0
        %1690 = vmatprep.subr.bf16.mxu0 0
        %1691 = vmatpush1.bf16.msra.mxu0 0
        %1692 = vmatprep.subr.bf16.mxu0 0
        %1693 = vmatpush1.bf16.msra.mxu0 0
        %1694 = vmatprep.subr.bf16.mxu0 0
        %1695 = vmatpush1.bf16.msra.mxu0 0
        %1696 = vmatprep.subr.bf16.mxu0 0
        %1697 = vmatpush1.bf16.msra.mxu0 0
        %1698 = vmatprep.subr.bf16.mxu0 0
        %1699 = vmatpush1.bf16.msra.mxu0 0
        %1700 = vmatprep.subr.bf16.mxu0 0
        %1701 = vmatpush1.bf16.msra.mxu0 0
        %1702 = vmatprep.subr.bf16.mxu0 0
        %1703 = vmatpush1.bf16.msra.mxu0 0
        %1704 = vmatprep.mubr.bf16.mxu0 0
        %1705 = vmatmul.mubr.bf16.gmra.mrb[0].mxu0 %v1667
        %v1706 = vpop.f32.mrb[0].mxu0
        %v1707 = vadd.f32 0.0, %v1706
        %v1708 = vpop.f32.mrb[0].mxu0
        %v1709 = vpop.f32.mrb[0].mxu0
        %v1710 = vpop.f32.mrb[0].mxu0
        %1711 = vdwg.mxu0
        %v1712 = vpack.c.bf16 %v1408, %v1408
        %v1713 = vpack.c.bf16 %v1412, %v1412
        %v1714 = vpack.c.bf16 %v1451, %v1451
        %v1715 = vpack.c.bf16 %v1455, %v1455
        %1716 = vmatprep.subr.bf16.mxu0 0
        %1717 = vmatpush1.bf16.xpose.msra.mxu0 %v1714
        %1718 = vmatprep.subr.bf16.mxu0 0
        %1719 = vmatpush1.bf16.xpose.msra.mxu0 0
        %1720 = vmatprep.subr.bf16.mxu0 0
        %1721 = vmatpush1.bf16.xpose.msra.mxu0 0
        %1722 = vmatprep.subr.bf16.mxu0 0
        %1723 = vmatpush1.bf16.xpose.msra.mxu0 0
        %1724 = vmatprep.subr.bf16.mxu0 0
        %1725 = vmatpush1.bf16.xpose.msra.mxu0 0
        %1726 = vmatprep.subr.bf16.mxu0 0
        %1727 = vmatpush1.bf16.xpose.msra.mxu0 0
        %1728 = vmatprep.subr.bf16.mxu0 0
        %1729 = vmatpush1.bf16.xpose.msra.mxu0 0
        %1730 = vmatprep.subr.bf16.mxu0 0
        %1731 = vmatpush1.bf16.xpose.msra.mxu0 0
        %1732 = vmatprep.subr.bf16.mxu0 0
        %1733 = vmatpush1.bf16.xpose.msra.mxu0 0
        %1734 = vmatprep.subr.bf16.mxu0 0
        %1735 = vmatpush1.bf16.xpose.msra.mxu0 0
        %1736 = vmatprep.subr.bf16.mxu0 0
        %1737 = vmatpush1.bf16.xpose.msra.mxu0 0
        %1738 = vmatprep.subr.bf16.mxu0 0
        %1739 = vmatpush1.bf16.xpose.msra.mxu0 0
        %1740 = vmatprep.subr.bf16.mxu0 0
        %1741 = vmatpush1.bf16.xpose.msra.mxu0 0
        %1742 = vmatprep.subr.bf16.mxu0 0
        %1743 = vmatpush1.bf16.xpose.msra.mxu0 0
        %1744 = vmatprep.subr.bf16.mxu0 0
        %1745 = vmatpush1.bf16.xpose.msra.mxu0 0
        %1746 = vmatprep.subr.bf16.mxu0 0
        %1747 = vmatpush1.bf16.xpose.msra.mxu0 0
        %1748 = vmatprep.mubr.bf16.mxu0 0
        %1749 = vmatmul.mubr.bf16.gmra.mrb[0].mxu0 %v1712
        %v1750 = vpop.f32.mrb[0].mxu0
        %v1751 = vadd.f32 0.0, %v1750
        %v1752 = vpop.f32.mrb[0].mxu0
        %v1753 = vpop.f32.mrb[0].mxu0
        %v1754 = vpop.f32.mrb[0].mxu0
        %1755 = vdwg.mxu0
        %1756 = vmatprep.subr.bf16.mxu0 0
        %1757 = vmatpush1.bf16.xpose.msra.mxu0 %v1715
        %1758 = vmatprep.subr.bf16.mxu0 0
        %1759 = vmatpush1.bf16.xpose.msra.mxu0 0
        %1760 = vmatprep.subr.bf16.mxu0 0
        %1761 = vmatpush1.bf16.xpose.msra.mxu0 0
        %1762 = vmatprep.subr.bf16.mxu0 0
        %1763 = vmatpush1.bf16.xpose.msra.mxu0 0
        %1764 = vmatprep.subr.bf16.mxu0 0
        %1765 = vmatpush1.bf16.xpose.msra.mxu0 0
        %1766 = vmatprep.subr.bf16.mxu0 0
        %1767 = vmatpush1.bf16.xpose.msra.mxu0 0
        %1768 = vmatprep.subr.bf16.mxu0 0
        %1769 = vmatpush1.bf16.xpose.msra.mxu0 0
        %1770 = vmatprep.subr.bf16.mxu0 0
        %1771 = vmatpush1.bf16.xpose.msra.mxu0 0
        %1772 = vmatprep.subr.bf16.mxu0 0
        %1773 = vmatpush1.bf16.xpose.msra.mxu0 0
        %1774 = vmatprep.subr.bf16.mxu0 0
        %1775 = vmatpush1.bf16.xpose.msra.mxu0 0
        %1776 = vmatprep.subr.bf16.mxu0 0
        %1777 = vmatpush1.bf16.xpose.msra.mxu0 0
        %1778 = vmatprep.subr.bf16.mxu0 0
        %1779 = vmatpush1.bf16.xpose.msra.mxu0 0
        %1780 = vmatprep.subr.bf16.mxu0 0
        %1781 = vmatpush1.bf16.xpose.msra.mxu0 0
        %1782 = vmatprep.subr.bf16.mxu0 0
        %1783 = vmatpush1.bf16.xpose.msra.mxu0 0
        %1784 = vmatprep.subr.bf16.mxu0 0
        %1785 = vmatpush1.bf16.xpose.msra.mxu0 0
        %1786 = vmatprep.subr.bf16.mxu0 0
        %1787 = vmatpush1.bf16.xpose.msra.mxu0 0
        %1788 = vmatprep.mubr.bf16.mxu0 0
        %1789 = vmatmul.mubr.bf16.gmra.mrb[0].mxu0 %v1713
        %v1790 = vpop.f32.mrb[0].mxu0
        %v1791 = vadd.f32 0.0, %v1790
        %v1792 = vpop.f32.mrb[0].mxu0
        %v1793 = vpop.f32.mrb[0].mxu0
        %v1794 = vpop.f32.mrb[0].mxu0
        %1795 = vdwg.mxu0
        %v1796 = vmul.f32 %v1751, 0.088388346
        %v1797 = vmul.f32 %v1791, 0.088388346
        %v1798 = vadd.f32 %v1796, %v1503
        %v1799 = vadd.f32 %v1797, %v1503
        %v1800 = vsel %vm1592, %v1798, -inf
        %1801 = vmax.xlane.f32.xlu0 %v1800
        %v1802 = vpop.xlane.xlu0 %1801
        %v1803 = vsel %vm1592, %v1799, -inf
        %1804 = vmax.xlane.f32.xlu0 %v1803
        %v1805 = vpop.xlane.xlu0 %1804
        %v1806 = vsub.f32 %v1798, %v1802
        %v1807 = vsub.f32 %v1799, %v1805
        %v1808 = vmul.f32 %v1806, 1.442695
        %v1809 = vpow.pop %v1808
        %v1810 = vmul.f32 %v1807, 1.442695
        %v1811 = vpow.pop %v1810
        %v1812 = vsel %vm1592, %v1809, 0.0
        %1813 = vadd.xlane.f32.xlu0 %v1812
        %v1814 = vpop.xlane.xlu0 %1813
        %v1815 = vsel %vm1592, %v1811, 0.0
        %1816 = vadd.xlane.f32.xlu0 %v1815
        %v1817 = vpop.xlane.xlu0 %1816
        %v1818 = vrcp.pop %v1814
        %v1819 = vrcp.pop %v1817
        %v1820 = vmul.f32 %v1809, %v1818
        %v1821 = vmul.f32 %v1811, %v1819
        %v1822 = vpack.c.bf16 %v1820, %v1820
        %v1823 = vpack.c.bf16 %v1821, %v1821
        %v1824 = vpack.c.bf16 %v1494, %v1494
        %v1825 = vpack.c.bf16 %v1498, %v1498
        %v1827 = vsel %vm1592, %v1822, 0
        %v1830 = vsel %vm1622, %v1824, 0
        %1832 = vmatprep.subr.bf16.mxu0 0
        %1833 = vmatpush1.bf16.msra.mxu0 %v1830
        %1834 = vmatprep.subr.bf16.mxu0 0
        %1835 = vmatpush1.bf16.msra.mxu0 0
        %1836 = vmatprep.subr.bf16.mxu0 0
        %1837 = vmatpush1.bf16.msra.mxu0 0
        %1838 = vmatprep.subr.bf16.mxu0 0
        %1839 = vmatpush1.bf16.msra.mxu0 0
        %1840 = vmatprep.subr.bf16.mxu0 0
        %1841 = vmatpush1.bf16.msra.mxu0 0
        %1842 = vmatprep.subr.bf16.mxu0 0
        %1843 = vmatpush1.bf16.msra.mxu0 0
        %1844 = vmatprep.subr.bf16.mxu0 0
        %1845 = vmatpush1.bf16.msra.mxu0 0
        %1846 = vmatprep.subr.bf16.mxu0 0
        %1847 = vmatpush1.bf16.msra.mxu0 0
        %1848 = vmatprep.subr.bf16.mxu0 0
        %1849 = vmatpush1.bf16.msra.mxu0 0
        %1850 = vmatprep.subr.bf16.mxu0 0
        %1851 = vmatpush1.bf16.msra.mxu0 0
        %1852 = vmatprep.subr.bf16.mxu0 0
        %1853 = vmatpush1.bf16.msra.mxu0 0
        %1854 = vmatprep.subr.bf16.mxu0 0
        %1855 = vmatpush1.bf16.msra.mxu0 0
        %1856 = vmatprep.subr.bf16.mxu0 0
        %1857 = vmatpush1.bf16.msra.mxu0 0
        %1858 = vmatprep.subr.bf16.mxu0 0
        %1859 = vmatpush1.bf16.msra.mxu0 0
        %1860 = vmatprep.subr.bf16.mxu0 0
        %1861 = vmatpush1.bf16.msra.mxu0 0
        %1862 = vmatprep.subr.bf16.mxu0 0
        %1863 = vmatpush1.bf16.msra.mxu0 0
        %1864 = vmatprep.mubr.bf16.mxu0 0
        %1865 = vmatmul.mubr.bf16.gmra.mrb[0].mxu0 %v1827
        %v1866 = vpop.f32.mrb[0].mxu0
        %v1867 = vadd.f32 0.0, %v1866
        %v1868 = vpop.f32.mrb[0].mxu0
        %v1869 = vpop.f32.mrb[0].mxu0
        %v1870 = vpop.f32.mrb[0].mxu0
        %1871 = vdwg.mxu0
        %v1873 = vsel %vm1592, %v1823, 0
        %v1876 = vsel %vm1622, %v1825, 0
        %1878 = vmatprep.subr.bf16.mxu0 0
        %1879 = vmatpush1.bf16.msra.mxu0 %v1876
        %1880 = vmatprep.subr.bf16.mxu0 0
        %1881 = vmatpush1.bf16.msra.mxu0 0
        %1882 = vmatprep.subr.bf16.mxu0 0
        %1883 = vmatpush1.bf16.msra.mxu0 0
        %1884 = vmatprep.subr.bf16.mxu0 0
        %1885 = vmatpush1.bf16.msra.mxu0 0
        %1886 = vmatprep.subr.bf16.mxu0 0
        %1887 = vmatpush1.bf16.msra.mxu0 0
        %1888 = vmatprep.subr.bf16.mxu0 0
        %1889 = vmatpush1.bf16.msra.mxu0 0
        %1890 = vmatprep.subr.bf16.mxu0 0
        %1891 = vmatpush1.bf16.msra.mxu0 0
        %1892 = vmatprep.subr.bf16.mxu0 0
        %1893 = vmatpush1.bf16.msra.mxu0 0
        %1894 = vmatprep.subr.bf16.mxu0 0
        %1895 = vmatpush1.bf16.msra.mxu0 0
        %1896 = vmatprep.subr.bf16.mxu0 0
        %1897 = vmatpush1.bf16.msra.mxu0 0
        %1898 = vmatprep.subr.bf16.mxu0 0
        %1899 = vmatpush1.bf16.msra.mxu0 0
        %1900 = vmatprep.subr.bf16.mxu0 0
        %1901 = vmatpush1.bf16.msra.mxu0 0
        %1902 = vmatprep.subr.bf16.mxu0 0
        %1903 = vmatpush1.bf16.msra.mxu0 0
        %1904 = vmatprep.subr.bf16.mxu0 0
        %1905 = vmatpush1.bf16.msra.mxu0 0
        %1906 = vmatprep.subr.bf16.mxu0 0
        %1907 = vmatpush1.bf16.msra.mxu0 0
        %1908 = vmatprep.subr.bf16.mxu0 0
        %1909 = vmatpush1.bf16.msra.mxu0 0
        %1910 = vmatprep.mubr.bf16.mxu0 0
        %1911 = vmatmul.mubr.bf16.gmra.mrb[0].mxu0 %v1873
        %v1912 = vpop.f32.mrb[0].mxu0
        %v1913 = vadd.f32 0.0, %v1912
        %v1914 = vpop.f32.mrb[0].mxu0
        %v1915 = vpop.f32.mrb[0].mxu0
        %v1916 = vpop.f32.mrb[0].mxu0
        %1917 = vdwg.mxu0
        %v1918 = vld [vmem:[%s539] sm:$0xff]
        %v1919 = vld [vmem:[%s539 + $0x8] sm:$0xff]
        %v1920 = vld [vmem:[%s539 + $0x10] sm:$0xff]
        %v1921 = vld [vmem:[%s539 + $0x18] sm:$0xff]
        %v1922 = vld [vmem:[%s539 + $0x20] sm:$0xff]
        %v1923 = vld [vmem:[%s539 + $0x28] sm:$0xff]
        %v1924 = vld [vmem:[%s539 + $0x30] sm:$0xff]
        %v1925 = vld [vmem:[%s539 + $0x38] sm:$0xff]
        %v1926 = vld [vmem:[%s539 + $0x40] sm:$0xff]
        %v1927 = vld [vmem:[%s539 + $0x48] sm:$0xff]
        %v1928 = vld [vmem:[%s539 + $0x50] sm:$0xff]
        %v1929 = vld [vmem:[%s539 + $0x58] sm:$0xff]
        %v1930 = vld [vmem:[%s539 + $0x60] sm:$0xff]
        %v1931 = vld [vmem:[%s539 + $0x68] sm:$0xff]
        %v1932 = vld [vmem:[%s539 + $0x70] sm:$0xff]
        %v1933 = vld [vmem:[%s539 + $0x78] sm:$0xff]
        %v1934 = vld [vmem:[%s539 + $0x80] sm:$0xff]
        %v1935 = vld [vmem:[%s539 + $0x88] sm:$0xff]
        %v1936 = vld [vmem:[%s539 + $0x90] sm:$0xff]
        %v1937 = vld [vmem:[%s539 + $0x98] sm:$0xff]
        %v1938 = vld [vmem:[%s539 + $0xa0] sm:$0xff]
        %v1939 = vld [vmem:[%s539 + $0xa8] sm:$0xff]
        %v1940 = vld [vmem:[%s539 + $0xb0] sm:$0xff]
        %v1941 = vld [vmem:[%s539 + $0xb8] sm:$0xff]
        %v1942 = vld [vmem:[%s539 + $0xc0] sm:$0xff]
        %v1943 = vld [vmem:[%s539 + $0xc8] sm:$0xff]
        %v1944 = vld [vmem:[%s539 + $0xd0] sm:$0xff]
        %v1945 = vld [vmem:[%s539 + $0xd8] sm:$0xff]
        %v1946 = vld [vmem:[%s539 + $0xe0] sm:$0xff]
        %v1947 = vld [vmem:[%s539 + $0xe8] sm:$0xff]
        %v1948 = vld [vmem:[%s539 + $0xf0] sm:$0xff]
        %v1949 = vld [vmem:[%s539 + $0xf8] sm:$0xff]
        %v1950 = vpack.c.bf16 %v1707, %v1661
        %v1951 = vpack.c.bf16 %v1913, %v1867
        %v1984 = vunpack.c.l.b16 %v1918
        %v1985 = vunpack.c.h.b16 %v1918
        %v1986 = vunpack.c.l.b16 %v1919
        %v1987 = vunpack.c.h.b16 %v1919
        %v1988 = vunpack.c.l.b16 %v1920
        %v1989 = vunpack.c.h.b16 %v1920
        %v1990 = vunpack.c.l.b16 %v1921
        %v1991 = vunpack.c.h.b16 %v1921
        %v1992 = vunpack.c.l.b16 %v1922
        %v1993 = vunpack.c.h.b16 %v1922
        %v1994 = vunpack.c.l.b16 %v1923
        %v1995 = vunpack.c.h.b16 %v1923
        %v1996 = vunpack.c.l.b16 %v1924
        %v1997 = vunpack.c.h.b16 %v1924
        %v1998 = vunpack.c.l.b16 %v1925
        %v1999 = vunpack.c.h.b16 %v1925
        %v2000 = vunpack.c.l.b16 %v1926
        %v2001 = vunpack.c.h.b16 %v1926
        %v2002 = vunpack.c.l.b16 %v1927
        %v2003 = vunpack.c.h.b16 %v1927
        %v2004 = vunpack.c.l.b16 %v1928
        %v2005 = vunpack.c.h.b16 %v1928
        %v2006 = vunpack.c.l.b16 %v1929
        %v2007 = vunpack.c.h.b16 %v1929
        %v2008 = vunpack.c.l.b16 %v1930
        %v2009 = vunpack.c.h.b16 %v1930
        %v2010 = vunpack.c.l.b16 %v1931
        %v2011 = vunpack.c.h.b16 %v1931
        %v2012 = vunpack.c.l.b16 %v1932
        %v2013 = vunpack.c.h.b16 %v1932
        %v2014 = vunpack.c.l.b16 %v1933
        %v2015 = vunpack.c.h.b16 %v1933
        %v2016 = vunpack.c.l.b16 %v1934
        %v2017 = vunpack.c.h.b16 %v1934
        %v2018 = vunpack.c.l.b16 %v1935
        %v2019 = vunpack.c.h.b16 %v1935
        %v2020 = vunpack.c.l.b16 %v1936
        %v2021 = vunpack.c.h.b16 %v1936
        %v2022 = vunpack.c.l.b16 %v1937
        %v2023 = vunpack.c.h.b16 %v1937
        %v2024 = vunpack.c.l.b16 %v1938
        %v2025 = vunpack.c.h.b16 %v1938
        %v2026 = vunpack.c.l.b16 %v1939
        %v2027 = vunpack.c.h.b16 %v1939
        %v2028 = vunpack.c.l.b16 %v1940
        %v2029 = vunpack.c.h.b16 %v1940
        %v2030 = vunpack.c.l.b16 %v1941
        %v2031 = vunpack.c.h.b16 %v1941
        %v2032 = vunpack.c.l.b16 %v1942
        %v2033 = vunpack.c.h.b16 %v1942
        %v2034 = vunpack.c.l.b16 %v1943
        %v2035 = vunpack.c.h.b16 %v1943
        %v2036 = vunpack.c.l.b16 %v1944
        %v2037 = vunpack.c.h.b16 %v1944
        %v2038 = vunpack.c.l.b16 %v1945
        %v2039 = vunpack.c.h.b16 %v1945
        %v2040 = vunpack.c.l.b16 %v1946
        %v2041 = vunpack.c.h.b16 %v1946
        %v2042 = vunpack.c.l.b16 %v1947
        %v2043 = vunpack.c.h.b16 %v1947
        %v2044 = vunpack.c.l.b16 %v1948
        %v2045 = vunpack.c.h.b16 %v1948
        %v2046 = vunpack.c.l.b16 %v1949
        %v2047 = vunpack.c.h.b16 %v1949
        %v2048 = vpack.c.b16 %v1986, %v1984
        %v2049 = vpack.c.b16 %v1987, %v1985
        %v2050 = vpack.c.b16 %v1990, %v1988
        %v2051 = vpack.c.b16 %v1991, %v1989
        %v2052 = vpack.c.b16 %v1994, %v1992
        %v2053 = vpack.c.b16 %v1995, %v1993
        %v2054 = vpack.c.b16 %v1998, %v1996
        %v2055 = vpack.c.b16 %v1999, %v1997
        %v2056 = vpack.c.b16 %v2002, %v2000
        %v2057 = vpack.c.b16 %v2003, %v2001
        %v2058 = vpack.c.b16 %v2006, %v2004
        %v2059 = vpack.c.b16 %v2007, %v2005
        %v2060 = vpack.c.b16 %v2010, %v2008
        %v2061 = vpack.c.b16 %v2011, %v2009
        %v2062 = vpack.c.b16 %v2014, %v2012
        %v2063 = vpack.c.b16 %v2015, %v2013
        %v2064 = vpack.c.b16 %v2018, %v2016
        %v2065 = vpack.c.b16 %v2019, %v2017
        %v2066 = vpack.c.b16 %v2022, %v2020
        %v2067 = vpack.c.b16 %v2023, %v2021
        %v2068 = vpack.c.b16 %v2026, %v2024
        %v2069 = vpack.c.b16 %v2027, %v2025
        %v2070 = vpack.c.b16 %v2030, %v2028
        %v2071 = vpack.c.b16 %v2031, %v2029
        %v2072 = vpack.c.b16 %v2034, %v2032
        %v2073 = vpack.c.b16 %v2035, %v2033
        %v2074 = vpack.c.b16 %v2038, %v2036
        %v2075 = vpack.c.b16 %v2039, %v2037
        %v2076 = vpack.c.b16 %v2042, %v2040
        %v2077 = vpack.c.b16 %v2043, %v2041
        %v2078 = vpack.c.b16 %v2046, %v2044
        %v2079 = vpack.c.b16 %v2047, %v2045
        %2112 = vmatprep.subr.bf16.mxu0 %v2049
        %2113 = vmatpush1.bf16.msra.mxu0 %v2048
        %2114 = vmatprep.subr.bf16.mxu0 %v2051
        %2115 = vmatpush1.bf16.msra.mxu0 %v2050
        %2116 = vmatprep.subr.bf16.mxu0 %v2053
        %2117 = vmatpush1.bf16.msra.mxu0 %v2052
        %2118 = vmatprep.subr.bf16.mxu0 %v2055
        %2119 = vmatpush1.bf16.msra.mxu0 %v2054
        %2120 = vmatprep.subr.bf16.mxu0 %v2057
        %2121 = vmatpush1.bf16.msra.mxu0 %v2056
        %2122 = vmatprep.subr.bf16.mxu0 %v2059
        %2123 = vmatpush1.bf16.msra.mxu0 %v2058
        %2124 = vmatprep.subr.bf16.mxu0 %v2061
        %2125 = vmatpush1.bf16.msra.mxu0 %v2060
        %2126 = vmatprep.subr.bf16.mxu0 %v2063
        %2127 = vmatpush1.bf16.msra.mxu0 %v2062
        %2128 = vmatprep.subr.bf16.mxu0 %v2065
        %2129 = vmatpush1.bf16.msra.mxu0 %v2064
        %2130 = vmatprep.subr.bf16.mxu0 %v2067
        %2131 = vmatpush1.bf16.msra.mxu0 %v2066
        %2132 = vmatprep.subr.bf16.mxu0 %v2069
        %2133 = vmatpush1.bf16.msra.mxu0 %v2068
        %2134 = vmatprep.subr.bf16.mxu0 %v2071
        %2135 = vmatpush1.bf16.msra.mxu0 %v2070
        %2136 = vmatprep.subr.bf16.mxu0 %v2073
        %2137 = vmatpush1.bf16.msra.mxu0 %v2072
        %2138 = vmatprep.subr.bf16.mxu0 %v2075
        %2139 = vmatpush1.bf16.msra.mxu0 %v2074
        %2140 = vmatprep.subr.bf16.mxu0 %v2077
        %2141 = vmatpush1.bf16.msra.mxu0 %v2076
        %2142 = vmatprep.subr.bf16.mxu0 %v2079
        %2143 = vmatpush1.bf16.msra.mxu0 %v2078
        %2144 = vmatprep.mubr.bf16.mxu0 %v1951
        %2145 = vmatmul.mubr.bf16.gmra.mrb[0].mxu0 %v1950
        %v2146 = vpop.f32.mrb[0].mxu0
        %v2147 = vadd.f32 0.0, %v2146
        %v2148 = vpop.f32.mrb[0].mxu0
        %v2149 = vadd.f32 0.0, %v2148
        %v2150 = vpop.f32.mrb[0].mxu0
        %v2151 = vadd.f32 0.0, %v2150
        %v2152 = vpop.f32.mrb[0].mxu0
        %v2153 = vadd.f32 0.0, %v2152
        %2154 = vdwg.mxu0
        %v2155 = vadd.f32 %v692, %v2147
        %v2156 = vadd.f32 %v693, %v2149
        %v2157 = vadd.f32 %v694, %v2151
        %v2158 = vadd.f32 %v695, %v2153
        %v2159 = vld [vmem:[%s662] sm:$0x3]
        %v2161 = vlaneseq
        %v2162 = vshrl.u32 %v2161, 7
        %v2163 = vsub.s32 0, %v2162
        %v2164 = vrot.slane %v2159, %v2163
        %v2165 = vlaneseq
        %v2166 = vshrl.u32 %v2165, 7
        %v2167 = vsub.s32 1, %v2166
        %v2168 = vrot.slane %v2159, %v2167
        %v2171 = vadd.f32 %v2155, %v2164
        %v2172 = vadd.f32 %v2156, %v2168
        %v2173 = vadd.f32 %v2157, %v2164
        %v2174 = vadd.f32 %v2158, %v2168
        %v2175 = vld [vmem:[%s666] sm:$0x3]
        %v2176 = vld [vmem:[%s670] sm:$0x3]
        %v2177 = vadd.f32 %v2171, %v2172
        %2178 = vadd.xlane.f32.xlu0 %v2177
        %v2179 = vpop.xlane.xlu0 %2178
        %v2180 = vadd.f32 %v2173, %v2174
        %2181 = vadd.xlane.f32.xlu0 %v2180
        %v2182 = vpop.xlane.xlu0 %2181
        %v2183 = vmul.f32 %v2179, %v704
        %v2184 = vmul.f32 %v2182, %v704
        %v2185 = vsub.f32 %v2171, %v2183
        %v2186 = vsub.f32 %v2172, %v2183
        %v2187 = vsub.f32 %v2173, %v2184
        %v2188 = vsub.f32 %v2174, %v2184
        %v2189 = vmul.f32 %v2185, %v2185
        %v2190 = vmul.f32 %v2186, %v2186
        %v2191 = vmul.f32 %v2187, %v2187
        %v2192 = vmul.f32 %v2188, %v2188
        %v2193 = vadd.f32 %v2189, %v2190
        %2194 = vadd.xlane.f32.xlu0 %v2193
        %v2195 = vpop.xlane.xlu0 %2194
        %v2196 = vadd.f32 %v2191, %v2192
        %2197 = vadd.xlane.f32.xlu0 %v2196
        %v2198 = vpop.xlane.xlu0 %2197
        %v2199 = vmul.f32 %v2195, %v704
        %v2200 = vmul.f32 %v2198, %v704
        %v2201 = vadd.f32 %v2199, 1e-12
        %v2202 = vadd.f32 %v2200, 1e-12
        %v2203 = vrsqrt.pop %v2201
        %v2204 = vrsqrt.pop %v2202
        %v2205 = vmul.f32 %v2185, %v2203
        %v2206 = vmul.f32 %v2186, %v2203
        %v2207 = vmul.f32 %v2187, %v2204
        %v2208 = vmul.f32 %v2188, %v2204
        %v2210 = vlaneseq
        %v2211 = vshrl.u32 %v2210, 7
        %v2212 = vsub.s32 0, %v2211
        %v2213 = vrot.slane %v2175, %v2212
        %v2214 = vlaneseq
        %v2215 = vshrl.u32 %v2214, 7
        %v2216 = vsub.s32 1, %v2215
        %v2217 = vrot.slane %v2175, %v2216
        %v2220 = vmul.f32 %v2205, %v2213
        %v2221 = vmul.f32 %v2206, %v2217
        %v2222 = vmul.f32 %v2207, %v2213
        %v2223 = vmul.f32 %v2208, %v2217
        %v2225 = vlaneseq
        %v2226 = vshrl.u32 %v2225, 7
        %v2227 = vsub.s32 0, %v2226
        %v2228 = vrot.slane %v2176, %v2227
        %v2229 = vlaneseq
        %v2230 = vshrl.u32 %v2229, 7
        %v2231 = vsub.s32 1, %v2230
        %v2232 = vrot.slane %v2176, %v2231
        %v2235 = vadd.f32 %v2220, %v2228
        %v2236 = vadd.f32 %v2221, %v2232
        %v2237 = vadd.f32 %v2222, %v2228
        %v2238 = vadd.f32 %v2223, %v2232
        %v2239 = vld [vmem:[%s548] sm:$0xff]
        %v2240 = vld [vmem:[%s548 + $0x8] sm:$0xff]
        %v2241 = vld [vmem:[%s548 + $0x10] sm:$0xff]
        %v2242 = vld [vmem:[%s548 + $0x18] sm:$0xff]
        %v2243 = vld [vmem:[%s548 + $0x20] sm:$0xff]
        %v2244 = vld [vmem:[%s548 + $0x28] sm:$0xff]
        %v2245 = vld [vmem:[%s548 + $0x30] sm:$0xff]
        %v2246 = vld [vmem:[%s548 + $0x38] sm:$0xff]
        %v2247 = vld [vmem:[%s548 + $0x40] sm:$0xff]
        %v2248 = vld [vmem:[%s548 + $0x48] sm:$0xff]
        %v2249 = vld [vmem:[%s548 + $0x50] sm:$0xff]
        %v2250 = vld [vmem:[%s548 + $0x58] sm:$0xff]
        %v2251 = vld [vmem:[%s548 + $0x60] sm:$0xff]
        %v2252 = vld [vmem:[%s548 + $0x68] sm:$0xff]
        %v2253 = vld [vmem:[%s548 + $0x70] sm:$0xff]
        %v2254 = vld [vmem:[%s548 + $0x78] sm:$0xff]
        %v2255 = vld [vmem:[%s548 + $0x80] sm:$0xff]
        %v2256 = vld [vmem:[%s548 + $0x88] sm:$0xff]
        %v2257 = vld [vmem:[%s548 + $0x90] sm:$0xff]
        %v2258 = vld [vmem:[%s548 + $0x98] sm:$0xff]
        %v2259 = vld [vmem:[%s548 + $0xa0] sm:$0xff]
        %v2260 = vld [vmem:[%s548 + $0xa8] sm:$0xff]
        %v2261 = vld [vmem:[%s548 + $0xb0] sm:$0xff]
        %v2262 = vld [vmem:[%s548 + $0xb8] sm:$0xff]
        %v2263 = vld [vmem:[%s548 + $0xc0] sm:$0xff]
        %v2264 = vld [vmem:[%s548 + $0xc8] sm:$0xff]
        %v2265 = vld [vmem:[%s548 + $0xd0] sm:$0xff]
        %v2266 = vld [vmem:[%s548 + $0xd8] sm:$0xff]
        %v2267 = vld [vmem:[%s548 + $0xe0] sm:$0xff]
        %v2268 = vld [vmem:[%s548 + $0xe8] sm:$0xff]
        %v2269 = vld [vmem:[%s548 + $0xf0] sm:$0xff]
        %v2270 = vld [vmem:[%s548 + $0xf8] sm:$0xff]
        %v2271 = vld [vmem:[%s548 + $0x100] sm:$0xff]
        %v2272 = vld [vmem:[%s548 + $0x108] sm:$0xff]
        %v2273 = vld [vmem:[%s548 + $0x110] sm:$0xff]
        %v2274 = vld [vmem:[%s548 + $0x118] sm:$0xff]
        %v2275 = vld [vmem:[%s548 + $0x120] sm:$0xff]
        %v2276 = vld [vmem:[%s548 + $0x128] sm:$0xff]
        %v2277 = vld [vmem:[%s548 + $0x130] sm:$0xff]
        %v2278 = vld [vmem:[%s548 + $0x138] sm:$0xff]
        %v2279 = vld [vmem:[%s548 + $0x140] sm:$0xff]
        %v2280 = vld [vmem:[%s548 + $0x148] sm:$0xff]
        %v2281 = vld [vmem:[%s548 + $0x150] sm:$0xff]
        %v2282 = vld [vmem:[%s548 + $0x158] sm:$0xff]
        %v2283 = vld [vmem:[%s548 + $0x160] sm:$0xff]
        %v2284 = vld [vmem:[%s548 + $0x168] sm:$0xff]
        %v2285 = vld [vmem:[%s548 + $0x170] sm:$0xff]
        %v2286 = vld [vmem:[%s548 + $0x178] sm:$0xff]
        %v2287 = vld [vmem:[%s548 + $0x180] sm:$0xff]
        %v2288 = vld [vmem:[%s548 + $0x188] sm:$0xff]
        %v2289 = vld [vmem:[%s548 + $0x190] sm:$0xff]
        %v2290 = vld [vmem:[%s548 + $0x198] sm:$0xff]
        %v2291 = vld [vmem:[%s548 + $0x1a0] sm:$0xff]
        %v2292 = vld [vmem:[%s548 + $0x1a8] sm:$0xff]
        %v2293 = vld [vmem:[%s548 + $0x1b0] sm:$0xff]
        %v2294 = vld [vmem:[%s548 + $0x1b8] sm:$0xff]
        %v2295 = vld [vmem:[%s548 + $0x1c0] sm:$0xff]
        %v2296 = vld [vmem:[%s548 + $0x1c8] sm:$0xff]
        %v2297 = vld [vmem:[%s548 + $0x1d0] sm:$0xff]
        %v2298 = vld [vmem:[%s548 + $0x1d8] sm:$0xff]
        %v2299 = vld [vmem:[%s548 + $0x1e0] sm:$0xff]
        %v2300 = vld [vmem:[%s548 + $0x1e8] sm:$0xff]
        %v2301 = vld [vmem:[%s548 + $0x1f0] sm:$0xff]
        %v2302 = vld [vmem:[%s548 + $0x1f8] sm:$0xff]
        %v2303 = vpack.c.bf16 %v2237, %v2235
        %v2304 = vpack.c.bf16 %v2238, %v2236
        %v2305 = vld [vmem:[%s674] sm:$0xf]
        %v2307 = vlaneseq
        %v2308 = vshrl.u32 %v2307, 7
        %v2309 = vsub.s32 0, %v2308
        %v2310 = vrot.slane %v2305, %v2309
        %v2311 = vlaneseq
        %v2312 = vshrl.u32 %v2311, 7
        %v2313 = vsub.s32 1, %v2312
        %v2314 = vrot.slane %v2305, %v2313
        %v2315 = vlaneseq
        %v2316 = vshrl.u32 %v2315, 7
        %v2317 = vsub.s32 2, %v2316
        %v2318 = vrot.slane %v2305, %v2317
        %v2319 = vlaneseq
        %v2320 = vshrl.u32 %v2319, 7
        %v2321 = vsub.s32 3, %v2320
        %v2322 = vrot.slane %v2305, %v2321
        %v2391 = vunpack.c.l.b16 %v2239
        %v2392 = vunpack.c.h.b16 %v2239
        %v2393 = vunpack.c.l.b16 %v2240
        %v2394 = vunpack.c.h.b16 %v2240
        %v2395 = vunpack.c.l.b16 %v2241
        %v2396 = vunpack.c.h.b16 %v2241
        %v2397 = vunpack.c.l.b16 %v2242
        %v2398 = vunpack.c.h.b16 %v2242
        %v2399 = vunpack.c.l.b16 %v2243
        %v2400 = vunpack.c.h.b16 %v2243
        %v2401 = vunpack.c.l.b16 %v2244
        %v2402 = vunpack.c.h.b16 %v2244
        %v2403 = vunpack.c.l.b16 %v2245
        %v2404 = vunpack.c.h.b16 %v2245
        %v2405 = vunpack.c.l.b16 %v2246
        %v2406 = vunpack.c.h.b16 %v2246
        %v2407 = vunpack.c.l.b16 %v2247
        %v2408 = vunpack.c.h.b16 %v2247
        %v2409 = vunpack.c.l.b16 %v2248
        %v2410 = vunpack.c.h.b16 %v2248
        %v2411 = vunpack.c.l.b16 %v2249
        %v2412 = vunpack.c.h.b16 %v2249
        %v2413 = vunpack.c.l.b16 %v2250
        %v2414 = vunpack.c.h.b16 %v2250
        %v2415 = vunpack.c.l.b16 %v2251
        %v2416 = vunpack.c.h.b16 %v2251
        %v2417 = vunpack.c.l.b16 %v2252
        %v2418 = vunpack.c.h.b16 %v2252
        %v2419 = vunpack.c.l.b16 %v2253
        %v2420 = vunpack.c.h.b16 %v2253
        %v2421 = vunpack.c.l.b16 %v2254
        %v2422 = vunpack.c.h.b16 %v2254
        %v2423 = vunpack.c.l.b16 %v2255
        %v2424 = vunpack.c.h.b16 %v2255
        %v2425 = vunpack.c.l.b16 %v2256
        %v2426 = vunpack.c.h.b16 %v2256
        %v2427 = vunpack.c.l.b16 %v2257
        %v2428 = vunpack.c.h.b16 %v2257
        %v2429 = vunpack.c.l.b16 %v2258
        %v2430 = vunpack.c.h.b16 %v2258
        %v2431 = vunpack.c.l.b16 %v2259
        %v2432 = vunpack.c.h.b16 %v2259
        %v2433 = vunpack.c.l.b16 %v2260
        %v2434 = vunpack.c.h.b16 %v2260
        %v2435 = vunpack.c.l.b16 %v2261
        %v2436 = vunpack.c.h.b16 %v2261
        %v2437 = vunpack.c.l.b16 %v2262
        %v2438 = vunpack.c.h.b16 %v2262
        %v2439 = vunpack.c.l.b16 %v2263
        %v2440 = vunpack.c.h.b16 %v2263
        %v2441 = vunpack.c.l.b16 %v2264
        %v2442 = vunpack.c.h.b16 %v2264
        %v2443 = vunpack.c.l.b16 %v2265
        %v2444 = vunpack.c.h.b16 %v2265
        %v2445 = vunpack.c.l.b16 %v2266
        %v2446 = vunpack.c.h.b16 %v2266
        %v2447 = vunpack.c.l.b16 %v2267
        %v2448 = vunpack.c.h.b16 %v2267
        %v2449 = vunpack.c.l.b16 %v2268
        %v2450 = vunpack.c.h.b16 %v2268
        %v2451 = vunpack.c.l.b16 %v2269
        %v2452 = vunpack.c.h.b16 %v2269
        %v2453 = vunpack.c.l.b16 %v2270
        %v2454 = vunpack.c.h.b16 %v2270
        %v2455 = vunpack.c.l.b16 %v2271
        %v2456 = vunpack.c.h.b16 %v2271
        %v2457 = vunpack.c.l.b16 %v2272
        %v2458 = vunpack.c.h.b16 %v2272
        %v2459 = vunpack.c.l.b16 %v2273
        %v2460 = vunpack.c.h.b16 %v2273
        %v2461 = vunpack.c.l.b16 %v2274
        %v2462 = vunpack.c.h.b16 %v2274
        %v2463 = vunpack.c.l.b16 %v2275
        %v2464 = vunpack.c.h.b16 %v2275
        %v2465 = vunpack.c.l.b16 %v2276
        %v2466 = vunpack.c.h.b16 %v2276
        %v2467 = vunpack.c.l.b16 %v2277
        %v2468 = vunpack.c.h.b16 %v2277
        %v2469 = vunpack.c.l.b16 %v2278
        %v2470 = vunpack.c.h.b16 %v2278
        %v2471 = vunpack.c.l.b16 %v2279
        %v2472 = vunpack.c.h.b16 %v2279
        %v2473 = vunpack.c.l.b16 %v2280
        %v2474 = vunpack.c.h.b16 %v2280
        %v2475 = vunpack.c.l.b16 %v2281
        %v2476 = vunpack.c.h.b16 %v2281
        %v2477 = vunpack.c.l.b16 %v2282
        %v2478 = vunpack.c.h.b16 %v2282
        %v2479 = vunpack.c.l.b16 %v2283
        %v2480 = vunpack.c.h.b16 %v2283
        %v2481 = vunpack.c.l.b16 %v2284
        %v2482 = vunpack.c.h.b16 %v2284
        %v2483 = vunpack.c.l.b16 %v2285
        %v2484 = vunpack.c.h.b16 %v2285
        %v2485 = vunpack.c.l.b16 %v2286
        %v2486 = vunpack.c.h.b16 %v2286
        %v2487 = vunpack.c.l.b16 %v2287
        %v2488 = vunpack.c.h.b16 %v2287
        %v2489 = vunpack.c.l.b16 %v2288
        %v2490 = vunpack.c.h.b16 %v2288
        %v2491 = vunpack.c.l.b16 %v2289
        %v2492 = vunpack.c.h.b16 %v2289
        %v2493 = vunpack.c.l.b16 %v2290
        %v2494 = vunpack.c.h.b16 %v2290
        %v2495 = vunpack.c.l.b16 %v2291
        %v2496 = vunpack.c.h.b16 %v2291
        %v2497 = vunpack.c.l.b16 %v2292
        %v2498 = vunpack.c.h.b16 %v2292
        %v2499 = vunpack.c.l.b16 %v2293
        %v2500 = vunpack.c.h.b16 %v2293
        %v2501 = vunpack.c.l.b16 %v2294
        %v2502 = vunpack.c.h.b16 %v2294
        %v2503 = vunpack.c.l.b16 %v2295
        %v2504 = vunpack.c.h.b16 %v2295
        %v2505 = vunpack.c.l.b16 %v2296
        %v2506 = vunpack.c.h.b16 %v2296
        %v2507 = vunpack.c.l.b16 %v2297
        %v2508 = vunpack.c.h.b16 %v2297
        %v2509 = vunpack.c.l.b16 %v2298
        %v2510 = vunpack.c.h.b16 %v2298
        %v2511 = vunpack.c.l.b16 %v2299
        %v2512 = vunpack.c.h.b16 %v2299
        %v2513 = vunpack.c.l.b16 %v2300
        %v2514 = vunpack.c.h.b16 %v2300
        %v2515 = vunpack.c.l.b16 %v2301
        %v2516 = vunpack.c.h.b16 %v2301
        %v2517 = vunpack.c.l.b16 %v2302
        %v2518 = vunpack.c.h.b16 %v2302
        %v2519 = vpack.c.b16 %v2395, %v2391
        %v2520 = vpack.c.b16 %v2396, %v2392
        %v2521 = vpack.c.b16 %v2397, %v2393
        %v2522 = vpack.c.b16 %v2398, %v2394
        %v2523 = vpack.c.b16 %v2403, %v2399
        %v2524 = vpack.c.b16 %v2404, %v2400
        %v2525 = vpack.c.b16 %v2405, %v2401
        %v2526 = vpack.c.b16 %v2406, %v2402
        %v2527 = vpack.c.b16 %v2411, %v2407
        %v2528 = vpack.c.b16 %v2412, %v2408
        %v2529 = vpack.c.b16 %v2413, %v2409
        %v2530 = vpack.c.b16 %v2414, %v2410
        %v2531 = vpack.c.b16 %v2419, %v2415
        %v2532 = vpack.c.b16 %v2420, %v2416
        %v2533 = vpack.c.b16 %v2421, %v2417
        %v2534 = vpack.c.b16 %v2422, %v2418
        %v2535 = vpack.c.b16 %v2427, %v2423
        %v2536 = vpack.c.b16 %v2428, %v2424
        %v2537 = vpack.c.b16 %v2429, %v2425
        %v2538 = vpack.c.b16 %v2430, %v2426
        %v2539 = vpack.c.b16 %v2435, %v2431
        %v2540 = vpack.c.b16 %v2436, %v2432
        %v2541 = vpack.c.b16 %v2437, %v2433
        %v2542 = vpack.c.b16 %v2438, %v2434
        %v2543 = vpack.c.b16 %v2443, %v2439
        %v2544 = vpack.c.b16 %v2444, %v2440
        %v2545 = vpack.c.b16 %v2445, %v2441
        %v2546 = vpack.c.b16 %v2446, %v2442
        %v2547 = vpack.c.b16 %v2451, %v2447
        %v2548 = vpack.c.b16 %v2452, %v2448
        %v2549 = vpack.c.b16 %v2453, %v2449
        %v2550 = vpack.c.b16 %v2454, %v2450
        %v2551 = vpack.c.b16 %v2459, %v2455
        %v2552 = vpack.c.b16 %v2460, %v2456
        %v2553 = vpack.c.b16 %v2461, %v2457
        %v2554 = vpack.c.b16 %v2462, %v2458
        %v2555 = vpack.c.b16 %v2467, %v2463
        %v2556 = vpack.c.b16 %v2468, %v2464
        %v2557 = vpack.c.b16 %v2469, %v2465
        %v2558 = vpack.c.b16 %v2470, %v2466
        %v2559 = vpack.c.b16 %v2475, %v2471
        %v2560 = vpack.c.b16 %v2476, %v2472
        %v2561 = vpack.c.b16 %v2477, %v2473
        %v2562 = vpack.c.b16 %v2478, %v2474
        %v2563 = vpack.c.b16 %v2483, %v2479
        %v2564 = vpack.c.b16 %v2484, %v2480
        %v2565 = vpack.c.b16 %v2485, %v2481
        %v2566 = vpack.c.b16 %v2486, %v2482
        %v2567 = vpack.c.b16 %v2491, %v2487
        %v2568 = vpack.c.b16 %v2492, %v2488
        %v2569 = vpack.c.b16 %v2493, %v2489
        %v2570 = vpack.c.b16 %v2494, %v2490
        %v2571 = vpack.c.b16 %v2499, %v2495
        %v2572 = vpack.c.b16 %v2500, %v2496
        %v2573 = vpack.c.b16 %v2501, %v2497
        %v2574 = vpack.c.b16 %v2502, %v2498
        %v2575 = vpack.c.b16 %v2507, %v2503
        %v2576 = vpack.c.b16 %v2508, %v2504
        %v2577 = vpack.c.b16 %v2509, %v2505
        %v2578 = vpack.c.b16 %v2510, %v2506
        %v2579 = vpack.c.b16 %v2515, %v2511
        %v2580 = vpack.c.b16 %v2516, %v2512
        %v2581 = vpack.c.b16 %v2517, %v2513
        %v2582 = vpack.c.b16 %v2518, %v2514
        %2647 = vmatprep.subr.bf16.mxu0 %v2520
        %2648 = vmatpush1.bf16.msra.mxu0 %v2519
        %2649 = vmatprep.subr.bf16.mxu0 %v2524
        %2650 = vmatpush1.bf16.msra.mxu0 %v2523
        %2651 = vmatprep.subr.bf16.mxu0 %v2528
        %2652 = vmatpush1.bf16.msra.mxu0 %v2527
        %2653 = vmatprep.subr.bf16.mxu0 %v2532
        %2654 = vmatpush1.bf16.msra.mxu0 %v2531
        %2655 = vmatprep.subr.bf16.mxu0 %v2536
        %2656 = vmatpush1.bf16.msra.mxu0 %v2535
        %2657 = vmatprep.subr.bf16.mxu0 %v2540
        %2658 = vmatpush1.bf16.msra.mxu0 %v2539
        %2659 = vmatprep.subr.bf16.mxu0 %v2544
        %2660 = vmatpush1.bf16.msra.mxu0 %v2543
        %2661 = vmatprep.subr.bf16.mxu0 %v2548
        %2662 = vmatpush1.bf16.msra.mxu0 %v2547
        %2663 = vmatprep.subr.bf16.mxu0 %v2552
        %2664 = vmatpush1.bf16.msra.mxu0 %v2551
        %2665 = vmatprep.subr.bf16.mxu0 %v2556
        %2666 = vmatpush1.bf16.msra.mxu0 %v2555
        %2667 = vmatprep.subr.bf16.mxu0 %v2560
        %2668 = vmatpush1.bf16.msra.mxu0 %v2559
        %2669 = vmatprep.subr.bf16.mxu0 %v2564
        %2670 = vmatpush1.bf16.msra.mxu0 %v2563
        %2671 = vmatprep.subr.bf16.mxu0 %v2568
        %2672 = vmatpush1.bf16.msra.mxu0 %v2567
        %2673 = vmatprep.subr.bf16.mxu0 %v2572
        %2674 = vmatpush1.bf16.msra.mxu0 %v2571
        %2675 = vmatprep.subr.bf16.mxu0 %v2576
        %2676 = vmatpush1.bf16.msra.mxu0 %v2575
        %2677 = vmatprep.subr.bf16.mxu0 %v2580
        %2678 = vmatpush1.bf16.msra.mxu0 %v2579
        %2679 = vmatprep.mubr.bf16.mxu0 %v2304
        %2680 = vmatmul.mubr.bf16.gmra.mrb[0].mxu0 %v2303
        %v2681 = vpop.f32.mrb[0].mxu0
        %v2682 = vadd.f32 %v2310, %v2681
        %v2683 = vpop.f32.mrb[0].mxu0
        %v2684 = vadd.f32 %v2314, %v2683
        %v2685 = vpop.f32.mrb[0].mxu0
        %v2686 = vadd.f32 %v2310, %v2685
        %v2687 = vpop.f32.mrb[0].mxu0
        %v2688 = vadd.f32 %v2314, %v2687
        %2689 = vdwg.mxu0
        %2690 = vmatprep.subr.bf16.mxu0 %v2522
        %2691 = vmatpush1.bf16.msra.mxu0 %v2521
        %2692 = vmatprep.subr.bf16.mxu0 %v2526
        %2693 = vmatpush1.bf16.msra.mxu0 %v2525
        %2694 = vmatprep.subr.bf16.mxu0 %v2530
        %2695 = vmatpush1.bf16.msra.mxu0 %v2529
        %2696 = vmatprep.subr.bf16.mxu0 %v2534
        %2697 = vmatpush1.bf16.msra.mxu0 %v2533
        %2698 = vmatprep.subr.bf16.mxu0 %v2538
        %2699 = vmatpush1.bf16.msra.mxu0 %v2537
        %2700 = vmatprep.subr.bf16.mxu0 %v2542
        %2701 = vmatpush1.bf16.msra.mxu0 %v2541
        %2702 = vmatprep.subr.bf16.mxu0 %v2546
        %2703 = vmatpush1.bf16.msra.mxu0 %v2545
        %2704 = vmatprep.subr.bf16.mxu0 %v2550
        %2705 = vmatpush1.bf16.msra.mxu0 %v2549
        %2706 = vmatprep.subr.bf16.mxu0 %v2554
        %2707 = vmatpush1.bf16.msra.mxu0 %v2553
        %2708 = vmatprep.subr.bf16.mxu0 %v2558
        %2709 = vmatpush1.bf16.msra.mxu0 %v2557
        %2710 = vmatprep.subr.bf16.mxu0 %v2562
        %2711 = vmatpush1.bf16.msra.mxu0 %v2561
        %2712 = vmatprep.subr.bf16.mxu0 %v2566
        %2713 = vmatpush1.bf16.msra.mxu0 %v2565
        %2714 = vmatprep.subr.bf16.mxu0 %v2570
        %2715 = vmatpush1.bf16.msra.mxu0 %v2569
        %2716 = vmatprep.subr.bf16.mxu0 %v2574
        %2717 = vmatpush1.bf16.msra.mxu0 %v2573
        %2718 = vmatprep.subr.bf16.mxu0 %v2578
        %2719 = vmatpush1.bf16.msra.mxu0 %v2577
        %2720 = vmatprep.subr.bf16.mxu0 %v2582
        %2721 = vmatpush1.bf16.msra.mxu0 %v2581
        %2722 = vmatprep.mubr.bf16.mxu0 %v2304
        %2723 = vmatmul.mubr.bf16.gmra.mrb[0].mxu0 %v2303
        %v2724 = vpop.f32.mrb[0].mxu0
        %v2725 = vadd.f32 %v2318, %v2724
        %v2726 = vpop.f32.mrb[0].mxu0
        %v2727 = vadd.f32 %v2322, %v2726
        %v2728 = vpop.f32.mrb[0].mxu0
        %v2729 = vadd.f32 %v2318, %v2728
        %v2730 = vpop.f32.mrb[0].mxu0
        %v2731 = vadd.f32 %v2322, %v2730
        %2732 = vdwg.mxu0
        %v2733 = vmul.f32 %v2682, 0.5
        %v2734 = vmul.f32 %v2684, 0.5
        %v2735 = vmul.f32 %v2725, 0.5
        %v2736 = vmul.f32 %v2727, 0.5
        %v2737 = vmul.f32 %v2686, 0.5
        %v2738 = vmul.f32 %v2688, 0.5
        %v2739 = vmul.f32 %v2729, 0.5
        %v2740 = vmul.f32 %v2731, 0.5
        %v2741 = vmul.f32 %v2682, 0.044715
        %v2742 = vmul.f32 %v2684, 0.044715
        %v2743 = vmul.f32 %v2725, 0.044715
        %v2744 = vmul.f32 %v2727, 0.044715
        %v2745 = vmul.f32 %v2686, 0.044715
        %v2746 = vmul.f32 %v2688, 0.044715
        %v2747 = vmul.f32 %v2729, 0.044715
        %v2748 = vmul.f32 %v2731, 0.044715
        %v2749 = vmul.f32 %v2741, %v2682
        %v2750 = vmul.f32 %v2742, %v2684
        %v2751 = vmul.f32 %v2743, %v2725
        %v2752 = vmul.f32 %v2744, %v2727
        %v2753 = vmul.f32 %v2745, %v2686
        %v2754 = vmul.f32 %v2746, %v2688
        %v2755 = vmul.f32 %v2747, %v2729
        %v2756 = vmul.f32 %v2748, %v2731
        %v2757 = vmul.f32 %v2749, %v2682
        %v2758 = vmul.f32 %v2750, %v2684
        %v2759 = vmul.f32 %v2751, %v2725
        %v2760 = vmul.f32 %v2752, %v2727
        %v2761 = vmul.f32 %v2753, %v2686
        %v2762 = vmul.f32 %v2754, %v2688
        %v2763 = vmul.f32 %v2755, %v2729
        %v2764 = vmul.f32 %v2756, %v2731
        %v2765 = vadd.f32 %v2682, %v2757
        %v2766 = vadd.f32 %v2684, %v2758
        %v2767 = vadd.f32 %v2725, %v2759
        %v2768 = vadd.f32 %v2727, %v2760
        %v2769 = vadd.f32 %v2686, %v2761
        %v2770 = vadd.f32 %v2688, %v2762
        %v2771 = vadd.f32 %v2729, %v2763
        %v2772 = vadd.f32 %v2731, %v2764
        %v2773 = vmul.f32 %v2765, 0.7978846
        %v2774 = vmul.f32 %v2766, 0.7978846
        %v2775 = vmul.f32 %v2767, 0.7978846
        %v2776 = vmul.f32 %v2768, 0.7978846
        %v2777 = vmul.f32 %v2769, 0.7978846
        %v2778 = vmul.f32 %v2770, 0.7978846
        %v2779 = vmul.f32 %v2771, 0.7978846
        %v2780 = vmul.f32 %v2772, 0.7978846
        %v2781 = vtanh.pop %v2773
        %v2782 = vtanh.pop %v2774
        %v2783 = vtanh.pop %v2775
        %v2784 = vtanh.pop %v2776
        %v2785 = vtanh.pop %v2777
        %v2786 = vtanh.pop %v2778
        %v2787 = vtanh.pop %v2779
        %v2788 = vtanh.pop %v2780
        %v2789 = vadd.f32 %v2781, 1.0
        %v2790 = vadd.f32 %v2782, 1.0
        %v2791 = vadd.f32 %v2783, 1.0
        %v2792 = vadd.f32 %v2784, 1.0
        %v2793 = vadd.f32 %v2785, 1.0
        %v2794 = vadd.f32 %v2786, 1.0
        %v2795 = vadd.f32 %v2787, 1.0
        %v2796 = vadd.f32 %v2788, 1.0
        %v2797 = vmul.f32 %v2733, %v2789
        %v2798 = vmul.f32 %v2734, %v2790
        %v2799 = vmul.f32 %v2735, %v2791
        %v2800 = vmul.f32 %v2736, %v2792
        %v2801 = vmul.f32 %v2737, %v2793
        %v2802 = vmul.f32 %v2738, %v2794
        %v2803 = vmul.f32 %v2739, %v2795
        %v2804 = vmul.f32 %v2740, %v2796
        %v2805 = vld [vmem:[%s557] sm:$0xff]
        %v2806 = vld [vmem:[%s557 + $0x8] sm:$0xff]
        %v2807 = vld [vmem:[%s557 + $0x10] sm:$0xff]
        %v2808 = vld [vmem:[%s557 + $0x18] sm:$0xff]
        %v2809 = vld [vmem:[%s557 + $0x20] sm:$0xff]
        %v2810 = vld [vmem:[%s557 + $0x28] sm:$0xff]
        %v2811 = vld [vmem:[%s557 + $0x30] sm:$0xff]
        %v2812 = vld [vmem:[%s557 + $0x38] sm:$0xff]
        %v2813 = vld [vmem:[%s557 + $0x40] sm:$0xff]
        %v2814 = vld [vmem:[%s557 + $0x48] sm:$0xff]
        %v2815 = vld [vmem:[%s557 + $0x50] sm:$0xff]
        %v2816 = vld [vmem:[%s557 + $0x58] sm:$0xff]
        %v2817 = vld [vmem:[%s557 + $0x60] sm:$0xff]
        %v2818 = vld [vmem:[%s557 + $0x68] sm:$0xff]
        %v2819 = vld [vmem:[%s557 + $0x70] sm:$0xff]
        %v2820 = vld [vmem:[%s557 + $0x78] sm:$0xff]
        %v2821 = vld [vmem:[%s557 + $0x80] sm:$0xff]
        %v2822 = vld [vmem:[%s557 + $0x88] sm:$0xff]
        %v2823 = vld [vmem:[%s557 + $0x90] sm:$0xff]
        %v2824 = vld [vmem:[%s557 + $0x98] sm:$0xff]
        %v2825 = vld [vmem:[%s557 + $0xa0] sm:$0xff]
        %v2826 = vld [vmem:[%s557 + $0xa8] sm:$0xff]
        %v2827 = vld [vmem:[%s557 + $0xb0] sm:$0xff]
        %v2828 = vld [vmem:[%s557 + $0xb8] sm:$0xff]
        %v2829 = vld [vmem:[%s557 + $0xc0] sm:$0xff]
        %v2830 = vld [vmem:[%s557 + $0xc8] sm:$0xff]
        %v2831 = vld [vmem:[%s557 + $0xd0] sm:$0xff]
        %v2832 = vld [vmem:[%s557 + $0xd8] sm:$0xff]
        %v2833 = vld [vmem:[%s557 + $0xe0] sm:$0xff]
        %v2834 = vld [vmem:[%s557 + $0xe8] sm:$0xff]
        %v2835 = vld [vmem:[%s557 + $0xf0] sm:$0xff]
        %v2836 = vld [vmem:[%s557 + $0xf8] sm:$0xff]
        %v2837 = vld [vmem:[%s557 + $0x100] sm:$0xff]
        %v2838 = vld [vmem:[%s557 + $0x108] sm:$0xff]
        %v2839 = vld [vmem:[%s557 + $0x110] sm:$0xff]
        %v2840 = vld [vmem:[%s557 + $0x118] sm:$0xff]
        %v2841 = vld [vmem:[%s557 + $0x120] sm:$0xff]
        %v2842 = vld [vmem:[%s557 + $0x128] sm:$0xff]
        %v2843 = vld [vmem:[%s557 + $0x130] sm:$0xff]
        %v2844 = vld [vmem:[%s557 + $0x138] sm:$0xff]
        %v2845 = vld [vmem:[%s557 + $0x140] sm:$0xff]
        %v2846 = vld [vmem:[%s557 + $0x148] sm:$0xff]
        %v2847 = vld [vmem:[%s557 + $0x150] sm:$0xff]
        %v2848 = vld [vmem:[%s557 + $0x158] sm:$0xff]
        %v2849 = vld [vmem:[%s557 + $0x160] sm:$0xff]
        %v2850 = vld [vmem:[%s557 + $0x168] sm:$0xff]
        %v2851 = vld [vmem:[%s557 + $0x170] sm:$0xff]
        %v2852 = vld [vmem:[%s557 + $0x178] sm:$0xff]
        %v2853 = vld [vmem:[%s557 + $0x180] sm:$0xff]
        %v2854 = vld [vmem:[%s557 + $0x188] sm:$0xff]
        %v2855 = vld [vmem:[%s557 + $0x190] sm:$0xff]
        %v2856 = vld [vmem:[%s557 + $0x198] sm:$0xff]
        %v2857 = vld [vmem:[%s557 + $0x1a0] sm:$0xff]
        %v2858 = vld [vmem:[%s557 + $0x1a8] sm:$0xff]
        %v2859 = vld [vmem:[%s557 + $0x1b0] sm:$0xff]
        %v2860 = vld [vmem:[%s557 + $0x1b8] sm:$0xff]
        %v2861 = vld [vmem:[%s557 + $0x1c0] sm:$0xff]
        %v2862 = vld [vmem:[%s557 + $0x1c8] sm:$0xff]
        %v2863 = vld [vmem:[%s557 + $0x1d0] sm:$0xff]
        %v2864 = vld [vmem:[%s557 + $0x1d8] sm:$0xff]
        %v2865 = vld [vmem:[%s557 + $0x1e0] sm:$0xff]
        %v2866 = vld [vmem:[%s557 + $0x1e8] sm:$0xff]
        %v2867 = vld [vmem:[%s557 + $0x1f0] sm:$0xff]
        %v2868 = vld [vmem:[%s557 + $0x1f8] sm:$0xff]
        %v2869 = vpack.c.bf16 %v2801, %v2797
        %v2870 = vpack.c.bf16 %v2802, %v2798
        %v2871 = vpack.c.bf16 %v2803, %v2799
        %v2872 = vpack.c.bf16 %v2804, %v2800
        %v2937 = vunpack.c.l.b16 %v2805
        %v2938 = vunpack.c.h.b16 %v2805
        %v2939 = vunpack.c.l.b16 %v2806
        %v2940 = vunpack.c.h.b16 %v2806
        %v2941 = vunpack.c.l.b16 %v2807
        %v2942 = vunpack.c.h.b16 %v2807
        %v2943 = vunpack.c.l.b16 %v2808
        %v2944 = vunpack.c.h.b16 %v2808
        %v2945 = vunpack.c.l.b16 %v2809
        %v2946 = vunpack.c.h.b16 %v2809
        %v2947 = vunpack.c.l.b16 %v2810
        %v2948 = vunpack.c.h.b16 %v2810
        %v2949 = vunpack.c.l.b16 %v2811
        %v2950 = vunpack.c.h.b16 %v2811
        %v2951 = vunpack.c.l.b16 %v2812
        %v2952 = vunpack.c.h.b16 %v2812
        %v2953 = vunpack.c.l.b16 %v2813
        %v2954 = vunpack.c.h.b16 %v2813
        %v2955 = vunpack.c.l.b16 %v2814
        %v2956 = vunpack.c.h.b16 %v2814
        %v2957 = vunpack.c.l.b16 %v2815
        %v2958 = vunpack.c.h.b16 %v2815
        %v2959 = vunpack.c.l.b16 %v2816
        %v2960 = vunpack.c.h.b16 %v2816
        %v2961 = vunpack.c.l.b16 %v2817
        %v2962 = vunpack.c.h.b16 %v2817
        %v2963 = vunpack.c.l.b16 %v2818
        %v2964 = vunpack.c.h.b16 %v2818
        %v2965 = vunpack.c.l.b16 %v2819
        %v2966 = vunpack.c.h.b16 %v2819
        %v2967 = vunpack.c.l.b16 %v2820
        %v2968 = vunpack.c.h.b16 %v2820
        %v2969 = vunpack.c.l.b16 %v2821
        %v2970 = vunpack.c.h.b16 %v2821
        %v2971 = vunpack.c.l.b16 %v2822
        %v2972 = vunpack.c.h.b16 %v2822
        %v2973 = vunpack.c.l.b16 %v2823
        %v2974 = vunpack.c.h.b16 %v2823
        %v2975 = vunpack.c.l.b16 %v2824
        %v2976 = vunpack.c.h.b16 %v2824
        %v2977 = vunpack.c.l.b16 %v2825
        %v2978 = vunpack.c.h.b16 %v2825
        %v2979 = vunpack.c.l.b16 %v2826
        %v2980 = vunpack.c.h.b16 %v2826
        %v2981 = vunpack.c.l.b16 %v2827
        %v2982 = vunpack.c.h.b16 %v2827
        %v2983 = vunpack.c.l.b16 %v2828
        %v2984 = vunpack.c.h.b16 %v2828
        %v2985 = vunpack.c.l.b16 %v2829
        %v2986 = vunpack.c.h.b16 %v2829
        %v2987 = vunpack.c.l.b16 %v2830
        %v2988 = vunpack.c.h.b16 %v2830
        %v2989 = vunpack.c.l.b16 %v2831
        %v2990 = vunpack.c.h.b16 %v2831
        %v2991 = vunpack.c.l.b16 %v2832
        %v2992 = vunpack.c.h.b16 %v2832
        %v2993 = vunpack.c.l.b16 %v2833
        %v2994 = vunpack.c.h.b16 %v2833
        %v2995 = vunpack.c.l.b16 %v2834
        %v2996 = vunpack.c.h.b16 %v2834
        %v2997 = vunpack.c.l.b16 %v2835
        %v2998 = vunpack.c.h.b16 %v2835
        %v2999 = vunpack.c.l.b16 %v2836
        %v3000 = vunpack.c.h.b16 %v2836
        %v3001 = vunpack.c.l.b16 %v2837
        %v3002 = vunpack.c.h.b16 %v2837
        %v3003 = vunpack.c.l.b16 %v2838
        %v3004 = vunpack.c.h.b16 %v2838
        %v3005 = vunpack.c.l.b16 %v2839
        %v3006 = vunpack.c.h.b16 %v2839
        %v3007 = vunpack.c.l.b16 %v2840
        %v3008 = vunpack.c.h.b16 %v2840
        %v3009 = vunpack.c.l.b16 %v2841
        %v3010 = vunpack.c.h.b16 %v2841
        %v3011 = vunpack.c.l.b16 %v2842
        %v3012 = vunpack.c.h.b16 %v2842
        %v3013 = vunpack.c.l.b16 %v2843
        %v3014 = vunpack.c.h.b16 %v2843
        %v3015 = vunpack.c.l.b16 %v2844
        %v3016 = vunpack.c.h.b16 %v2844
        %v3017 = vunpack.c.l.b16 %v2845
        %v3018 = vunpack.c.h.b16 %v2845
        %v3019 = vunpack.c.l.b16 %v2846
        %v3020 = vunpack.c.h.b16 %v2846
        %v3021 = vunpack.c.l.b16 %v2847
        %v3022 = vunpack.c.h.b16 %v2847
        %v3023 = vunpack.c.l.b16 %v2848
        %v3024 = vunpack.c.h.b16 %v2848
        %v3025 = vunpack.c.l.b16 %v2849
        %v3026 = vunpack.c.h.b16 %v2849
        %v3027 = vunpack.c.l.b16 %v2850
        %v3028 = vunpack.c.h.b16 %v2850
        %v3029 = vunpack.c.l.b16 %v2851
        %v3030 = vunpack.c.h.b16 %v2851
        %v3031 = vunpack.c.l.b16 %v2852
        %v3032 = vunpack.c.h.b16 %v2852
        %v3033 = vunpack.c.l.b16 %v2853
        %v3034 = vunpack.c.h.b16 %v2853
        %v3035 = vunpack.c.l.b16 %v2854
        %v3036 = vunpack.c.h.b16 %v2854
        %v3037 = vunpack.c.l.b16 %v2855
        %v3038 = vunpack.c.h.b16 %v2855
        %v3039 = vunpack.c.l.b16 %v2856
        %v3040 = vunpack.c.h.b16 %v2856
        %v3041 = vunpack.c.l.b16 %v2857
        %v3042 = vunpack.c.h.b16 %v2857
        %v3043 = vunpack.c.l.b16 %v2858
        %v3044 = vunpack.c.h.b16 %v2858
        %v3045 = vunpack.c.l.b16 %v2859
        %v3046 = vunpack.c.h.b16 %v2859
        %v3047 = vunpack.c.l.b16 %v2860
        %v3048 = vunpack.c.h.b16 %v2860
        %v3049 = vunpack.c.l.b16 %v2861
        %v3050 = vunpack.c.h.b16 %v2861
        %v3051 = vunpack.c.l.b16 %v2862
        %v3052 = vunpack.c.h.b16 %v2862
        %v3053 = vunpack.c.l.b16 %v2863
        %v3054 = vunpack.c.h.b16 %v2863
        %v3055 = vunpack.c.l.b16 %v2864
        %v3056 = vunpack.c.h.b16 %v2864
        %v3057 = vunpack.c.l.b16 %v2865
        %v3058 = vunpack.c.h.b16 %v2865
        %v3059 = vunpack.c.l.b16 %v2866
        %v3060 = vunpack.c.h.b16 %v2866
        %v3061 = vunpack.c.l.b16 %v2867
        %v3062 = vunpack.c.h.b16 %v2867
        %v3063 = vunpack.c.l.b16 %v2868
        %v3064 = vunpack.c.h.b16 %v2868
        %v3065 = vpack.c.b16 %v2939, %v2937
        %v3066 = vpack.c.b16 %v2940, %v2938
        %v3067 = vpack.c.b16 %v2943, %v2941
        %v3068 = vpack.c.b16 %v2944, %v2942
        %v3069 = vpack.c.b16 %v2947, %v2945
        %v3070 = vpack.c.b16 %v2948, %v2946
        %v3071 = vpack.c.b16 %v2951, %v2949
        %v3072 = vpack.c.b16 %v2952, %v2950
        %v3073 = vpack.c.b16 %v2955, %v2953
        %v3074 = vpack.c.b16 %v2956, %v2954
        %v3075 = vpack.c.b16 %v2959, %v2957
        %v3076 = vpack.c.b16 %v2960, %v2958
        %v3077 = vpack.c.b16 %v2963, %v2961
        %v3078 = vpack.c.b16 %v2964, %v2962
        %v3079 = vpack.c.b16 %v2967, %v2965
        %v3080 = vpack.c.b16 %v2968, %v2966
        %v3081 = vpack.c.b16 %v2971, %v2969
        %v3082 = vpack.c.b16 %v2972, %v2970
        %v3083 = vpack.c.b16 %v2975, %v2973
        %v3084 = vpack.c.b16 %v2976, %v2974
        %v3085 = vpack.c.b16 %v2979, %v2977
        %v3086 = vpack.c.b16 %v2980, %v2978
        %v3087 = vpack.c.b16 %v2983, %v2981
        %v3088 = vpack.c.b16 %v2984, %v2982
        %v3089 = vpack.c.b16 %v2987, %v2985
        %v3090 = vpack.c.b16 %v2988, %v2986
        %v3091 = vpack.c.b16 %v2991, %v2989
        %v3092 = vpack.c.b16 %v2992, %v2990
        %v3093 = vpack.c.b16 %v2995, %v2993
        %v3094 = vpack.c.b16 %v2996, %v2994
        %v3095 = vpack.c.b16 %v2999, %v2997
        %v3096 = vpack.c.b16 %v3000, %v2998
        %v3097 = vpack.c.b16 %v3003, %v3001
        %v3098 = vpack.c.b16 %v3004, %v3002
        %v3099 = vpack.c.b16 %v3007, %v3005
        %v3100 = vpack.c.b16 %v3008, %v3006
        %v3101 = vpack.c.b16 %v3011, %v3009
        %v3102 = vpack.c.b16 %v3012, %v3010
        %v3103 = vpack.c.b16 %v3015, %v3013
        %v3104 = vpack.c.b16 %v3016, %v3014
        %v3105 = vpack.c.b16 %v3019, %v3017
        %v3106 = vpack.c.b16 %v3020, %v3018
        %v3107 = vpack.c.b16 %v3023, %v3021
        %v3108 = vpack.c.b16 %v3024, %v3022
        %v3109 = vpack.c.b16 %v3027, %v3025
        %v3110 = vpack.c.b16 %v3028, %v3026
        %v3111 = vpack.c.b16 %v3031, %v3029
        %v3112 = vpack.c.b16 %v3032, %v3030
        %v3113 = vpack.c.b16 %v3035, %v3033
        %v3114 = vpack.c.b16 %v3036, %v3034
        %v3115 = vpack.c.b16 %v3039, %v3037
        %v3116 = vpack.c.b16 %v3040, %v3038
        %v3117 = vpack.c.b16 %v3043, %v3041
        %v3118 = vpack.c.b16 %v3044, %v3042
        %v3119 = vpack.c.b16 %v3047, %v3045
        %v3120 = vpack.c.b16 %v3048, %v3046
        %v3121 = vpack.c.b16 %v3051, %v3049
        %v3122 = vpack.c.b16 %v3052, %v3050
        %v3123 = vpack.c.b16 %v3055, %v3053
        %v3124 = vpack.c.b16 %v3056, %v3054
        %v3125 = vpack.c.b16 %v3059, %v3057
        %v3126 = vpack.c.b16 %v3060, %v3058
        %v3127 = vpack.c.b16 %v3063, %v3061
        %v3128 = vpack.c.b16 %v3064, %v3062
        %3193 = vmatprep.subr.bf16.mxu0 %v3066
        %3194 = vmatpush1.bf16.msra.mxu0 %v3065
        %3195 = vmatprep.subr.bf16.mxu0 %v3068
        %3196 = vmatpush1.bf16.msra.mxu0 %v3067
        %3197 = vmatprep.subr.bf16.mxu0 %v3070
        %3198 = vmatpush1.bf16.msra.mxu0 %v3069
        %3199 = vmatprep.subr.bf16.mxu0 %v3072
        %3200 = vmatpush1.bf16.msra.mxu0 %v3071
        %3201 = vmatprep.subr.bf16.mxu0 %v3074
        %3202 = vmatpush1.bf16.msra.mxu0 %v3073
        %3203 = vmatprep.subr.bf16.mxu0 %v3076
        %3204 = vmatpush1.bf16.msra.mxu0 %v3075
        %3205 = vmatprep.subr.bf16.mxu0 %v3078
        %3206 = vmatpush1.bf16.msra.mxu0 %v3077
        %3207 = vmatprep.subr.bf16.mxu0 %v3080
        %3208 = vmatpush1.bf16.msra.mxu0 %v3079
        %3209 = vmatprep.subr.bf16.mxu0 %v3082
        %3210 = vmatpush1.bf16.msra.mxu0 %v3081
        %3211 = vmatprep.subr.bf16.mxu0 %v3084
        %3212 = vmatpush1.bf16.msra.mxu0 %v3083
        %3213 = vmatprep.subr.bf16.mxu0 %v3086
        %3214 = vmatpush1.bf16.msra.mxu0 %v3085
        %3215 = vmatprep.subr.bf16.mxu0 %v3088
        %3216 = vmatpush1.bf16.msra.mxu0 %v3087
        %3217 = vmatprep.subr.bf16.mxu0 %v3090
        %3218 = vmatpush1.bf16.msra.mxu0 %v3089
        %3219 = vmatprep.subr.bf16.mxu0 %v3092
        %3220 = vmatpush1.bf16.msra.mxu0 %v3091
        %3221 = vmatprep.subr.bf16.mxu0 %v3094
        %3222 = vmatpush1.bf16.msra.mxu0 %v3093
        %3223 = vmatprep.subr.bf16.mxu0 %v3096
        %3224 = vmatpush1.bf16.msra.mxu0 %v3095
        %3225 = vmatprep.mubr.bf16.mxu0 %v2870
        %3226 = vmatmul.mubr.bf16.gmra.mrb[0].mxu0 %v2869
        %v3227 = vpop.f32.mrb[0].mxu0
        %v3228 = vadd.f32 0.0, %v3227
        %v3229 = vpop.f32.mrb[0].mxu0
        %v3230 = vadd.f32 0.0, %v3229
        %v3231 = vpop.f32.mrb[0].mxu0
        %v3232 = vadd.f32 0.0, %v3231
        %v3233 = vpop.f32.mrb[0].mxu0
        %v3234 = vadd.f32 0.0, %v3233
        %3235 = vdwg.mxu0
        %3236 = vmatprep.subr.bf16.mxu0 %v3098
        %3237 = vmatpush1.bf16.msra.mxu0 %v3097
        %3238 = vmatprep.subr.bf16.mxu0 %v3100
        %3239 = vmatpush1.bf16.msra.mxu0 %v3099
        %3240 = vmatprep.subr.bf16.mxu0 %v3102
        %3241 = vmatpush1.bf16.msra.mxu0 %v3101
        %3242 = vmatprep.subr.bf16.mxu0 %v3104
        %3243 = vmatpush1.bf16.msra.mxu0 %v3103
        %3244 = vmatprep.subr.bf16.mxu0 %v3106
        %3245 = vmatpush1.bf16.msra.mxu0 %v3105
        %3246 = vmatprep.subr.bf16.mxu0 %v3108
        %3247 = vmatpush1.bf16.msra.mxu0 %v3107
        %3248 = vmatprep.subr.bf16.mxu0 %v3110
        %3249 = vmatpush1.bf16.msra.mxu0 %v3109
        %3250 = vmatprep.subr.bf16.mxu0 %v3112
        %3251 = vmatpush1.bf16.msra.mxu0 %v3111
        %3252 = vmatprep.subr.bf16.mxu0 %v3114
        %3253 = vmatpush1.bf16.msra.mxu0 %v3113
        %3254 = vmatprep.subr.bf16.mxu0 %v3116
        %3255 = vmatpush1.bf16.msra.mxu0 %v3115
        %3256 = vmatprep.subr.bf16.mxu0 %v3118
        %3257 = vmatpush1.bf16.msra.mxu0 %v3117
        %3258 = vmatprep.subr.bf16.mxu0 %v3120
        %3259 = vmatpush1.bf16.msra.mxu0 %v3119
        %3260 = vmatprep.subr.bf16.mxu0 %v3122
        %3261 = vmatpush1.bf16.msra.mxu0 %v3121
        %3262 = vmatprep.subr.bf16.mxu0 %v3124
        %3263 = vmatpush1.bf16.msra.mxu0 %v3123
        %3264 = vmatprep.subr.bf16.mxu0 %v3126
        %3265 = vmatpush1.bf16.msra.mxu0 %v3125
        %3266 = vmatprep.subr.bf16.mxu0 %v3128
        %3267 = vmatpush1.bf16.msra.mxu0 %v3127
        %3268 = vmatprep.mubr.bf16.mxu0 %v2872
        %3269 = vmatmul.mubr.bf16.gmra.mrb[0].mxu0 %v2871
        %v3270 = vpop.f32.mrb[0].mxu0
        %v3271 = vadd.f32 %v3228, %v3270
        %v3272 = vpop.f32.mrb[0].mxu0
        %v3273 = vadd.f32 %v3230, %v3272
        %v3274 = vpop.f32.mrb[0].mxu0
        %v3275 = vadd.f32 %v3232, %v3274
        %v3276 = vpop.f32.mrb[0].mxu0
        %v3277 = vadd.f32 %v3234, %v3276
        %3278 = vdwg.mxu0
        %v3279 = vadd.f32 %v2171, %v3271
        %v3280 = vadd.f32 %v2172, %v3273
        %v3281 = vadd.f32 %v2173, %v3275
        %v3282 = vadd.f32 %v2174, %v3277
        %v3283 = vld [vmem:[%s678] sm:$0x3]
        %v3285 = vlaneseq
        %v3286 = vshrl.u32 %v3285, 7
        %v3287 = vsub.s32 0, %v3286
        %v3288 = vrot.slane %v3283, %v3287
        %v3289 = vlaneseq
        %v3290 = vshrl.u32 %v3289, 7
        %v3291 = vsub.s32 1, %v3290
        %v3292 = vrot.slane %v3283, %v3291
        %v3295 = vadd.f32 %v3279, %v3288
        %v3296 = vadd.f32 %v3280, %v3292
        %v3297 = vadd.f32 %v3281, %v3288
        %v3298 = vadd.f32 %v3282, %v3292
        %3299 = vst [vmem:[%s13] sm:$0xff] %v3295
        %3300 = vst [vmem:[%s13 + $0x8] sm:$0xff] %v3296
        %3301 = vst [vmem:[%s13 + $0x10] sm:$0xff] %v3297
        %3302 = vst [vmem:[%s13 + $0x18] sm:$0xff] %v3298
        // Predicated region
        $region89: #{vit_forward.4} parent=71 // pred_check
          %p3303 = pneg %p376
        $region90: #{vit_forward.4} parent=71 // pred_check_branch
          %3305 = sbr.rel (%p3303) target = $region92
        $region91: #{vit_forward.4} parent=71 // pred_region
          _
        $region92: #{vit_forward.4} parent=71 // pred_fallthru
          _
        // Predicated region
        $region93: #{vit_forward.4} parent=71 // pred_check
          %p3306 = pneg %p376
        $region94: #{vit_forward.4} parent=71 // pred_check_branch
          %3308 = sbr.rel (%p3306) target = $region96
        $region95: #{vit_forward.4} parent=71 // pred_region
          _
        $region96: #{vit_forward.4} parent=71 // pred_fallthru
          _
      $region72: #{vit_forward.4} parent=5 // pred_fallthru
        _
      %p3309 = scmp.le.s32.totalorder 2, %s25
      // Predicated region
      $region97: #{vit_forward.4} parent=5 // pred_check
        %p3310 = pneg %p3309
      $region98: #{vit_forward.4} parent=5 // pred_check_branch
        %3312 = sbr.rel (%p3310) target = $region100
      $region99: #{vit_forward.4} parent=5 // pred_region
        %s3313 = ssub.s32 %s25, 2
      $region100: #{vit_forward.4} parent=5 // pred_fallthru
        _
    $region6: #{vit_forward.4} parent=1 // loop_footer
      %s29 = sadd.s32 1, %s25
    $region7: #{vit_forward.4} parent=1 // loop_footer_branch
      %24 = sbr.rel target = $region3
    $region8: #{vit_forward.4} parent=1 // loop_exit
      _
    %3314 = vsyncpa [#allocation3], 1
    %s3315 = scalar_lea.sflag [#allocation3], 1
    %3316 = vsyncpa %s3315, 1
    %3317 = vsyncpa [#allocation5], 1
    %s3318 = scalar_lea.sflag [#allocation5], 1
    %3319 = vsyncpa %s3318, 1

</llo_original>
